<compile_context>
chip_gen: v5e
topology: v5e:2x2
jax: 0.10.0
libtpu: 0.0.40
codegen_flags: <defaults>
</compile_context>

<pallas_src>
import functools
import math

import jax
import jax.numpy as jnp
from jax import lax
from jax.experimental import pallas as pl
from jax.experimental.pallas import tpu as pltpu  # noqa: F401 (CORE_PARALLEL variant)


CFG = dict(
    vocab_size=128,
    embedding_size=32,
    hidden_size=64,
    num_layers=2,
    num_heads=4,
    head_dim=16,
    intermediate_size=128,
    max_position=32,
)

LN_EPS = 1e-12
NEG_INF = -10000.0

# ---- vec_slab row layout: every 1-row bias / LN vector packed into one slab ----
ROW_EMB_LN_G = 0
ROW_EMB_LN_B = 1
ROW_PROJ_B = 2
ROW_GP_B = 3
ROW_GP_LN_G = 4
ROW_GP_LN_B = 5
ROW_LM_B = 6
ROW_DET0 = 7          # [det_w[:, 0] (E values) | det_b[0]]
ROW_DET1 = 8
ROW_LAYER0 = 9
ROWS_PER_LAYER = 7
(OFF_AO_B, OFF_LN1_G, OFF_LN1_B, OFF_I_B, OFF_O_B, OFF_LN2_G, OFF_LN2_B) = range(7)


# ----------------------------------------------------------------------------
# Fused forward kernel (single invocation, no grid: whole model in VMEM)
# ----------------------------------------------------------------------------

def _layer_norm(x, g, b, eps=LN_EPS):
    mu = jnp.mean(x, axis=-1, keepdims=True)
    xc = x - mu
    var = jnp.mean(xc * xc, axis=-1, keepdims=True)
    return xc * lax.rsqrt(var + eps) * g + b


def _fused_forward_kernel(
    ids_ref,    # (BS, 2)  int32 : [:,0]=token id, [:,1]=position id
    bias_ref,   # (BS, BS) f32   : additive attention bias (padding + block-diag)
    emb_ref,    # (V+P+H, E) f32 : word_emb | pos(+type0) emb | gp_w
    pw_ref,     # (E, 128+V) f32 : proj_w at lanes [0:H]; lm_w at lanes [128:128+V]
    qkv_ref,    # (L*3*nH, H+8, Dh) f32 : per-head q/k/v weight, bias in row H
    aow_ref,    # (L*nH, Dh, H) f32     : per-head slice of attention out proj
    ffn_ref,    # (L, H+I, I) f32       : rows [0:H]=i_w; rows [H:H+I] lanes [0:H]=o_w
    vec_ref,    # (R, 128) f32          : 1-row bias / LN vectors
    out_ref,    # (BS, V+H+2) f32       : [lm logits | last_hidden | det logits]
    *, num_layers, num_heads, head_dim, vocab_size, max_position,
    emb_size, hidden_size, inter_size):
    BS = ids_ref.shape[0]
    L, nH, Dh = num_layers, num_heads, head_dim
    V, P = vocab_size, max_position
    E, H, I = emb_size, hidden_size, inter_size
    scale = 1.0 / math.sqrt(Dh)

    def vrow(r, w):
        return vec_ref[r:r + 1, :w]                                  # (1, w)

    # --- embeddings: in-kernel gathers via one-hot x table matmuls, then LN ---
    tok = ids_ref[:, 0:1]
    pos = ids_ref[:, 1:2]
    tok_oh = (tok == lax.broadcasted_iota(jnp.int32, (BS, V), 1)).astype(jnp.float32)
    pos_oh = (pos == lax.broadcasted_iota(jnp.int32, (BS, P), 1)).astype(jnp.float32)
    emb = jnp.dot(tok_oh, emb_ref[0:V, :], preferred_element_type=jnp.float32)
    emb = emb + jnp.dot(pos_oh, emb_ref[V:V + P, :],
                        preferred_element_type=jnp.float32)
    emb = _layer_norm(emb, vrow(ROW_EMB_LN_G, E), vrow(ROW_EMB_LN_B, E))

    # embeddings_project: E -> H
    h = (jnp.dot(emb, pw_ref[:, 0:H], preferred_element_type=jnp.float32)
         + vrow(ROW_PROJ_B, H))

    bias = bias_ref[...]                                             # (BS, BS)

    # --- transformer encoder (static unrolled; per-head accumulated matmuls) ---
    for l in range(L):
        vb = ROW_LAYER0 + l * ROWS_PER_LAYER
        ao = jnp.zeros((BS, H), jnp.float32)
        for hh in range(nH):
            def qkv(j, _l=l, _hh=hh):
                idx = (_l * 3 + j) * nH + _hh
                w = qkv_ref[idx, 0:H, :]                             # (H, Dh)
                b = qkv_ref[idx, H:H + 1, :]                         # (1, Dh)
                return jnp.dot(h, w, preferred_element_type=jnp.float32) + b

            q_h, k_h, v_h = qkv(0), qkv(1), qkv(2)
            s = lax.dot_general(q_h, k_h, (((1,), (1,)), ((), ())),
                                preferred_element_type=jnp.float32) * scale + bias
            s = s - jnp.max(s, axis=-1, keepdims=True)
            p = jnp.exp(s)
            p = p / jnp.sum(p, axis=-1, keepdims=True)               # exact softmax
            ctx = jnp.dot(p, v_h, preferred_element_type=jnp.float32)   # (BS, Dh)
            ao = ao + jnp.dot(ctx, aow_ref[l * nH + hh],
                              preferred_element_type=jnp.float32)       # (BS, H)
        ao = ao + vrow(vb + OFF_AO_B, H)
        h = _layer_norm(ao + h, vrow(vb + OFF_LN1_G, H), vrow(vb + OFF_LN1_B, H))

        inter = (jnp.dot(h, ffn_ref[l, 0:H, :], preferred_element_type=jnp.float32)
                 + vrow(vb + OFF_I_B, I))
        # TODO(synk): HF ELECTRA uses exact erf-GELU; tanh approximation here.
        inter = jax.nn.gelu(inter, approximate=True)
        fo = (jnp.dot(inter, ffn_ref[l, H:H + I, 0:H],
                      preferred_element_type=jnp.float32)
              + vrow(vb + OFF_O_B, H))
        h = _layer_norm(fo + h, vrow(vb + OFF_LN2_G, H), vrow(vb + OFF_LN2_B, H))

    # --- outputs: [cor logits 0:V | last_hidden V:V+H | det V+H:V+H+2] ---
    out_ref[:, V:V + H] = h                                          # last_hidden_state

    # generator_predictions: dense + gelu + LN
    x = (jnp.dot(h, emb_ref[V + P:V + P + H, :],
                 preferred_element_type=jnp.float32)
         + vrow(ROW_GP_B, E))
    x = jax.nn.gelu(x, approximate=True)
    x = _layer_norm(x, vrow(ROW_GP_LN_G, E), vrow(ROW_GP_LN_B, E))

    # lm head: 128-wide lane-dense matmul, stored dense at lane offset 0
    out_ref[:, 0:V] = (jnp.dot(x, pw_ref[:, 128:128 + V],
                               preferred_element_type=jnp.float32)
                       + vrow(ROW_LM_B, V))

    # 2-wide detector head on the VPU/XLU (avoids a 126-zero-column matmul)
    for j, row in enumerate((ROW_DET0, ROW_DET1)):
        dw = vec_ref[row:row + 1, 0:E]                               # (1, E)
        db = vec_ref[row:row + 1, E:E + 1]                           # (1, 1)
        out_ref[:, V + H + j:V + H + j + 1] = (
            jnp.sum(x * dw, axis=-1, keepdims=True) + db)


# ----------------------------------------------------------------------------
# Parameters
# ----------------------------------------------------------------------------

def init_params(key, cfg):
    V, E, H = cfg["vocab_size"], cfg["embedding_size"], cfg["hidden_size"]
    L, I = cfg["num_layers"], cfg["intermediate_size"]
    P = cfg["max_position"]
    std = 0.02

    def nrm(k, shape):
        return std * jax.random.normal(k, shape, dtype=jnp.float32)

    keys = iter(jax.random.split(key, 256))
    p = {
        "word_emb": nrm(next(keys), (V, E)),
        "pos_emb": nrm(next(keys), (P, E)),
        "type_emb": nrm(next(keys), (2, E)),
        "emb_ln_g": jnp.ones((E,), jnp.float32),
        "emb_ln_b": jnp.zeros((E,), jnp.float32),
        "proj_w": nrm(next(keys), (E, H)),
        "proj_b": jnp.zeros((H,), jnp.float32),
        "gp_w": nrm(next(keys), (H, E)),
        "gp_b": jnp.zeros((E,), jnp.float32),
        "gp_ln_g": jnp.ones((E,), jnp.float32),
        "gp_ln_b": jnp.zeros((E,), jnp.float32),
        "lm_w": nrm(next(keys), (E, V)),
        "lm_b": jnp.zeros((V,), jnp.float32),
        "det_w": nrm(next(keys), (E, 2)),
        "det_b": jnp.zeros((2,), jnp.float32),
        "layers": [],
    }
    for _ in range(L):
        p["layers"].append({
            "q_w": nrm(next(keys), (H, H)), "q_b": jnp.zeros((H,), jnp.float32),
            "k_w": nrm(next(keys), (H, H)), "k_b": jnp.zeros((H,), jnp.float32),
            "v_w": nrm(next(keys), (H, H)), "v_b": jnp.zeros((H,), jnp.float32),
            "ao_w": nrm(next(keys), (H, H)), "ao_b": jnp.zeros((H,), jnp.float32),
            "ln1_g": jnp.ones((H,), jnp.float32), "ln1_b": jnp.zeros((H,), jnp.float32),
            "i_w": nrm(next(keys), (H, I)), "i_b": jnp.zeros((I,), jnp.float32),
            "o_w": nrm(next(keys), (I, H)), "o_b": jnp.zeros((H,), jnp.float32),
            "ln2_g": jnp.ones((H,), jnp.float32), "ln2_b": jnp.zeros((H,), jnp.float32),
        })
    return p


def pack_params(params, cfg):
    """One-time repack into 6 kernel slabs (8 kernel inputs incl. ids & bias)."""
    V, E, H = cfg["vocab_size"], cfg["embedding_size"], cfg["hidden_size"]
    L, I = cfg["num_layers"], cfg["intermediate_size"]
    nH, Dh = cfg["num_heads"], cfg["head_dim"]
    layers = params["layers"]
    VEC_W = max(V, I, H, E + 1)

    # (V+P+H, E): word embeddings | position(+token-type-0) embeddings | gp_w
    emb_slab = jnp.concatenate([
        params["word_emb"],
        params["pos_emb"] + params["type_emb"][0][None, :],
        params["gp_w"],
    ], axis=0)

    # (E, 128+V): proj_w at lanes [0:H]; lm_w at the 128-aligned lanes [128:128+V]
    pw = jnp.zeros((E, 128 + V), jnp.float32)
    pw = pw.at[:, 0:H].set(params["proj_w"])
    pw = pw.at[:, 128:128 + V].set(params["lm_w"])

    # (L*3*nH, H+8, Dh): per-head q/k/v weight leaves, bias folded in as row H
    qkv_leaves = []
    for lyr in layers:
        for wname, bname in (("q_w", "q_b"), ("k_w", "k_b"), ("v_w", "v_b")):
            w = lyr[wname].reshape(H, nH, Dh)
            b = lyr[bname].reshape(nH, Dh)
            for hh in range(nH):
                leaf = jnp.zeros((H + 8, Dh), jnp.float32)
                leaf = leaf.at[0:H, :].set(w[:, hh, :])
                leaf = leaf.at[H, :].set(b[hh])
                qkv_leaves.append(leaf)
    qkv_w = jnp.stack(qkv_leaves)

    # (L*nH, Dh, H): per-head slices of the attention output projection
    ao_w = jnp.stack([lyr["ao_w"][hh * Dh:(hh + 1) * Dh, :]
                      for lyr in layers for hh in range(nH)])

    # (L, H+I, I): i_w on rows [0:H]; o_w on rows [H:H+I] (lanes [0:H])
    ffn_blocks = []
    for lyr in layers:
        blk = jnp.zeros((H + I, I), jnp.float32)
        blk = blk.at[0:H, :].set(lyr["i_w"])
        blk = blk.at[H:H + I, 0:H].set(lyr["o_w"])
        ffn_blocks.append(blk)
    ffn_w = jnp.stack(ffn_blocks)

    # (R, VEC_W): every 1-row bias / LN vector as one slab row
    def row(vec):
        return jnp.zeros((VEC_W,), jnp.float32).at[:vec.shape[0]].set(vec)

    rows = [
        row(params["emb_ln_g"]), row(params["emb_ln_b"]), row(params["proj_b"]),
        row(params["gp_b"]), row(params["gp_ln_g"]), row(params["gp_ln_b"]),
        row(params["lm_b"]),
        row(jnp.concatenate([params["det_w"][:, 0], params["det_b"][0:1]])),
        row(jnp.concatenate([params["det_w"][:, 1], params["det_b"][1:2]])),
    ]
    for lyr in layers:
        rows += [row(lyr["ao_b"]), row(lyr["ln1_g"]), row(lyr["ln1_b"]),
                 row(lyr["i_b"]), row(lyr["o_b"]), row(lyr["ln2_g"]),
                 row(lyr["ln2_b"])]
    while len(rows) % 8:
        rows.append(jnp.zeros((VEC_W,), jnp.float32))
    vec_slab = jnp.stack(rows)

    return dict(emb_slab=emb_slab, pw=pw, qkv_w=qkv_w, ao_w=ao_w,
                ffn_w=ffn_w, vec_slab=vec_slab)


# ----------------------------------------------------------------------------
# Forward wrapper (single pallas_call, no grid)
# ----------------------------------------------------------------------------

def pinyin_model_forward(packed, pinyin_input_ids, pinyin_attention_mask, cfg):
    """Returns (cor_out, det_out, hidden_states) — PinyinModel.forward,
    is_multitask=True."""
    B, S = pinyin_input_ids.shape
    V, E, H = cfg["vocab_size"], cfg["embedding_size"], cfg["hidden_size"]
    assert S <= cfg["max_position"]
    BS = B * S

    # token ids + position ids, batch folded into rows
    tok = pinyin_input_ids.astype(jnp.int32).reshape(BS)
    pos = jnp.tile(jnp.arange(S, dtype=jnp.int32), B)
    ids2 = jnp.stack([tok, pos], axis=1)                              # (BS, 2)

    # additive attention bias: padding mask + block-diagonal batch isolation
    r = jnp.arange(BS, dtype=jnp.int32)
    same_batch = (r[:, None] // S) == (r[None, :] // S)
    key_ok = pinyin_attention_mask.reshape(BS).astype(jnp.int32)[None, :] > 0
    attn_bias = jnp.where(same_batch & key_ok, 0.0, NEG_INF).astype(jnp.float32)

    kernel = functools.partial(
        _fused_forward_kernel,
        num_layers=cfg["num_layers"], num_heads=cfg["num_heads"],
        head_dim=cfg["head_dim"], vocab_size=V,
        max_position=cfg["max_position"], emb_size=E, hidden_size=H,
        inter_size=cfg["intermediate_size"])

    # No grid: single invocation, every operand is a whole-array VMEM block
    # (one DMA per packed slab; no serial grid-step overhead on v5e/v6e).
    # v7x alternative: grid=(B,) with dimension_semantics=(pltpu.CORE_PARALLEL,)
    # to split the batch across the two TensorCores — at this size the single
    # fused invocation is expected to win (each core would re-DMA all weights).
    out = pl.pallas_call(
        kernel,
        out_shape=jax.ShapeDtypeStruct((BS, V + H + 2), jnp.float32),
    )(ids2, attn_bias, packed["emb_slab"], packed["pw"], packed["qkv_w"],
      packed["ao_w"], packed["ffn_w"], packed["vec_slab"])

    cor_out = out[:, 0:V].reshape(B, S, V)
    hidden_states = out[:, V:V + H].reshape(B, S, H)
    det_out = out[:, V + H:V + H + 2].reshape(B, S, 2)
    return cor_out, det_out, hidden_states


# ----------------------------------------------------------------------------
# Pure-JAX reference (semantics check)
# ----------------------------------------------------------------------------

def reference_forward(params, ids, mask, cfg):
    B, S = ids.shape
    E, H = cfg["embedding_size"], cfg["hidden_size"]
    nH, Dh = cfg["num_heads"], cfg["head_dim"]

    def ln(x, g, b, eps=LN_EPS):
        mu = x.mean(-1, keepdims=True)
        var = ((x - mu) ** 2).mean(-1, keepdims=True)
        return (x - mu) / jnp.sqrt(var + eps) * g + b

    emb = (params["word_emb"][ids] + params["pos_emb"][:S][None]
           + params["type_emb"][0][None, None])
    emb = ln(emb, params["emb_ln_g"], params["emb_ln_b"])
    h = emb @ params["proj_w"] + params["proj_b"]
    bias = (1.0 - mask.astype(jnp.float32))[:, None, None, :] * NEG_INF
    for lyr in params["layers"]:
        q = (h @ lyr["q_w"] + lyr["q_b"]).reshape(B, S, nH, Dh).transpose(0, 2, 1, 3)
        k = (h @ lyr["k_w"] + lyr["k_b"]).reshape(B, S, nH, Dh).transpose(0, 2, 1, 3)
        v = (h @ lyr["v_w"] + lyr["v_b"]).reshape(B, S, nH, Dh).transpose(0, 2, 1, 3)
        s = jnp.einsum("bhqd,bhkd->bhqk", q, k) / math.sqrt(Dh) + bias
        p = jax.nn.softmax(s, axis=-1)
        ctx = jnp.einsum("bhqk,bhkd->bhqd", p, v).transpose(0, 2, 1, 3).reshape(B, S, H)
        h = ln(ctx @ lyr["ao_w"] + lyr["ao_b"] + h, lyr["ln1_g"], lyr["ln1_b"])
        inter = jax.nn.gelu(h @ lyr["i_w"] + lyr["i_b"], approximate=True)
        h = ln(inter @ lyr["o_w"] + lyr["o_b"] + h, lyr["ln2_g"], lyr["ln2_b"])
    hidden = h
    x = jax.nn.gelu(h @ params["gp_w"] + params["gp_b"], approximate=True)
    x = ln(x, params["gp_ln_g"], params["gp_ln_b"])
    cor = x @ params["lm_w"] + params["lm_b"]
    det = x @ params["det_w"] + params["det_b"]
    return cor, det, hidden


# ----------------------------------------------------------------------------
# Main
# ----------------------------------------------------------------------------

if __name__ == "__main__":
    key = jax.random.PRNGKey(0)
    pkey, ikey = jax.random.split(key)
    params = init_params(pkey, CFG)
    packed = pack_params(params, CFG)          # one-time weight repack (not per-call)

    B, S = 2, 8
    pinyin_input_ids = jax.random.randint(ikey, (B, S), 0, CFG["vocab_size"],
                                          dtype=jnp.int32)
    # second example has 2 padded positions at the end
    pinyin_attention_mask = jnp.array(
        [[1, 1, 1, 1, 1, 1, 1, 1],
         [1, 1, 1, 1, 1, 1, 0, 0]], dtype=jnp.int32)

    fwd = jax.jit(functools.partial(pinyin_model_forward, cfg=CFG))
    cor_out, det_out, hidden_states = fwd(packed, pinyin_input_ids,
                                          pinyin_attention_mask)
    jax.block_until_ready((cor_out, det_out, hidden_states))

    assert cor_out.shape == (B, S, CFG["vocab_size"])
    assert det_out.shape == (B, S, 2)
    assert hidden_states.shape == (B, S, CFG["hidden_size"])
    assert jnp.all(jnp.isfinite(cor_out))
    assert jnp.all(jnp.isfinite(det_out))
    assert jnp.all(jnp.isfinite(hidden_states))

    # semantics check vs pure-JAX reference (exact softmax now -> tight tol)
    ref_cor, ref_det, ref_hid = reference_forward(
        params, pinyin_input_ids, pinyin_attention_mask, CFG)
    assert jnp.max(jnp.abs(hidden_states - ref_hid)) < 5e-3
    assert jnp.max(jnp.abs(cor_out - ref_cor)) < 5e-3
    assert jnp.max(jnp.abs(det_out - ref_det)) < 5e-3

    print("KERNEL_OK")
</pallas_src>

<mosaic_0001>
module attributes {stable_mosaic.version = 11 : i64} {
  func.func @_fused_forward_kernel(%arg0: memref<16x2xi32, #tpu.memory_space<vmem>>, %arg1: memref<16x16xf32, #tpu.memory_space<vmem>>, %arg2: memref<224x32xf32, #tpu.memory_space<vmem>>, %arg3: memref<32x256xf32, #tpu.memory_space<vmem>>, %arg4: memref<24x72x16xf32, #tpu.memory_space<vmem>>, %arg5: memref<8x16x64xf32, #tpu.memory_space<vmem>>, %arg6: memref<2x192x128xf32, #tpu.memory_space<vmem>>, %arg7: memref<24x128xf32, #tpu.memory_space<vmem>>, %arg8: memref<16x194xf32, #tpu.memory_space<vmem>>) attributes {dimension_semantics = [], scalar_prefetch = 0 : i64, scratch_operands = 0 : i64, tpu.core_type = #tpu.core_type<tc>} {
    %c0 = arith.constant 0 : index
    %c0_0 = arith.constant 0 : index
    %0 = vector.load %arg0[%c0, %c0_0] : memref<16x2xi32, #tpu.memory_space<vmem>>, vector<16x1xi32>
    %c0_1 = arith.constant 0 : index
    %c1 = arith.constant 1 : index
    %1 = vector.load %arg0[%c0_1, %c1] : memref<16x2xi32, #tpu.memory_space<vmem>>, vector<16x1xi32>
    %2 = tpu.iota {dimensions = array<i32: 1>} : vector<16x128xi32>
    %3 = vector.broadcast %0 : vector<16x1xi32> to vector<16x128xi32>
    %4 = arith.cmpi eq, %3, %2 : vector<16x128xi32>
    %5 = arith.extui %4 : vector<16x128xi1> to vector<16x128xi32>
    %6 = arith.sitofp %5 : vector<16x128xi32> to vector<16x128xf32>
    %7 = tpu.iota {dimensions = array<i32: 1>} : vector<16x32xi32>
    %8 = vector.broadcast %1 : vector<16x1xi32> to vector<16x32xi32>
    %9 = arith.cmpi eq, %8, %7 : vector<16x32xi32>
    %10 = arith.extui %9 : vector<16x32xi1> to vector<16x32xi32>
    %11 = arith.sitofp %10 : vector<16x32xi32> to vector<16x32xf32>
    %c0_2 = arith.constant 0 : index
    %c0_3 = arith.constant 0 : index
    %12 = vector.load %arg2[%c0_2, %c0_3] : memref<224x32xf32, #tpu.memory_space<vmem>>, vector<128x32xf32>
    %cst = arith.constant dense<0.000000e+00> : vector<16x32xf32>
    %13 = tpu.matmul %6, %12, %cst {dimension_numbers = #tpu.dot_dimension_numbers<[1], [0], [0], [1], [0, 0, 1, 1], [], []>} : vector<16x128xf32>, vector<128x32xf32>, vector<16x32xf32> -> vector<16x32xf32>
    %c128 = arith.constant 128 : index
    %c0_4 = arith.constant 0 : index
    %14 = vector.load %arg2[%c128, %c0_4] : memref<224x32xf32, #tpu.memory_space<vmem>>, vector<32x32xf32>
    %cst_5 = arith.constant dense<0.000000e+00> : vector<16x32xf32>
    %15 = tpu.matmul %11, %14, %cst_5 {dimension_numbers = #tpu.dot_dimension_numbers<[1], [0], [0], [1], [0, 0, 1, 1], [], []>} : vector<16x32xf32>, vector<32x32xf32>, vector<16x32xf32> -> vector<16x32xf32>
    %16 = arith.addf %13, %15 : vector<16x32xf32>
    %c0_6 = arith.constant 0 : index
    %c0_7 = arith.constant 0 : index
    %17 = vector.load %arg7[%c0_6, %c0_7] : memref<24x128xf32, #tpu.memory_space<vmem>>, vector<1x32xf32>
    %c1_8 = arith.constant 1 : index
    %c0_9 = arith.constant 0 : index
    %18 = vector.load %arg7[%c1_8, %c0_9] : memref<24x128xf32, #tpu.memory_space<vmem>>, vector<1x32xf32>
    %cst_10 = arith.constant dense<0.000000e+00> : vector<16xf32>
    %19 = vector.multi_reduction <add>, %16, %cst_10 [1] : vector<16x32xf32> to vector<16xf32>
    %20 = vector.shape_cast %19 : vector<16xf32> to vector<16x1xf32>
    %cst_11 = arith.constant 3.200000e+01 : f32
    %21 = vector.broadcast %cst_11 : f32 to vector<16x1xf32>
    %22 = arith.divf %20, %21 : vector<16x1xf32>
    %23 = vector.broadcast %22 : vector<16x1xf32> to vector<16x32xf32>
    %24 = arith.subf %16, %23 : vector<16x32xf32>
    %25 = arith.mulf %24, %24 : vector<16x32xf32>
    %cst_12 = arith.constant dense<0.000000e+00> : vector<16xf32>
    %26 = vector.multi_reduction <add>, %25, %cst_12 [1] : vector<16x32xf32> to vector<16xf32>
    %27 = vector.shape_cast %26 : vector<16xf32> to vector<16x1xf32>
    %cst_13 = arith.constant 3.200000e+01 : f32
    %28 = vector.broadcast %cst_13 : f32 to vector<16x1xf32>
    %29 = arith.divf %27, %28 : vector<16x1xf32>
    %cst_14 = arith.constant 9.99999996E-13 : f32
    %30 = vector.broadcast %cst_14 : f32 to vector<16x1xf32>
    %31 = arith.addf %29, %30 : vector<16x1xf32>
    %32 = math.rsqrt %31 : vector<16x1xf32>
    %33 = vector.broadcast %32 : vector<16x1xf32> to vector<16x32xf32>
    %34 = arith.mulf %24, %33 : vector<16x32xf32>
    %35 = vector.broadcast %17 : vector<1x32xf32> to vector<16x32xf32>
    %36 = arith.mulf %34, %35 : vector<16x32xf32>
    %37 = vector.broadcast %18 : vector<1x32xf32> to vector<16x32xf32>
    %38 = arith.addf %36, %37 : vector<16x32xf32>
    %c0_15 = arith.constant 0 : index
    %c0_16 = arith.constant 0 : index
    %39 = vector.load %arg3[%c0_15, %c0_16] : memref<32x256xf32, #tpu.memory_space<vmem>>, vector<32x64xf32>
    %cst_17 = arith.constant dense<0.000000e+00> : vector<16x64xf32>
    %40 = tpu.matmul %38, %39, %cst_17 {dimension_numbers = #tpu.dot_dimension_numbers<[1], [0], [0], [1], [0, 0, 1, 1], [], []>} : vector<16x32xf32>, vector<32x64xf32>, vector<16x64xf32> -> vector<16x64xf32>
    %c2 = arith.constant 2 : index
    %c0_18 = arith.constant 0 : index
    %41 = vector.load %arg7[%c2, %c0_18] : memref<24x128xf32, #tpu.memory_space<vmem>>, vector<1x64xf32>
    %42 = vector.broadcast %41 : vector<1x64xf32> to vector<16x64xf32>
    %43 = arith.addf %40, %42 : vector<16x64xf32>
    %c0_19 = arith.constant 0 : index
    %c0_20 = arith.constant 0 : index
    %44 = vector.load %arg1[%c0_19, %c0_20] : memref<16x16xf32, #tpu.memory_space<vmem>>, vector<16x16xf32>
    %cst_21 = arith.constant 0.000000e+00 : f32
    %45 = vector.broadcast %cst_21 : f32 to vector<16x64xf32>
    %c0_22 = arith.constant 0 : index
    %c0_23 = arith.constant 0 : index
    %c0_24 = arith.constant 0 : index
    %46 = vector.load %arg4[%c0_22, %c0_23, %c0_24] : memref<24x72x16xf32, #tpu.memory_space<vmem>>, vector<1x64x16xf32>
    %47 = vector.shape_cast %46 : vector<1x64x16xf32> to vector<64x16xf32>
    %c0_25 = arith.constant 0 : index
    %c64 = arith.constant 64 : index
    %c0_26 = arith.constant 0 : index
    %48 = vector.load %arg4[%c0_25, %c64, %c0_26] : memref<24x72x16xf32, #tpu.memory_space<vmem>>, vector<1x1x16xf32>
    %49 = vector.shape_cast %48 : vector<1x1x16xf32> to vector<1x16xf32>
    %cst_27 = arith.constant dense<0.000000e+00> : vector<16x16xf32>
    %50 = tpu.matmul %43, %47, %cst_27 {dimension_numbers = #tpu.dot_dimension_numbers<[1], [0], [0], [1], [0, 0, 1, 1], [], []>} : vector<16x64xf32>, vector<64x16xf32>, vector<16x16xf32> -> vector<16x16xf32>
    %51 = vector.broadcast %49 : vector<1x16xf32> to vector<16x16xf32>
    %52 = arith.addf %50, %51 : vector<16x16xf32>
    %c4 = arith.constant 4 : index
    %c0_28 = arith.constant 0 : index
    %c0_29 = arith.constant 0 : index
    %53 = vector.load %arg4[%c4, %c0_28, %c0_29] : memref<24x72x16xf32, #tpu.memory_space<vmem>>, vector<1x64x16xf32>
    %54 = vector.shape_cast %53 : vector<1x64x16xf32> to vector<64x16xf32>
    %c4_30 = arith.constant 4 : index
    %c64_31 = arith.constant 64 : index
    %c0_32 = arith.constant 0 : index
    %55 = vector.load %arg4[%c4_30, %c64_31, %c0_32] : memref<24x72x16xf32, #tpu.memory_space<vmem>>, vector<1x1x16xf32>
    %56 = vector.shape_cast %55 : vector<1x1x16xf32> to vector<1x16xf32>
    %cst_33 = arith.constant dense<0.000000e+00> : vector<16x16xf32>
    %57 = tpu.matmul %43, %54, %cst_33 {dimension_numbers = #tpu.dot_dimension_numbers<[1], [0], [0], [1], [0, 0, 1, 1], [], []>} : vector<16x64xf32>, vector<64x16xf32>, vector<16x16xf32> -> vector<16x16xf32>
    %58 = vector.broadcast %56 : vector<1x16xf32> to vector<16x16xf32>
    %59 = arith.addf %57, %58 : vector<16x16xf32>
    %c8 = arith.constant 8 : index
    %c0_34 = arith.constant 0 : index
    %c0_35 = arith.constant 0 : index
    %60 = vector.load %arg4[%c8, %c0_34, %c0_35] : memref<24x72x16xf32, #tpu.memory_space<vmem>>, vector<1x64x16xf32>
    %61 = vector.shape_cast %60 : vector<1x64x16xf32> to vector<64x16xf32>
    %c8_36 = arith.constant 8 : index
    %c64_37 = arith.constant 64 : index
    %c0_38 = arith.constant 0 : index
    %62 = vector.load %arg4[%c8_36, %c64_37, %c0_38] : memref<24x72x16xf32, #tpu.memory_space<vmem>>, vector<1x1x16xf32>
    %63 = vector.shape_cast %62 : vector<1x1x16xf32> to vector<1x16xf32>
    %cst_39 = arith.constant dense<0.000000e+00> : vector<16x16xf32>
    %64 = tpu.matmul %43, %61, %cst_39 {dimension_numbers = #tpu.dot_dimension_numbers<[1], [0], [0], [1], [0, 0, 1, 1], [], []>} : vector<16x64xf32>, vector<64x16xf32>, vector<16x16xf32> -> vector<16x16xf32>
    %65 = vector.broadcast %63 : vector<1x16xf32> to vector<16x16xf32>
    %66 = arith.addf %64, %65 : vector<16x16xf32>
    %cst_40 = arith.constant dense<0.000000e+00> : vector<16x16xf32>
    %67 = tpu.matmul %52, %59, %cst_40 {dimension_numbers = #tpu.dot_dimension_numbers<[1], [1], [0], [0], [0, 0, 1, 0], [], []>} : vector<16x16xf32>, vector<16x16xf32>, vector<16x16xf32> -> vector<16x16xf32>
    %cst_41 = arith.constant 2.500000e-01 : f32
    %68 = vector.broadcast %cst_41 : f32 to vector<16x16xf32>
    %69 = arith.mulf %67, %68 : vector<16x16xf32>
    %70 = arith.addf %69, %44 : vector<16x16xf32>
    %cst_42 = arith.constant dense<0xFF800000> : vector<16xf32>
    %71 = vector.multi_reduction <maximumf>, %70, %cst_42 [1] : vector<16x16xf32> to vector<16xf32>
    %72 = vector.shape_cast %71 : vector<16xf32> to vector<16x1xf32>
    %73 = vector.broadcast %72 : vector<16x1xf32> to vector<16x16xf32>
    %74 = arith.subf %70, %73 : vector<16x16xf32>
    %75 = math.exp %74 : vector<16x16xf32>
    %cst_43 = arith.constant dense<0.000000e+00> : vector<16xf32>
    %76 = vector.multi_reduction <add>, %75, %cst_43 [1] : vector<16x16xf32> to vector<16xf32>
    %77 = vector.shape_cast %76 : vector<16xf32> to vector<16x1xf32>
    %78 = vector.broadcast %77 : vector<16x1xf32> to vector<16x16xf32>
    %79 = arith.divf %75, %78 : vector<16x16xf32>
    %cst_44 = arith.constant dense<0.000000e+00> : vector<16x16xf32>
    %80 = tpu.matmul %79, %66, %cst_44 {dimension_numbers = #tpu.dot_dimension_numbers<[1], [0], [0], [1], [0, 0, 1, 1], [], []>} : vector<16x16xf32>, vector<16x16xf32>, vector<16x16xf32> -> vector<16x16xf32>
    %c0_45 = arith.constant 0 : index
    %c0_46 = arith.constant 0 : index
    %c0_47 = arith.constant 0 : index
    %81 = vector.load %arg5[%c0_45, %c0_46, %c0_47] : memref<8x16x64xf32, #tpu.memory_space<vmem>>, vector<1x16x64xf32>
    %82 = vector.shape_cast %81 : vector<1x16x64xf32> to vector<16x64xf32>
    %cst_48 = arith.constant dense<0.000000e+00> : vector<16x64xf32>
    %83 = tpu.matmul %80, %82, %cst_48 {dimension_numbers = #tpu.dot_dimension_numbers<[1], [0], [0], [1], [0, 0, 1, 1], [], []>} : vector<16x16xf32>, vector<16x64xf32>, vector<16x64xf32> -> vector<16x64xf32>
    %84 = arith.addf %45, %83 : vector<16x64xf32>
    %c1_49 = arith.constant 1 : index
    %c0_50 = arith.constant 0 : index
    %c0_51 = arith.constant 0 : index
    %85 = vector.load %arg4[%c1_49, %c0_50, %c0_51] : memref<24x72x16xf32, #tpu.memory_space<vmem>>, vector<1x64x16xf32>
    %86 = vector.shape_cast %85 : vector<1x64x16xf32> to vector<64x16xf32>
    %c1_52 = arith.constant 1 : index
    %c64_53 = arith.constant 64 : index
    %c0_54 = arith.constant 0 : index
    %87 = vector.load %arg4[%c1_52, %c64_53, %c0_54] : memref<24x72x16xf32, #tpu.memory_space<vmem>>, vector<1x1x16xf32>
    %88 = vector.shape_cast %87 : vector<1x1x16xf32> to vector<1x16xf32>
    %cst_55 = arith.constant dense<0.000000e+00> : vector<16x16xf32>
    %89 = tpu.matmul %43, %86, %cst_55 {dimension_numbers = #tpu.dot_dimension_numbers<[1], [0], [0], [1], [0, 0, 1, 1], [], []>} : vector<16x64xf32>, vector<64x16xf32>, vector<16x16xf32> -> vector<16x16xf32>
    %90 = vector.broadcast %88 : vector<1x16xf32> to vector<16x16xf32>
    %91 = arith.addf %89, %90 : vector<16x16xf32>
    %c5 = arith.constant 5 : index
    %c0_56 = arith.constant 0 : index
    %c0_57 = arith.constant 0 : index
    %92 = vector.load %arg4[%c5, %c0_56, %c0_57] : memref<24x72x16xf32, #tpu.memory_space<vmem>>, vector<1x64x16xf32>
    %93 = vector.shape_cast %92 : vector<1x64x16xf32> to vector<64x16xf32>
    %c5_58 = arith.constant 5 : index
    %c64_59 = arith.constant 64 : index
    %c0_60 = arith.constant 0 : index
    %94 = vector.load %arg4[%c5_58, %c64_59, %c0_60] : memref<24x72x16xf32, #tpu.memory_space<vmem>>, vector<1x1x16xf32>
    %95 = vector.shape_cast %94 : vector<1x1x16xf32> to vector<1x16xf32>
    %cst_61 = arith.constant dense<0.000000e+00> : vector<16x16xf32>
    %96 = tpu.matmul %43, %93, %cst_61 {dimension_numbers = #tpu.dot_dimension_numbers<[1], [0], [0], [1], [0, 0, 1, 1], [], []>} : vector<16x64xf32>, vector<64x16xf32>, vector<16x16xf32> -> vector<16x16xf32>
    %97 = vector.broadcast %95 : vector<1x16xf32> to vector<16x16xf32>
    %98 = arith.addf %96, %97 : vector<16x16xf32>
    %c9 = arith.constant 9 : index
    %c0_62 = arith.constant 0 : index
    %c0_63 = arith.constant 0 : index
    %99 = vector.load %arg4[%c9, %c0_62, %c0_63] : memref<24x72x16xf32, #tpu.memory_space<vmem>>, vector<1x64x16xf32>
    %100 = vector.shape_cast %99 : vector<1x64x16xf32> to vector<64x16xf32>
    %c9_64 = arith.constant 9 : index
    %c64_65 = arith.constant 64 : index
    %c0_66 = arith.constant 0 : index
    %101 = vector.load %arg4[%c9_64, %c64_65, %c0_66] : memref<24x72x16xf32, #tpu.memory_space<vmem>>, vector<1x1x16xf32>
    %102 = vector.shape_cast %101 : vector<1x1x16xf32> to vector<1x16xf32>
    %cst_67 = arith.constant dense<0.000000e+00> : vector<16x16xf32>
    %103 = tpu.matmul %43, %100, %cst_67 {dimension_numbers = #tpu.dot_dimension_numbers<[1], [0], [0], [1], [0, 0, 1, 1], [], []>} : vector<16x64xf32>, vector<64x16xf32>, vector<16x16xf32> -> vector<16x16xf32>
    %104 = vector.broadcast %102 : vector<1x16xf32> to vector<16x16xf32>
    %105 = arith.addf %103, %104 : vector<16x16xf32>
    %cst_68 = arith.constant dense<0.000000e+00> : vector<16x16xf32>
    %106 = tpu.matmul %91, %98, %cst_68 {dimension_numbers = #tpu.dot_dimension_numbers<[1], [1], [0], [0], [0, 0, 1, 0], [], []>} : vector<16x16xf32>, vector<16x16xf32>, vector<16x16xf32> -> vector<16x16xf32>
    %cst_69 = arith.constant 2.500000e-01 : f32
    %107 = vector.broadcast %cst_69 : f32 to vector<16x16xf32>
    %108 = arith.mulf %106, %107 : vector<16x16xf32>
    %109 = arith.addf %108, %44 : vector<16x16xf32>
    %cst_70 = arith.constant dense<0xFF800000> : vector<16xf32>
    %110 = vector.multi_reduction <maximumf>, %109, %cst_70 [1] : vector<16x16xf32> to vector<16xf32>
    %111 = vector.shape_cast %110 : vector<16xf32> to vector<16x1xf32>
    %112 = vector.broadcast %111 : vector<16x1xf32> to vector<16x16xf32>
    %113 = arith.subf %109, %112 : vector<16x16xf32>
    %114 = math.exp %113 : vector<16x16xf32>
    %cst_71 = arith.constant dense<0.000000e+00> : vector<16xf32>
    %115 = vector.multi_reduction <add>, %114, %cst_71 [1] : vector<16x16xf32> to vector<16xf32>
    %116 = vector.shape_cast %115 : vector<16xf32> to vector<16x1xf32>
    %117 = vector.broadcast %116 : vector<16x1xf32> to vector<16x16xf32>
    %118 = arith.divf %114, %117 : vector<16x16xf32>
    %cst_72 = arith.constant dense<0.000000e+00> : vector<16x16xf32>
    %119 = tpu.matmul %118, %105, %cst_72 {dimension_numbers = #tpu.dot_dimension_numbers<[1], [0], [0], [1], [0, 0, 1, 1], [], []>} : vector<16x16xf32>, vector<16x16xf32>, vector<16x16xf32> -> vector<16x16xf32>
    %c1_73 = arith.constant 1 : index
    %c0_74 = arith.constant 0 : index
    %c0_75 = arith.constant 0 : index
    %120 = vector.load %arg5[%c1_73, %c0_74, %c0_75] : memref<8x16x64xf32, #tpu.memory_space<vmem>>, vector<1x16x64xf32>
    %121 = vector.shape_cast %120 : vector<1x16x64xf32> to vector<16x64xf32>
    %cst_76 = arith.constant dense<0.000000e+00> : vector<16x64xf32>
    %122 = tpu.matmul %119, %121, %cst_76 {dimension_numbers = #tpu.dot_dimension_numbers<[1], [0], [0], [1], [0, 0, 1, 1], [], []>} : vector<16x16xf32>, vector<16x64xf32>, vector<16x64xf32> -> vector<16x64xf32>
    %123 = arith.addf %84, %122 : vector<16x64xf32>
    %c2_77 = arith.constant 2 : index
    %c0_78 = arith.constant 0 : index
    %c0_79 = arith.constant 0 : index
    %124 = vector.load %arg4[%c2_77, %c0_78, %c0_79] : memref<24x72x16xf32, #tpu.memory_space<vmem>>, vector<1x64x16xf32>
    %125 = vector.shape_cast %124 : vector<1x64x16xf32> to vector<64x16xf32>
    %c2_80 = arith.constant 2 : index
    %c64_81 = arith.constant 64 : index
    %c0_82 = arith.constant 0 : index
    %126 = vector.load %arg4[%c2_80, %c64_81, %c0_82] : memref<24x72x16xf32, #tpu.memory_space<vmem>>, vector<1x1x16xf32>
    %127 = vector.shape_cast %126 : vector<1x1x16xf32> to vector<1x16xf32>
    %cst_83 = arith.constant dense<0.000000e+00> : vector<16x16xf32>
    %128 = tpu.matmul %43, %125, %cst_83 {dimension_numbers = #tpu.dot_dimension_numbers<[1], [0], [0], [1], [0, 0, 1, 1], [], []>} : vector<16x64xf32>, vector<64x16xf32>, vector<16x16xf32> -> vector<16x16xf32>
    %129 = vector.broadcast %127 : vector<1x16xf32> to vector<16x16xf32>
    %130 = arith.addf %128, %129 : vector<16x16xf32>
    %c6 = arith.constant 6 : index
    %c0_84 = arith.constant 0 : index
    %c0_85 = arith.constant 0 : index
    %131 = vector.load %arg4[%c6, %c0_84, %c0_85] : memref<24x72x16xf32, #tpu.memory_space<vmem>>, vector<1x64x16xf32>
    %132 = vector.shape_cast %131 : vector<1x64x16xf32> to vector<64x16xf32>
    %c6_86 = arith.constant 6 : index
    %c64_87 = arith.constant 64 : index
    %c0_88 = arith.constant 0 : index
    %133 = vector.load %arg4[%c6_86, %c64_87, %c0_88] : memref<24x72x16xf32, #tpu.memory_space<vmem>>, vector<1x1x16xf32>
    %134 = vector.shape_cast %133 : vector<1x1x16xf32> to vector<1x16xf32>
    %cst_89 = arith.constant dense<0.000000e+00> : vector<16x16xf32>
    %135 = tpu.matmul %43, %132, %cst_89 {dimension_numbers = #tpu.dot_dimension_numbers<[1], [0], [0], [1], [0, 0, 1, 1], [], []>} : vector<16x64xf32>, vector<64x16xf32>, vector<16x16xf32> -> vector<16x16xf32>
    %136 = vector.broadcast %134 : vector<1x16xf32> to vector<16x16xf32>
    %137 = arith.addf %135, %136 : vector<16x16xf32>
    %c10 = arith.constant 10 : index
    %c0_90 = arith.constant 0 : index
    %c0_91 = arith.constant 0 : index
    %138 = vector.load %arg4[%c10, %c0_90, %c0_91] : memref<24x72x16xf32, #tpu.memory_space<vmem>>, vector<1x64x16xf32>
    %139 = vector.shape_cast %138 : vector<1x64x16xf32> to vector<64x16xf32>
    %c10_92 = arith.constant 10 : index
    %c64_93 = arith.constant 64 : index
    %c0_94 = arith.constant 0 : index
    %140 = vector.load %arg4[%c10_92, %c64_93, %c0_94] : memref<24x72x16xf32, #tpu.memory_space<vmem>>, vector<1x1x16xf32>
    %141 = vector.shape_cast %140 : vector<1x1x16xf32> to vector<1x16xf32>
    %cst_95 = arith.constant dense<0.000000e+00> : vector<16x16xf32>
    %142 = tpu.matmul %43, %139, %cst_95 {dimension_numbers = #tpu.dot_dimension_numbers<[1], [0], [0], [1], [0, 0, 1, 1], [], []>} : vector<16x64xf32>, vector<64x16xf32>, vector<16x16xf32> -> vector<16x16xf32>
    %143 = vector.broadcast %141 : vector<1x16xf32> to vector<16x16xf32>
    %144 = arith.addf %142, %143 : vector<16x16xf32>
    %cst_96 = arith.constant dense<0.000000e+00> : vector<16x16xf32>
    %145 = tpu.matmul %130, %137, %cst_96 {dimension_numbers = #tpu.dot_dimension_numbers<[1], [1], [0], [0], [0, 0, 1, 0], [], []>} : vector<16x16xf32>, vector<16x16xf32>, vector<16x16xf32> -> vector<16x16xf32>
    %cst_97 = arith.constant 2.500000e-01 : f32
    %146 = vector.broadcast %cst_97 : f32 to vector<16x16xf32>
    %147 = arith.mulf %145, %146 : vector<16x16xf32>
    %148 = arith.addf %147, %44 : vector<16x16xf32>
    %cst_98 = arith.constant dense<0xFF800000> : vector<16xf32>
    %149 = vector.multi_reduction <maximumf>, %148, %cst_98 [1] : vector<16x16xf32> to vector<16xf32>
    %150 = vector.shape_cast %149 : vector<16xf32> to vector<16x1xf32>
    %151 = vector.broadcast %150 : vector<16x1xf32> to vector<16x16xf32>
    %152 = arith.subf %148, %151 : vector<16x16xf32>
    %153 = math.exp %152 : vector<16x16xf32>
    %cst_99 = arith.constant dense<0.000000e+00> : vector<16xf32>
    %154 = vector.multi_reduction <add>, %153, %cst_99 [1] : vector<16x16xf32> to vector<16xf32>
    %155 = vector.shape_cast %154 : vector<16xf32> to vector<16x1xf32>
    %156 = vector.broadcast %155 : vector<16x1xf32> to vector<16x16xf32>
    %157 = arith.divf %153, %156 : vector<16x16xf32>
    %cst_100 = arith.constant dense<0.000000e+00> : vector<16x16xf32>
    %158 = tpu.matmul %157, %144, %cst_100 {dimension_numbers = #tpu.dot_dimension_numbers<[1], [0], [0], [1], [0, 0, 1, 1], [], []>} : vector<16x16xf32>, vector<16x16xf32>, vector<16x16xf32> -> vector<16x16xf32>
    %c2_101 = arith.constant 2 : index
    %c0_102 = arith.constant 0 : index
    %c0_103 = arith.constant 0 : index
    %159 = vector.load %arg5[%c2_101, %c0_102, %c0_103] : memref<8x16x64xf32, #tpu.memory_space<vmem>>, vector<1x16x64xf32>
    %160 = vector.shape_cast %159 : vector<1x16x64xf32> to vector<16x64xf32>
    %cst_104 = arith.constant dense<0.000000e+00> : vector<16x64xf32>
    %161 = tpu.matmul %158, %160, %cst_104 {dimension_numbers = #tpu.dot_dimension_numbers<[1], [0], [0], [1], [0, 0, 1, 1], [], []>} : vector<16x16xf32>, vector<16x64xf32>, vector<16x64xf32> -> vector<16x64xf32>
    %162 = arith.addf %123, %161 : vector<16x64xf32>
    %c3 = arith.constant 3 : index
    %c0_105 = arith.constant 0 : index
    %c0_106 = arith.constant 0 : index
    %163 = vector.load %arg4[%c3, %c0_105, %c0_106] : memref<24x72x16xf32, #tpu.memory_space<vmem>>, vector<1x64x16xf32>
    %164 = vector.shape_cast %163 : vector<1x64x16xf32> to vector<64x16xf32>
    %c3_107 = arith.constant 3 : index
    %c64_108 = arith.constant 64 : index
    %c0_109 = arith.constant 0 : index
    %165 = vector.load %arg4[%c3_107, %c64_108, %c0_109] : memref<24x72x16xf32, #tpu.memory_space<vmem>>, vector<1x1x16xf32>
    %166 = vector.shape_cast %165 : vector<1x1x16xf32> to vector<1x16xf32>
    %cst_110 = arith.constant dense<0.000000e+00> : vector<16x16xf32>
    %167 = tpu.matmul %43, %164, %cst_110 {dimension_numbers = #tpu.dot_dimension_numbers<[1], [0], [0], [1], [0, 0, 1, 1], [], []>} : vector<16x64xf32>, vector<64x16xf32>, vector<16x16xf32> -> vector<16x16xf32>
    %168 = vector.broadcast %166 : vector<1x16xf32> to vector<16x16xf32>
    %169 = arith.addf %167, %168 : vector<16x16xf32>
    %c7 = arith.constant 7 : index
    %c0_111 = arith.constant 0 : index
    %c0_112 = arith.constant 0 : index
    %170 = vector.load %arg4[%c7, %c0_111, %c0_112] : memref<24x72x16xf32, #tpu.memory_space<vmem>>, vector<1x64x16xf32>
    %171 = vector.shape_cast %170 : vector<1x64x16xf32> to vector<64x16xf32>
    %c7_113 = arith.constant 7 : index
    %c64_114 = arith.constant 64 : index
    %c0_115 = arith.constant 0 : index
    %172 = vector.load %arg4[%c7_113, %c64_114, %c0_115] : memref<24x72x16xf32, #tpu.memory_space<vmem>>, vector<1x1x16xf32>
    %173 = vector.shape_cast %172 : vector<1x1x16xf32> to vector<1x16xf32>
    %cst_116 = arith.constant dense<0.000000e+00> : vector<16x16xf32>
    %174 = tpu.matmul %43, %171, %cst_116 {dimension_numbers = #tpu.dot_dimension_numbers<[1], [0], [0], [1], [0, 0, 1, 1], [], []>} : vector<16x64xf32>, vector<64x16xf32>, vector<16x16xf32> -> vector<16x16xf32>
    %175 = vector.broadcast %173 : vector<1x16xf32> to vector<16x16xf32>
    %176 = arith.addf %174, %175 : vector<16x16xf32>
    %c11 = arith.constant 11 : index
    %c0_117 = arith.constant 0 : index
    %c0_118 = arith.constant 0 : index
    %177 = vector.load %arg4[%c11, %c0_117, %c0_118] : memref<24x72x16xf32, #tpu.memory_space<vmem>>, vector<1x64x16xf32>
    %178 = vector.shape_cast %177 : vector<1x64x16xf32> to vector<64x16xf32>
    %c11_119 = arith.constant 11 : index
    %c64_120 = arith.constant 64 : index
    %c0_121 = arith.constant 0 : index
    %179 = vector.load %arg4[%c11_119, %c64_120, %c0_121] : memref<24x72x16xf32, #tpu.memory_space<vmem>>, vector<1x1x16xf32>
    %180 = vector.shape_cast %179 : vector<1x1x16xf32> to vector<1x16xf32>
    %cst_122 = arith.constant dense<0.000000e+00> : vector<16x16xf32>
    %181 = tpu.matmul %43, %178, %cst_122 {dimension_numbers = #tpu.dot_dimension_numbers<[1], [0], [0], [1], [0, 0, 1, 1], [], []>} : vector<16x64xf32>, vector<64x16xf32>, vector<16x16xf32> -> vector<16x16xf32>
    %182 = vector.broadcast %180 : vector<1x16xf32> to vector<16x16xf32>
    %183 = arith.addf %181, %182 : vector<16x16xf32>
    %cst_123 = arith.constant dense<0.000000e+00> : vector<16x16xf32>
    %184 = tpu.matmul %169, %176, %cst_123 {dimension_numbers = #tpu.dot_dimension_numbers<[1], [1], [0], [0], [0, 0, 1, 0], [], []>} : vector<16x16xf32>, vector<16x16xf32>, vector<16x16xf32> -> vector<16x16xf32>
    %cst_124 = arith.constant 2.500000e-01 : f32
    %185 = vector.broadcast %cst_124 : f32 to vector<16x16xf32>
    %186 = arith.mulf %184, %185 : vector<16x16xf32>
    %187 = arith.addf %186, %44 : vector<16x16xf32>
    %cst_125 = arith.constant dense<0xFF800000> : vector<16xf32>
    %188 = vector.multi_reduction <maximumf>, %187, %cst_125 [1] : vector<16x16xf32> to vector<16xf32>
    %189 = vector.shape_cast %188 : vector<16xf32> to vector<16x1xf32>
    %190 = vector.broadcast %189 : vector<16x1xf32> to vector<16x16xf32>
    %191 = arith.subf %187, %190 : vector<16x16xf32>
    %192 = math.exp %191 : vector<16x16xf32>
    %cst_126 = arith.constant dense<0.000000e+00> : vector<16xf32>
    %193 = vector.multi_reduction <add>, %192, %cst_126 [1] : vector<16x16xf32> to vector<16xf32>
    %194 = vector.shape_cast %193 : vector<16xf32> to vector<16x1xf32>
    %195 = vector.broadcast %194 : vector<16x1xf32> to vector<16x16xf32>
    %196 = arith.divf %192, %195 : vector<16x16xf32>
    %cst_127 = arith.constant dense<0.000000e+00> : vector<16x16xf32>
    %197 = tpu.matmul %196, %183, %cst_127 {dimension_numbers = #tpu.dot_dimension_numbers<[1], [0], [0], [1], [0, 0, 1, 1], [], []>} : vector<16x16xf32>, vector<16x16xf32>, vector<16x16xf32> -> vector<16x16xf32>
    %c3_128 = arith.constant 3 : index
    %c0_129 = arith.constant 0 : index
    %c0_130 = arith.constant 0 : index
    %198 = vector.load %arg5[%c3_128, %c0_129, %c0_130] : memref<8x16x64xf32, #tpu.memory_space<vmem>>, vector<1x16x64xf32>
    %199 = vector.shape_cast %198 : vector<1x16x64xf32> to vector<16x64xf32>
    %cst_131 = arith.constant dense<0.000000e+00> : vector<16x64xf32>
    %200 = tpu.matmul %197, %199, %cst_131 {dimension_numbers = #tpu.dot_dimension_numbers<[1], [0], [0], [1], [0, 0, 1, 1], [], []>} : vector<16x16xf32>, vector<16x64xf32>, vector<16x64xf32> -> vector<16x64xf32>
    %201 = arith.addf %162, %200 : vector<16x64xf32>
    %c9_132 = arith.constant 9 : index
    %c0_133 = arith.constant 0 : index
    %202 = vector.load %arg7[%c9_132, %c0_133] : memref<24x128xf32, #tpu.memory_space<vmem>>, vector<1x64xf32>
    %203 = vector.broadcast %202 : vector<1x64xf32> to vector<16x64xf32>
    %204 = arith.addf %201, %203 : vector<16x64xf32>
    %205 = arith.addf %204, %43 : vector<16x64xf32>
    %c10_134 = arith.constant 10 : index
    %c0_135 = arith.constant 0 : index
    %206 = vector.load %arg7[%c10_134, %c0_135] : memref<24x128xf32, #tpu.memory_space<vmem>>, vector<1x64xf32>
    %c11_136 = arith.constant 11 : index
    %c0_137 = arith.constant 0 : index
    %207 = vector.load %arg7[%c11_136, %c0_137] : memref<24x128xf32, #tpu.memory_space<vmem>>, vector<1x64xf32>
    %cst_138 = arith.constant dense<0.000000e+00> : vector<16xf32>
    %208 = vector.multi_reduction <add>, %205, %cst_138 [1] : vector<16x64xf32> to vector<16xf32>
    %209 = vector.shape_cast %208 : vector<16xf32> to vector<16x1xf32>
    %cst_139 = arith.constant 6.400000e+01 : f32
    %210 = vector.broadcast %cst_139 : f32 to vector<16x1xf32>
    %211 = arith.divf %209, %210 : vector<16x1xf32>
    %212 = vector.broadcast %211 : vector<16x1xf32> to vector<16x64xf32>
    %213 = arith.subf %205, %212 : vector<16x64xf32>
    %214 = arith.mulf %213, %213 : vector<16x64xf32>
    %cst_140 = arith.constant dense<0.000000e+00> : vector<16xf32>
    %215 = vector.multi_reduction <add>, %214, %cst_140 [1] : vector<16x64xf32> to vector<16xf32>
    %216 = vector.shape_cast %215 : vector<16xf32> to vector<16x1xf32>
    %cst_141 = arith.constant 6.400000e+01 : f32
    %217 = vector.broadcast %cst_141 : f32 to vector<16x1xf32>
    %218 = arith.divf %216, %217 : vector<16x1xf32>
    %cst_142 = arith.constant 9.99999996E-13 : f32
    %219 = vector.broadcast %cst_142 : f32 to vector<16x1xf32>
    %220 = arith.addf %218, %219 : vector<16x1xf32>
    %221 = math.rsqrt %220 : vector<16x1xf32>
    %222 = vector.broadcast %221 : vector<16x1xf32> to vector<16x64xf32>
    %223 = arith.mulf %213, %222 : vector<16x64xf32>
    %224 = vector.broadcast %206 : vector<1x64xf32> to vector<16x64xf32>
    %225 = arith.mulf %223, %224 : vector<16x64xf32>
    %226 = vector.broadcast %207 : vector<1x64xf32> to vector<16x64xf32>
    %227 = arith.addf %225, %226 : vector<16x64xf32>
    %c0_143 = arith.constant 0 : index
    %c0_144 = arith.constant 0 : index
    %c0_145 = arith.constant 0 : index
    %228 = vector.load %arg6[%c0_143, %c0_144, %c0_145] : memref<2x192x128xf32, #tpu.memory_space<vmem>>, vector<1x64x128xf32>
    %229 = vector.shape_cast %228 : vector<1x64x128xf32> to vector<64x128xf32>
    %cst_146 = arith.constant dense<0.000000e+00> : vector<16x128xf32>
    %230 = tpu.matmul %227, %229, %cst_146 {dimension_numbers = #tpu.dot_dimension_numbers<[1], [0], [0], [1], [0, 0, 1, 1], [], []>} : vector<16x64xf32>, vector<64x128xf32>, vector<16x128xf32> -> vector<16x128xf32>
    %c12 = arith.constant 12 : index
    %c0_147 = arith.constant 0 : index
    %231 = vector.load %arg7[%c12, %c0_147] : memref<24x128xf32, #tpu.memory_space<vmem>>, vector<1x128xf32>
    %232 = vector.broadcast %231 : vector<1x128xf32> to vector<16x128xf32>
    %233 = arith.addf %230, %232 : vector<16x128xf32>
    %234 = arith.mulf %233, %233 : vector<16x128xf32>
    %235 = arith.mulf %233, %234 : vector<16x128xf32>
    %cst_148 = arith.constant 4.471500e-02 : f32
    %236 = vector.broadcast %cst_148 : f32 to vector<16x128xf32>
    %237 = arith.mulf %236, %235 : vector<16x128xf32>
    %238 = arith.addf %233, %237 : vector<16x128xf32>
    %cst_149 = arith.constant 0.797884583 : f32
    %239 = vector.broadcast %cst_149 : f32 to vector<16x128xf32>
    %240 = arith.mulf %239, %238 : vector<16x128xf32>
    %241 = math.tanh %240 : vector<16x128xf32>
    %cst_150 = arith.constant 1.000000e+00 : f32
    %242 = vector.broadcast %cst_150 : f32 to vector<16x128xf32>
    %243 = arith.addf %242, %241 : vector<16x128xf32>
    %cst_151 = arith.constant 5.000000e-01 : f32
    %244 = vector.broadcast %cst_151 : f32 to vector<16x128xf32>
    %245 = arith.mulf %244, %243 : vector<16x128xf32>
    %246 = arith.mulf %233, %245 : vector<16x128xf32>
    %c0_152 = arith.constant 0 : index
    %c64_153 = arith.constant 64 : index
    %c0_154 = arith.constant 0 : index
    %247 = vector.load %arg6[%c0_152, %c64_153, %c0_154] : memref<2x192x128xf32, #tpu.memory_space<vmem>>, vector<1x128x64xf32>
    %248 = vector.shape_cast %247 : vector<1x128x64xf32> to vector<128x64xf32>
    %cst_155 = arith.constant dense<0.000000e+00> : vector<16x64xf32>
    %249 = tpu.matmul %246, %248, %cst_155 {dimension_numbers = #tpu.dot_dimension_numbers<[1], [0], [0], [1], [0, 0, 1, 1], [], []>} : vector<16x128xf32>, vector<128x64xf32>, vector<16x64xf32> -> vector<16x64xf32>
    %c13 = arith.constant 13 : index
    %c0_156 = arith.constant 0 : index
    %250 = vector.load %arg7[%c13, %c0_156] : memref<24x128xf32, #tpu.memory_space<vmem>>, vector<1x64xf32>
    %251 = vector.broadcast %250 : vector<1x64xf32> to vector<16x64xf32>
    %252 = arith.addf %249, %251 : vector<16x64xf32>
    %253 = arith.addf %252, %227 : vector<16x64xf32>
    %c14 = arith.constant 14 : index
    %c0_157 = arith.constant 0 : index
    %254 = vector.load %arg7[%c14, %c0_157] : memref<24x128xf32, #tpu.memory_space<vmem>>, vector<1x64xf32>
    %c15 = arith.constant 15 : index
    %c0_158 = arith.constant 0 : index
    %255 = vector.load %arg7[%c15, %c0_158] : memref<24x128xf32, #tpu.memory_space<vmem>>, vector<1x64xf32>
    %cst_159 = arith.constant dense<0.000000e+00> : vector<16xf32>
    %256 = vector.multi_reduction <add>, %253, %cst_159 [1] : vector<16x64xf32> to vector<16xf32>
    %257 = vector.shape_cast %256 : vector<16xf32> to vector<16x1xf32>
    %cst_160 = arith.constant 6.400000e+01 : f32
    %258 = vector.broadcast %cst_160 : f32 to vector<16x1xf32>
    %259 = arith.divf %257, %258 : vector<16x1xf32>
    %260 = vector.broadcast %259 : vector<16x1xf32> to vector<16x64xf32>
    %261 = arith.subf %253, %260 : vector<16x64xf32>
    %262 = arith.mulf %261, %261 : vector<16x64xf32>
    %cst_161 = arith.constant dense<0.000000e+00> : vector<16xf32>
    %263 = vector.multi_reduction <add>, %262, %cst_161 [1] : vector<16x64xf32> to vector<16xf32>
    %264 = vector.shape_cast %263 : vector<16xf32> to vector<16x1xf32>
    %cst_162 = arith.constant 6.400000e+01 : f32
    %265 = vector.broadcast %cst_162 : f32 to vector<16x1xf32>
    %266 = arith.divf %264, %265 : vector<16x1xf32>
    %cst_163 = arith.constant 9.99999996E-13 : f32
    %267 = vector.broadcast %cst_163 : f32 to vector<16x1xf32>
    %268 = arith.addf %266, %267 : vector<16x1xf32>
    %269 = math.rsqrt %268 : vector<16x1xf32>
    %270 = vector.broadcast %269 : vector<16x1xf32> to vector<16x64xf32>
    %271 = arith.mulf %261, %270 : vector<16x64xf32>
    %272 = vector.broadcast %254 : vector<1x64xf32> to vector<16x64xf32>
    %273 = arith.mulf %271, %272 : vector<16x64xf32>
    %274 = vector.broadcast %255 : vector<1x64xf32> to vector<16x64xf32>
    %275 = arith.addf %273, %274 : vector<16x64xf32>
    %cst_164 = arith.constant 0.000000e+00 : f32
    %276 = vector.broadcast %cst_164 : f32 to vector<16x64xf32>
    %c12_165 = arith.constant 12 : index
    %c0_166 = arith.constant 0 : index
    %c0_167 = arith.constant 0 : index
    %277 = vector.load %arg4[%c12_165, %c0_166, %c0_167] : memref<24x72x16xf32, #tpu.memory_space<vmem>>, vector<1x64x16xf32>
    %278 = vector.shape_cast %277 : vector<1x64x16xf32> to vector<64x16xf32>
    %c12_168 = arith.constant 12 : index
    %c64_169 = arith.constant 64 : index
    %c0_170 = arith.constant 0 : index
    %279 = vector.load %arg4[%c12_168, %c64_169, %c0_170] : memref<24x72x16xf32, #tpu.memory_space<vmem>>, vector<1x1x16xf32>
    %280 = vector.shape_cast %279 : vector<1x1x16xf32> to vector<1x16xf32>
    %cst_171 = arith.constant dense<0.000000e+00> : vector<16x16xf32>
    %281 = tpu.matmul %275, %278, %cst_171 {dimension_numbers = #tpu.dot_dimension_numbers<[1], [0], [0], [1], [0, 0, 1, 1], [], []>} : vector<16x64xf32>, vector<64x16xf32>, vector<16x16xf32> -> vector<16x16xf32>
    %282 = vector.broadcast %280 : vector<1x16xf32> to vector<16x16xf32>
    %283 = arith.addf %281, %282 : vector<16x16xf32>
    %c16 = arith.constant 16 : index
    %c0_172 = arith.constant 0 : index
    %c0_173 = arith.constant 0 : index
    %284 = vector.load %arg4[%c16, %c0_172, %c0_173] : memref<24x72x16xf32, #tpu.memory_space<vmem>>, vector<1x64x16xf32>
    %285 = vector.shape_cast %284 : vector<1x64x16xf32> to vector<64x16xf32>
    %c16_174 = arith.constant 16 : index
    %c64_175 = arith.constant 64 : index
    %c0_176 = arith.constant 0 : index
    %286 = vector.load %arg4[%c16_174, %c64_175, %c0_176] : memref<24x72x16xf32, #tpu.memory_space<vmem>>, vector<1x1x16xf32>
    %287 = vector.shape_cast %286 : vector<1x1x16xf32> to vector<1x16xf32>
    %cst_177 = arith.constant dense<0.000000e+00> : vector<16x16xf32>
    %288 = tpu.matmul %275, %285, %cst_177 {dimension_numbers = #tpu.dot_dimension_numbers<[1], [0], [0], [1], [0, 0, 1, 1], [], []>} : vector<16x64xf32>, vector<64x16xf32>, vector<16x16xf32> -> vector<16x16xf32>
    %289 = vector.broadcast %287 : vector<1x16xf32> to vector<16x16xf32>
    %290 = arith.addf %288, %289 : vector<16x16xf32>
    %c20 = arith.constant 20 : index
    %c0_178 = arith.constant 0 : index
    %c0_179 = arith.constant 0 : index
    %291 = vector.load %arg4[%c20, %c0_178, %c0_179] : memref<24x72x16xf32, #tpu.memory_space<vmem>>, vector<1x64x16xf32>
    %292 = vector.shape_cast %291 : vector<1x64x16xf32> to vector<64x16xf32>
    %c20_180 = arith.constant 20 : index
    %c64_181 = arith.constant 64 : index
    %c0_182 = arith.constant 0 : index
    %293 = vector.load %arg4[%c20_180, %c64_181, %c0_182] : memref<24x72x16xf32, #tpu.memory_space<vmem>>, vector<1x1x16xf32>
    %294 = vector.shape_cast %293 : vector<1x1x16xf32> to vector<1x16xf32>
    %cst_183 = arith.constant dense<0.000000e+00> : vector<16x16xf32>
    %295 = tpu.matmul %275, %292, %cst_183 {dimension_numbers = #tpu.dot_dimension_numbers<[1], [0], [0], [1], [0, 0, 1, 1], [], []>} : vector<16x64xf32>, vector<64x16xf32>, vector<16x16xf32> -> vector<16x16xf32>
    %296 = vector.broadcast %294 : vector<1x16xf32> to vector<16x16xf32>
    %297 = arith.addf %295, %296 : vector<16x16xf32>
    %cst_184 = arith.constant dense<0.000000e+00> : vector<16x16xf32>
    %298 = tpu.matmul %283, %290, %cst_184 {dimension_numbers = #tpu.dot_dimension_numbers<[1], [1], [0], [0], [0, 0, 1, 0], [], []>} : vector<16x16xf32>, vector<16x16xf32>, vector<16x16xf32> -> vector<16x16xf32>
    %cst_185 = arith.constant 2.500000e-01 : f32
    %299 = vector.broadcast %cst_185 : f32 to vector<16x16xf32>
    %300 = arith.mulf %298, %299 : vector<16x16xf32>
    %301 = arith.addf %300, %44 : vector<16x16xf32>
    %cst_186 = arith.constant dense<0xFF800000> : vector<16xf32>
    %302 = vector.multi_reduction <maximumf>, %301, %cst_186 [1] : vector<16x16xf32> to vector<16xf32>
    %303 = vector.shape_cast %302 : vector<16xf32> to vector<16x1xf32>
    %304 = vector.broadcast %303 : vector<16x1xf32> to vector<16x16xf32>
    %305 = arith.subf %301, %304 : vector<16x16xf32>
    %306 = math.exp %305 : vector<16x16xf32>
    %cst_187 = arith.constant dense<0.000000e+00> : vector<16xf32>
    %307 = vector.multi_reduction <add>, %306, %cst_187 [1] : vector<16x16xf32> to vector<16xf32>
    %308 = vector.shape_cast %307 : vector<16xf32> to vector<16x1xf32>
    %309 = vector.broadcast %308 : vector<16x1xf32> to vector<16x16xf32>
    %310 = arith.divf %306, %309 : vector<16x16xf32>
    %cst_188 = arith.constant dense<0.000000e+00> : vector<16x16xf32>
    %311 = tpu.matmul %310, %297, %cst_188 {dimension_numbers = #tpu.dot_dimension_numbers<[1], [0], [0], [1], [0, 0, 1, 1], [], []>} : vector<16x16xf32>, vector<16x16xf32>, vector<16x16xf32> -> vector<16x16xf32>
    %c4_189 = arith.constant 4 : index
    %c0_190 = arith.constant 0 : index
    %c0_191 = arith.constant 0 : index
    %312 = vector.load %arg5[%c4_189, %c0_190, %c0_191] : memref<8x16x64xf32, #tpu.memory_space<vmem>>, vector<1x16x64xf32>
    %313 = vector.shape_cast %312 : vector<1x16x64xf32> to vector<16x64xf32>
    %cst_192 = arith.constant dense<0.000000e+00> : vector<16x64xf32>
    %314 = tpu.matmul %311, %313, %cst_192 {dimension_numbers = #tpu.dot_dimension_numbers<[1], [0], [0], [1], [0, 0, 1, 1], [], []>} : vector<16x16xf32>, vector<16x64xf32>, vector<16x64xf32> -> vector<16x64xf32>
    %315 = arith.addf %276, %314 : vector<16x64xf32>
    %c13_193 = arith.constant 13 : index
    %c0_194 = arith.constant 0 : index
    %c0_195 = arith.constant 0 : index
    %316 = vector.load %arg4[%c13_193, %c0_194, %c0_195] : memref<24x72x16xf32, #tpu.memory_space<vmem>>, vector<1x64x16xf32>
    %317 = vector.shape_cast %316 : vector<1x64x16xf32> to vector<64x16xf32>
    %c13_196 = arith.constant 13 : index
    %c64_197 = arith.constant 64 : index
    %c0_198 = arith.constant 0 : index
    %318 = vector.load %arg4[%c13_196, %c64_197, %c0_198] : memref<24x72x16xf32, #tpu.memory_space<vmem>>, vector<1x1x16xf32>
    %319 = vector.shape_cast %318 : vector<1x1x16xf32> to vector<1x16xf32>
    %cst_199 = arith.constant dense<0.000000e+00> : vector<16x16xf32>
    %320 = tpu.matmul %275, %317, %cst_199 {dimension_numbers = #tpu.dot_dimension_numbers<[1], [0], [0], [1], [0, 0, 1, 1], [], []>} : vector<16x64xf32>, vector<64x16xf32>, vector<16x16xf32> -> vector<16x16xf32>
    %321 = vector.broadcast %319 : vector<1x16xf32> to vector<16x16xf32>
    %322 = arith.addf %320, %321 : vector<16x16xf32>
    %c17 = arith.constant 17 : index
    %c0_200 = arith.constant 0 : index
    %c0_201 = arith.constant 0 : index
    %323 = vector.load %arg4[%c17, %c0_200, %c0_201] : memref<24x72x16xf32, #tpu.memory_space<vmem>>, vector<1x64x16xf32>
    %324 = vector.shape_cast %323 : vector<1x64x16xf32> to vector<64x16xf32>
    %c17_202 = arith.constant 17 : index
    %c64_203 = arith.constant 64 : index
    %c0_204 = arith.constant 0 : index
    %325 = vector.load %arg4[%c17_202, %c64_203, %c0_204] : memref<24x72x16xf32, #tpu.memory_space<vmem>>, vector<1x1x16xf32>
    %326 = vector.shape_cast %325 : vector<1x1x16xf32> to vector<1x16xf32>
    %cst_205 = arith.constant dense<0.000000e+00> : vector<16x16xf32>
    %327 = tpu.matmul %275, %324, %cst_205 {dimension_numbers = #tpu.dot_dimension_numbers<[1], [0], [0], [1], [0, 0, 1, 1], [], []>} : vector<16x64xf32>, vector<64x16xf32>, vector<16x16xf32> -> vector<16x16xf32>
    %328 = vector.broadcast %326 : vector<1x16xf32> to vector<16x16xf32>
    %329 = arith.addf %327, %328 : vector<16x16xf32>
    %c21 = arith.constant 21 : index
    %c0_206 = arith.constant 0 : index
    %c0_207 = arith.constant 0 : index
    %330 = vector.load %arg4[%c21, %c0_206, %c0_207] : memref<24x72x16xf32, #tpu.memory_space<vmem>>, vector<1x64x16xf32>
    %331 = vector.shape_cast %330 : vector<1x64x16xf32> to vector<64x16xf32>
    %c21_208 = arith.constant 21 : index
    %c64_209 = arith.constant 64 : index
    %c0_210 = arith.constant 0 : index
    %332 = vector.load %arg4[%c21_208, %c64_209, %c0_210] : memref<24x72x16xf32, #tpu.memory_space<vmem>>, vector<1x1x16xf32>
    %333 = vector.shape_cast %332 : vector<1x1x16xf32> to vector<1x16xf32>
    %cst_211 = arith.constant dense<0.000000e+00> : vector<16x16xf32>
    %334 = tpu.matmul %275, %331, %cst_211 {dimension_numbers = #tpu.dot_dimension_numbers<[1], [0], [0], [1], [0, 0, 1, 1], [], []>} : vector<16x64xf32>, vector<64x16xf32>, vector<16x16xf32> -> vector<16x16xf32>
    %335 = vector.broadcast %333 : vector<1x16xf32> to vector<16x16xf32>
    %336 = arith.addf %334, %335 : vector<16x16xf32>
    %cst_212 = arith.constant dense<0.000000e+00> : vector<16x16xf32>
    %337 = tpu.matmul %322, %329, %cst_212 {dimension_numbers = #tpu.dot_dimension_numbers<[1], [1], [0], [0], [0, 0, 1, 0], [], []>} : vector<16x16xf32>, vector<16x16xf32>, vector<16x16xf32> -> vector<16x16xf32>
    %cst_213 = arith.constant 2.500000e-01 : f32
    %338 = vector.broadcast %cst_213 : f32 to vector<16x16xf32>
    %339 = arith.mulf %337, %338 : vector<16x16xf32>
    %340 = arith.addf %339, %44 : vector<16x16xf32>
    %cst_214 = arith.constant dense<0xFF800000> : vector<16xf32>
    %341 = vector.multi_reduction <maximumf>, %340, %cst_214 [1] : vector<16x16xf32> to vector<16xf32>
    %342 = vector.shape_cast %341 : vector<16xf32> to vector<16x1xf32>
    %343 = vector.broadcast %342 : vector<16x1xf32> to vector<16x16xf32>
    %344 = arith.subf %340, %343 : vector<16x16xf32>
    %345 = math.exp %344 : vector<16x16xf32>
    %cst_215 = arith.constant dense<0.000000e+00> : vector<16xf32>
    %346 = vector.multi_reduction <add>, %345, %cst_215 [1] : vector<16x16xf32> to vector<16xf32>
    %347 = vector.shape_cast %346 : vector<16xf32> to vector<16x1xf32>
    %348 = vector.broadcast %347 : vector<16x1xf32> to vector<16x16xf32>
    %349 = arith.divf %345, %348 : vector<16x16xf32>
    %cst_216 = arith.constant dense<0.000000e+00> : vector<16x16xf32>
    %350 = tpu.matmul %349, %336, %cst_216 {dimension_numbers = #tpu.dot_dimension_numbers<[1], [0], [0], [1], [0, 0, 1, 1], [], []>} : vector<16x16xf32>, vector<16x16xf32>, vector<16x16xf32> -> vector<16x16xf32>
    %c5_217 = arith.constant 5 : index
    %c0_218 = arith.constant 0 : index
    %c0_219 = arith.constant 0 : index
    %351 = vector.load %arg5[%c5_217, %c0_218, %c0_219] : memref<8x16x64xf32, #tpu.memory_space<vmem>>, vector<1x16x64xf32>
    %352 = vector.shape_cast %351 : vector<1x16x64xf32> to vector<16x64xf32>
    %cst_220 = arith.constant dense<0.000000e+00> : vector<16x64xf32>
    %353 = tpu.matmul %350, %352, %cst_220 {dimension_numbers = #tpu.dot_dimension_numbers<[1], [0], [0], [1], [0, 0, 1, 1], [], []>} : vector<16x16xf32>, vector<16x64xf32>, vector<16x64xf32> -> vector<16x64xf32>
    %354 = arith.addf %315, %353 : vector<16x64xf32>
    %c14_221 = arith.constant 14 : index
    %c0_222 = arith.constant 0 : index
    %c0_223 = arith.constant 0 : index
    %355 = vector.load %arg4[%c14_221, %c0_222, %c0_223] : memref<24x72x16xf32, #tpu.memory_space<vmem>>, vector<1x64x16xf32>
    %356 = vector.shape_cast %355 : vector<1x64x16xf32> to vector<64x16xf32>
    %c14_224 = arith.constant 14 : index
    %c64_225 = arith.constant 64 : index
    %c0_226 = arith.constant 0 : index
    %357 = vector.load %arg4[%c14_224, %c64_225, %c0_226] : memref<24x72x16xf32, #tpu.memory_space<vmem>>, vector<1x1x16xf32>
    %358 = vector.shape_cast %357 : vector<1x1x16xf32> to vector<1x16xf32>
    %cst_227 = arith.constant dense<0.000000e+00> : vector<16x16xf32>
    %359 = tpu.matmul %275, %356, %cst_227 {dimension_numbers = #tpu.dot_dimension_numbers<[1], [0], [0], [1], [0, 0, 1, 1], [], []>} : vector<16x64xf32>, vector<64x16xf32>, vector<16x16xf32> -> vector<16x16xf32>
    %360 = vector.broadcast %358 : vector<1x16xf32> to vector<16x16xf32>
    %361 = arith.addf %359, %360 : vector<16x16xf32>
    %c18 = arith.constant 18 : index
    %c0_228 = arith.constant 0 : index
    %c0_229 = arith.constant 0 : index
    %362 = vector.load %arg4[%c18, %c0_228, %c0_229] : memref<24x72x16xf32, #tpu.memory_space<vmem>>, vector<1x64x16xf32>
    %363 = vector.shape_cast %362 : vector<1x64x16xf32> to vector<64x16xf32>
    %c18_230 = arith.constant 18 : index
    %c64_231 = arith.constant 64 : index
    %c0_232 = arith.constant 0 : index
    %364 = vector.load %arg4[%c18_230, %c64_231, %c0_232] : memref<24x72x16xf32, #tpu.memory_space<vmem>>, vector<1x1x16xf32>
    %365 = vector.shape_cast %364 : vector<1x1x16xf32> to vector<1x16xf32>
    %cst_233 = arith.constant dense<0.000000e+00> : vector<16x16xf32>
    %366 = tpu.matmul %275, %363, %cst_233 {dimension_numbers = #tpu.dot_dimension_numbers<[1], [0], [0], [1], [0, 0, 1, 1], [], []>} : vector<16x64xf32>, vector<64x16xf32>, vector<16x16xf32> -> vector<16x16xf32>
    %367 = vector.broadcast %365 : vector<1x16xf32> to vector<16x16xf32>
    %368 = arith.addf %366, %367 : vector<16x16xf32>
    %c22 = arith.constant 22 : index
    %c0_234 = arith.constant 0 : index
    %c0_235 = arith.constant 0 : index
    %369 = vector.load %arg4[%c22, %c0_234, %c0_235] : memref<24x72x16xf32, #tpu.memory_space<vmem>>, vector<1x64x16xf32>
    %370 = vector.shape_cast %369 : vector<1x64x16xf32> to vector<64x16xf32>
    %c22_236 = arith.constant 22 : index
    %c64_237 = arith.constant 64 : index
    %c0_238 = arith.constant 0 : index
    %371 = vector.load %arg4[%c22_236, %c64_237, %c0_238] : memref<24x72x16xf32, #tpu.memory_space<vmem>>, vector<1x1x16xf32>
    %372 = vector.shape_cast %371 : vector<1x1x16xf32> to vector<1x16xf32>
    %cst_239 = arith.constant dense<0.000000e+00> : vector<16x16xf32>
    %373 = tpu.matmul %275, %370, %cst_239 {dimension_numbers = #tpu.dot_dimension_numbers<[1], [0], [0], [1], [0, 0, 1, 1], [], []>} : vector<16x64xf32>, vector<64x16xf32>, vector<16x16xf32> -> vector<16x16xf32>
    %374 = vector.broadcast %372 : vector<1x16xf32> to vector<16x16xf32>
    %375 = arith.addf %373, %374 : vector<16x16xf32>
    %cst_240 = arith.constant dense<0.000000e+00> : vector<16x16xf32>
    %376 = tpu.matmul %361, %368, %cst_240 {dimension_numbers = #tpu.dot_dimension_numbers<[1], [1], [0], [0], [0, 0, 1, 0], [], []>} : vector<16x16xf32>, vector<16x16xf32>, vector<16x16xf32> -> vector<16x16xf32>
    %cst_241 = arith.constant 2.500000e-01 : f32
    %377 = vector.broadcast %cst_241 : f32 to vector<16x16xf32>
    %378 = arith.mulf %376, %377 : vector<16x16xf32>
    %379 = arith.addf %378, %44 : vector<16x16xf32>
    %cst_242 = arith.constant dense<0xFF800000> : vector<16xf32>
    %380 = vector.multi_reduction <maximumf>, %379, %cst_242 [1] : vector<16x16xf32> to vector<16xf32>
    %381 = vector.shape_cast %380 : vector<16xf32> to vector<16x1xf32>
    %382 = vector.broadcast %381 : vector<16x1xf32> to vector<16x16xf32>
    %383 = arith.subf %379, %382 : vector<16x16xf32>
    %384 = math.exp %383 : vector<16x16xf32>
    %cst_243 = arith.constant dense<0.000000e+00> : vector<16xf32>
    %385 = vector.multi_reduction <add>, %384, %cst_243 [1] : vector<16x16xf32> to vector<16xf32>
    %386 = vector.shape_cast %385 : vector<16xf32> to vector<16x1xf32>
    %387 = vector.broadcast %386 : vector<16x1xf32> to vector<16x16xf32>
    %388 = arith.divf %384, %387 : vector<16x16xf32>
    %cst_244 = arith.constant dense<0.000000e+00> : vector<16x16xf32>
    %389 = tpu.matmul %388, %375, %cst_244 {dimension_numbers = #tpu.dot_dimension_numbers<[1], [0], [0], [1], [0, 0, 1, 1], [], []>} : vector<16x16xf32>, vector<16x16xf32>, vector<16x16xf32> -> vector<16x16xf32>
    %c6_245 = arith.constant 6 : index
    %c0_246 = arith.constant 0 : index
    %c0_247 = arith.constant 0 : index
    %390 = vector.load %arg5[%c6_245, %c0_246, %c0_247] : memref<8x16x64xf32, #tpu.memory_space<vmem>>, vector<1x16x64xf32>
    %391 = vector.shape_cast %390 : vector<1x16x64xf32> to vector<16x64xf32>
    %cst_248 = arith.constant dense<0.000000e+00> : vector<16x64xf32>
    %392 = tpu.matmul %389, %391, %cst_248 {dimension_numbers = #tpu.dot_dimension_numbers<[1], [0], [0], [1], [0, 0, 1, 1], [], []>} : vector<16x16xf32>, vector<16x64xf32>, vector<16x64xf32> -> vector<16x64xf32>
    %393 = arith.addf %354, %392 : vector<16x64xf32>
    %c15_249 = arith.constant 15 : index
    %c0_250 = arith.constant 0 : index
    %c0_251 = arith.constant 0 : index
    %394 = vector.load %arg4[%c15_249, %c0_250, %c0_251] : memref<24x72x16xf32, #tpu.memory_space<vmem>>, vector<1x64x16xf32>
    %395 = vector.shape_cast %394 : vector<1x64x16xf32> to vector<64x16xf32>
    %c15_252 = arith.constant 15 : index
    %c64_253 = arith.constant 64 : index
    %c0_254 = arith.constant 0 : index
    %396 = vector.load %arg4[%c15_252, %c64_253, %c0_254] : memref<24x72x16xf32, #tpu.memory_space<vmem>>, vector<1x1x16xf32>
    %397 = vector.shape_cast %396 : vector<1x1x16xf32> to vector<1x16xf32>
    %cst_255 = arith.constant dense<0.000000e+00> : vector<16x16xf32>
    %398 = tpu.matmul %275, %395, %cst_255 {dimension_numbers = #tpu.dot_dimension_numbers<[1], [0], [0], [1], [0, 0, 1, 1], [], []>} : vector<16x64xf32>, vector<64x16xf32>, vector<16x16xf32> -> vector<16x16xf32>
    %399 = vector.broadcast %397 : vector<1x16xf32> to vector<16x16xf32>
    %400 = arith.addf %398, %399 : vector<16x16xf32>
    %c19 = arith.constant 19 : index
    %c0_256 = arith.constant 0 : index
    %c0_257 = arith.constant 0 : index
    %401 = vector.load %arg4[%c19, %c0_256, %c0_257] : memref<24x72x16xf32, #tpu.memory_space<vmem>>, vector<1x64x16xf32>
    %402 = vector.shape_cast %401 : vector<1x64x16xf32> to vector<64x16xf32>
    %c19_258 = arith.constant 19 : index
    %c64_259 = arith.constant 64 : index
    %c0_260 = arith.constant 0 : index
    %403 = vector.load %arg4[%c19_258, %c64_259, %c0_260] : memref<24x72x16xf32, #tpu.memory_space<vmem>>, vector<1x1x16xf32>
    %404 = vector.shape_cast %403 : vector<1x1x16xf32> to vector<1x16xf32>
    %cst_261 = arith.constant dense<0.000000e+00> : vector<16x16xf32>
    %405 = tpu.matmul %275, %402, %cst_261 {dimension_numbers = #tpu.dot_dimension_numbers<[1], [0], [0], [1], [0, 0, 1, 1], [], []>} : vector<16x64xf32>, vector<64x16xf32>, vector<16x16xf32> -> vector<16x16xf32>
    %406 = vector.broadcast %404 : vector<1x16xf32> to vector<16x16xf32>
    %407 = arith.addf %405, %406 : vector<16x16xf32>
    %c23 = arith.constant 23 : index
    %c0_262 = arith.constant 0 : index
    %c0_263 = arith.constant 0 : index
    %408 = vector.load %arg4[%c23, %c0_262, %c0_263] : memref<24x72x16xf32, #tpu.memory_space<vmem>>, vector<1x64x16xf32>
    %409 = vector.shape_cast %408 : vector<1x64x16xf32> to vector<64x16xf32>
    %c23_264 = arith.constant 23 : index
    %c64_265 = arith.constant 64 : index
    %c0_266 = arith.constant 0 : index
    %410 = vector.load %arg4[%c23_264, %c64_265, %c0_266] : memref<24x72x16xf32, #tpu.memory_space<vmem>>, vector<1x1x16xf32>
    %411 = vector.shape_cast %410 : vector<1x1x16xf32> to vector<1x16xf32>
    %cst_267 = arith.constant dense<0.000000e+00> : vector<16x16xf32>
    %412 = tpu.matmul %275, %409, %cst_267 {dimension_numbers = #tpu.dot_dimension_numbers<[1], [0], [0], [1], [0, 0, 1, 1], [], []>} : vector<16x64xf32>, vector<64x16xf32>, vector<16x16xf32> -> vector<16x16xf32>
    %413 = vector.broadcast %411 : vector<1x16xf32> to vector<16x16xf32>
    %414 = arith.addf %412, %413 : vector<16x16xf32>
    %cst_268 = arith.constant dense<0.000000e+00> : vector<16x16xf32>
    %415 = tpu.matmul %400, %407, %cst_268 {dimension_numbers = #tpu.dot_dimension_numbers<[1], [1], [0], [0], [0, 0, 1, 0], [], []>} : vector<16x16xf32>, vector<16x16xf32>, vector<16x16xf32> -> vector<16x16xf32>
    %cst_269 = arith.constant 2.500000e-01 : f32
    %416 = vector.broadcast %cst_269 : f32 to vector<16x16xf32>
    %417 = arith.mulf %415, %416 : vector<16x16xf32>
    %418 = arith.addf %417, %44 : vector<16x16xf32>
    %cst_270 = arith.constant dense<0xFF800000> : vector<16xf32>
    %419 = vector.multi_reduction <maximumf>, %418, %cst_270 [1] : vector<16x16xf32> to vector<16xf32>
    %420 = vector.shape_cast %419 : vector<16xf32> to vector<16x1xf32>
    %421 = vector.broadcast %420 : vector<16x1xf32> to vector<16x16xf32>
    %422 = arith.subf %418, %421 : vector<16x16xf32>
    %423 = math.exp %422 : vector<16x16xf32>
    %cst_271 = arith.constant dense<0.000000e+00> : vector<16xf32>
    %424 = vector.multi_reduction <add>, %423, %cst_271 [1] : vector<16x16xf32> to vector<16xf32>
    %425 = vector.shape_cast %424 : vector<16xf32> to vector<16x1xf32>
    %426 = vector.broadcast %425 : vector<16x1xf32> to vector<16x16xf32>
    %427 = arith.divf %423, %426 : vector<16x16xf32>
    %cst_272 = arith.constant dense<0.000000e+00> : vector<16x16xf32>
    %428 = tpu.matmul %427, %414, %cst_272 {dimension_numbers = #tpu.dot_dimension_numbers<[1], [0], [0], [1], [0, 0, 1, 1], [], []>} : vector<16x16xf32>, vector<16x16xf32>, vector<16x16xf32> -> vector<16x16xf32>
    %c7_273 = arith.constant 7 : index
    %c0_274 = arith.constant 0 : index
    %c0_275 = arith.constant 0 : index
    %429 = vector.load %arg5[%c7_273, %c0_274, %c0_275] : memref<8x16x64xf32, #tpu.memory_space<vmem>>, vector<1x16x64xf32>
    %430 = vector.shape_cast %429 : vector<1x16x64xf32> to vector<16x64xf32>
    %cst_276 = arith.constant dense<0.000000e+00> : vector<16x64xf32>
    %431 = tpu.matmul %428, %430, %cst_276 {dimension_numbers = #tpu.dot_dimension_numbers<[1], [0], [0], [1], [0, 0, 1, 1], [], []>} : vector<16x16xf32>, vector<16x64xf32>, vector<16x64xf32> -> vector<16x64xf32>
    %432 = arith.addf %393, %431 : vector<16x64xf32>
    %c16_277 = arith.constant 16 : index
    %c0_278 = arith.constant 0 : index
    %433 = vector.load %arg7[%c16_277, %c0_278] : memref<24x128xf32, #tpu.memory_space<vmem>>, vector<1x64xf32>
    %434 = vector.broadcast %433 : vector<1x64xf32> to vector<16x64xf32>
    %435 = arith.addf %432, %434 : vector<16x64xf32>
    %436 = arith.addf %435, %275 : vector<16x64xf32>
    %c17_279 = arith.constant 17 : index
    %c0_280 = arith.constant 0 : index
    %437 = vector.load %arg7[%c17_279, %c0_280] : memref<24x128xf32, #tpu.memory_space<vmem>>, vector<1x64xf32>
    %c18_281 = arith.constant 18 : index
    %c0_282 = arith.constant 0 : index
    %438 = vector.load %arg7[%c18_281, %c0_282] : memref<24x128xf32, #tpu.memory_space<vmem>>, vector<1x64xf32>
    %cst_283 = arith.constant dense<0.000000e+00> : vector<16xf32>
    %439 = vector.multi_reduction <add>, %436, %cst_283 [1] : vector<16x64xf32> to vector<16xf32>
    %440 = vector.shape_cast %439 : vector<16xf32> to vector<16x1xf32>
    %cst_284 = arith.constant 6.400000e+01 : f32
    %441 = vector.broadcast %cst_284 : f32 to vector<16x1xf32>
    %442 = arith.divf %440, %441 : vector<16x1xf32>
    %443 = vector.broadcast %442 : vector<16x1xf32> to vector<16x64xf32>
    %444 = arith.subf %436, %443 : vector<16x64xf32>
    %445 = arith.mulf %444, %444 : vector<16x64xf32>
    %cst_285 = arith.constant dense<0.000000e+00> : vector<16xf32>
    %446 = vector.multi_reduction <add>, %445, %cst_285 [1] : vector<16x64xf32> to vector<16xf32>
    %447 = vector.shape_cast %446 : vector<16xf32> to vector<16x1xf32>
    %cst_286 = arith.constant 6.400000e+01 : f32
    %448 = vector.broadcast %cst_286 : f32 to vector<16x1xf32>
    %449 = arith.divf %447, %448 : vector<16x1xf32>
    %cst_287 = arith.constant 9.99999996E-13 : f32
    %450 = vector.broadcast %cst_287 : f32 to vector<16x1xf32>
    %451 = arith.addf %449, %450 : vector<16x1xf32>
    %452 = math.rsqrt %451 : vector<16x1xf32>
    %453 = vector.broadcast %452 : vector<16x1xf32> to vector<16x64xf32>
    %454 = arith.mulf %444, %453 : vector<16x64xf32>
    %455 = vector.broadcast %437 : vector<1x64xf32> to vector<16x64xf32>
    %456 = arith.mulf %454, %455 : vector<16x64xf32>
    %457 = vector.broadcast %438 : vector<1x64xf32> to vector<16x64xf32>
    %458 = arith.addf %456, %457 : vector<16x64xf32>
    %c1_288 = arith.constant 1 : index
    %c0_289 = arith.constant 0 : index
    %c0_290 = arith.constant 0 : index
    %459 = vector.load %arg6[%c1_288, %c0_289, %c0_290] : memref<2x192x128xf32, #tpu.memory_space<vmem>>, vector<1x64x128xf32>
    %460 = vector.shape_cast %459 : vector<1x64x128xf32> to vector<64x128xf32>
    %cst_291 = arith.constant dense<0.000000e+00> : vector<16x128xf32>
    %461 = tpu.matmul %458, %460, %cst_291 {dimension_numbers = #tpu.dot_dimension_numbers<[1], [0], [0], [1], [0, 0, 1, 1], [], []>} : vector<16x64xf32>, vector<64x128xf32>, vector<16x128xf32> -> vector<16x128xf32>
    %c19_292 = arith.constant 19 : index
    %c0_293 = arith.constant 0 : index
    %462 = vector.load %arg7[%c19_292, %c0_293] : memref<24x128xf32, #tpu.memory_space<vmem>>, vector<1x128xf32>
    %463 = vector.broadcast %462 : vector<1x128xf32> to vector<16x128xf32>
    %464 = arith.addf %461, %463 : vector<16x128xf32>
    %465 = arith.mulf %464, %464 : vector<16x128xf32>
    %466 = arith.mulf %464, %465 : vector<16x128xf32>
    %cst_294 = arith.constant 4.471500e-02 : f32
    %467 = vector.broadcast %cst_294 : f32 to vector<16x128xf32>
    %468 = arith.mulf %467, %466 : vector<16x128xf32>
    %469 = arith.addf %464, %468 : vector<16x128xf32>
    %cst_295 = arith.constant 0.797884583 : f32
    %470 = vector.broadcast %cst_295 : f32 to vector<16x128xf32>
    %471 = arith.mulf %470, %469 : vector<16x128xf32>
    %472 = math.tanh %471 : vector<16x128xf32>
    %cst_296 = arith.constant 1.000000e+00 : f32
    %473 = vector.broadcast %cst_296 : f32 to vector<16x128xf32>
    %474 = arith.addf %473, %472 : vector<16x128xf32>
    %cst_297 = arith.constant 5.000000e-01 : f32
    %475 = vector.broadcast %cst_297 : f32 to vector<16x128xf32>
    %476 = arith.mulf %475, %474 : vector<16x128xf32>
    %477 = arith.mulf %464, %476 : vector<16x128xf32>
    %c1_298 = arith.constant 1 : index
    %c64_299 = arith.constant 64 : index
    %c0_300 = arith.constant 0 : index
    %478 = vector.load %arg6[%c1_298, %c64_299, %c0_300] : memref<2x192x128xf32, #tpu.memory_space<vmem>>, vector<1x128x64xf32>
    %479 = vector.shape_cast %478 : vector<1x128x64xf32> to vector<128x64xf32>
    %cst_301 = arith.constant dense<0.000000e+00> : vector<16x64xf32>
    %480 = tpu.matmul %477, %479, %cst_301 {dimension_numbers = #tpu.dot_dimension_numbers<[1], [0], [0], [1], [0, 0, 1, 1], [], []>} : vector<16x128xf32>, vector<128x64xf32>, vector<16x64xf32> -> vector<16x64xf32>
    %c20_302 = arith.constant 20 : index
    %c0_303 = arith.constant 0 : index
    %481 = vector.load %arg7[%c20_302, %c0_303] : memref<24x128xf32, #tpu.memory_space<vmem>>, vector<1x64xf32>
    %482 = vector.broadcast %481 : vector<1x64xf32> to vector<16x64xf32>
    %483 = arith.addf %480, %482 : vector<16x64xf32>
    %484 = arith.addf %483, %458 : vector<16x64xf32>
    %c21_304 = arith.constant 21 : index
    %c0_305 = arith.constant 0 : index
    %485 = vector.load %arg7[%c21_304, %c0_305] : memref<24x128xf32, #tpu.memory_space<vmem>>, vector<1x64xf32>
    %c22_306 = arith.constant 22 : index
    %c0_307 = arith.constant 0 : index
    %486 = vector.load %arg7[%c22_306, %c0_307] : memref<24x128xf32, #tpu.memory_space<vmem>>, vector<1x64xf32>
    %cst_308 = arith.constant dense<0.000000e+00> : vector<16xf32>
    %487 = vector.multi_reduction <add>, %484, %cst_308 [1] : vector<16x64xf32> to vector<16xf32>
    %488 = vector.shape_cast %487 : vector<16xf32> to vector<16x1xf32>
    %cst_309 = arith.constant 6.400000e+01 : f32
    %489 = vector.broadcast %cst_309 : f32 to vector<16x1xf32>
    %490 = arith.divf %488, %489 : vector<16x1xf32>
    %491 = vector.broadcast %490 : vector<16x1xf32> to vector<16x64xf32>
    %492 = arith.subf %484, %491 : vector<16x64xf32>
    %493 = arith.mulf %492, %492 : vector<16x64xf32>
    %cst_310 = arith.constant dense<0.000000e+00> : vector<16xf32>
    %494 = vector.multi_reduction <add>, %493, %cst_310 [1] : vector<16x64xf32> to vector<16xf32>
    %495 = vector.shape_cast %494 : vector<16xf32> to vector<16x1xf32>
    %cst_311 = arith.constant 6.400000e+01 : f32
    %496 = vector.broadcast %cst_311 : f32 to vector<16x1xf32>
    %497 = arith.divf %495, %496 : vector<16x1xf32>
    %cst_312 = arith.constant 9.99999996E-13 : f32
    %498 = vector.broadcast %cst_312 : f32 to vector<16x1xf32>
    %499 = arith.addf %497, %498 : vector<16x1xf32>
    %500 = math.rsqrt %499 : vector<16x1xf32>
    %501 = vector.broadcast %500 : vector<16x1xf32> to vector<16x64xf32>
    %502 = arith.mulf %492, %501 : vector<16x64xf32>
    %503 = vector.broadcast %485 : vector<1x64xf32> to vector<16x64xf32>
    %504 = arith.mulf %502, %503 : vector<16x64xf32>
    %505 = vector.broadcast %486 : vector<1x64xf32> to vector<16x64xf32>
    %506 = arith.addf %504, %505 : vector<16x64xf32>
    %c0_313 = arith.constant 0 : index
    %c128_314 = arith.constant 128 : index
    %507 = vector.load %arg8[%c0_313, %c128_314] : memref<16x194xf32, #tpu.memory_space<vmem>>, vector<16x64xf32>
    tpu.vector_store %arg8[%c0_313, %c128_314], %506 {strides = array<i32>} : memref<16x194xf32, #tpu.memory_space<vmem>>, vector<16x64xf32>,
    %c160 = arith.constant 160 : index
    %c0_315 = arith.constant 0 : index
    %508 = vector.load %arg2[%c160, %c0_315] : memref<224x32xf32, #tpu.memory_space<vmem>>, vector<64x32xf32>
    %cst_316 = arith.constant dense<0.000000e+00> : vector<16x32xf32>
    %509 = tpu.matmul %506, %508, %cst_316 {dimension_numbers = #tpu.dot_dimension_numbers<[1], [0], [0], [1], [0, 0, 1, 1], [], []>} : vector<16x64xf32>, vector<64x32xf32>, vector<16x32xf32> -> vector<16x32xf32>
    %c3_317 = arith.constant 3 : index
    %c0_318 = arith.constant 0 : index
    %510 = vector.load %arg7[%c3_317, %c0_318] : memref<24x128xf32, #tpu.memory_space<vmem>>, vector<1x32xf32>
    %511 = vector.broadcast %510 : vector<1x32xf32> to vector<16x32xf32>
    %512 = arith.addf %509, %511 : vector<16x32xf32>
    %513 = arith.mulf %512, %512 : vector<16x32xf32>
    %514 = arith.mulf %512, %513 : vector<16x32xf32>
    %cst_319 = arith.constant 4.471500e-02 : f32
    %515 = vector.broadcast %cst_319 : f32 to vector<16x32xf32>
    %516 = arith.mulf %515, %514 : vector<16x32xf32>
    %517 = arith.addf %512, %516 : vector<16x32xf32>
    %cst_320 = arith.constant 0.797884583 : f32
    %518 = vector.broadcast %cst_320 : f32 to vector<16x32xf32>
    %519 = arith.mulf %518, %517 : vector<16x32xf32>
    %520 = math.tanh %519 : vector<16x32xf32>
    %cst_321 = arith.constant 1.000000e+00 : f32
    %521 = vector.broadcast %cst_321 : f32 to vector<16x32xf32>
    %522 = arith.addf %521, %520 : vector<16x32xf32>
    %cst_322 = arith.constant 5.000000e-01 : f32
    %523 = vector.broadcast %cst_322 : f32 to vector<16x32xf32>
    %524 = arith.mulf %523, %522 : vector<16x32xf32>
    %525 = arith.mulf %512, %524 : vector<16x32xf32>
    %c4_323 = arith.constant 4 : index
    %c0_324 = arith.constant 0 : index
    %526 = vector.load %arg7[%c4_323, %c0_324] : memref<24x128xf32, #tpu.memory_space<vmem>>, vector<1x32xf32>
    %c5_325 = arith.constant 5 : index
    %c0_326 = arith.constant 0 : index
    %527 = vector.load %arg7[%c5_325, %c0_326] : memref<24x128xf32, #tpu.memory_space<vmem>>, vector<1x32xf32>
    %cst_327 = arith.constant dense<0.000000e+00> : vector<16xf32>
    %528 = vector.multi_reduction <add>, %525, %cst_327 [1] : vector<16x32xf32> to vector<16xf32>
    %529 = vector.shape_cast %528 : vector<16xf32> to vector<16x1xf32>
    %cst_328 = arith.constant 3.200000e+01 : f32
    %530 = vector.broadcast %cst_328 : f32 to vector<16x1xf32>
    %531 = arith.divf %529, %530 : vector<16x1xf32>
    %532 = vector.broadcast %531 : vector<16x1xf32> to vector<16x32xf32>
    %533 = arith.subf %525, %532 : vector<16x32xf32>
    %534 = arith.mulf %533, %533 : vector<16x32xf32>
    %cst_329 = arith.constant dense<0.000000e+00> : vector<16xf32>
    %535 = vector.multi_reduction <add>, %534, %cst_329 [1] : vector<16x32xf32> to vector<16xf32>
    %536 = vector.shape_cast %535 : vector<16xf32> to vector<16x1xf32>
    %cst_330 = arith.constant 3.200000e+01 : f32
    %537 = vector.broadcast %cst_330 : f32 to vector<16x1xf32>
    %538 = arith.divf %536, %537 : vector<16x1xf32>
    %cst_331 = arith.constant 9.99999996E-13 : f32
    %539 = vector.broadcast %cst_331 : f32 to vector<16x1xf32>
    %540 = arith.addf %538, %539 : vector<16x1xf32>
    %541 = math.rsqrt %540 : vector<16x1xf32>
    %542 = vector.broadcast %541 : vector<16x1xf32> to vector<16x32xf32>
    %543 = arith.mulf %533, %542 : vector<16x32xf32>
    %544 = vector.broadcast %526 : vector<1x32xf32> to vector<16x32xf32>
    %545 = arith.mulf %543, %544 : vector<16x32xf32>
    %546 = vector.broadcast %527 : vector<1x32xf32> to vector<16x32xf32>
    %547 = arith.addf %545, %546 : vector<16x32xf32>
    %c0_332 = arith.constant 0 : index
    %c128_333 = arith.constant 128 : index
    %548 = vector.load %arg3[%c0_332, %c128_333] : memref<32x256xf32, #tpu.memory_space<vmem>>, vector<32x128xf32>
    %cst_334 = arith.constant dense<0.000000e+00> : vector<16x128xf32>
    %549 = tpu.matmul %547, %548, %cst_334 {dimension_numbers = #tpu.dot_dimension_numbers<[1], [0], [0], [1], [0, 0, 1, 1], [], []>} : vector<16x32xf32>, vector<32x128xf32>, vector<16x128xf32> -> vector<16x128xf32>
    %c6_335 = arith.constant 6 : index
    %c0_336 = arith.constant 0 : index
    %550 = vector.load %arg7[%c6_335, %c0_336] : memref<24x128xf32, #tpu.memory_space<vmem>>, vector<1x128xf32>
    %551 = vector.broadcast %550 : vector<1x128xf32> to vector<16x128xf32>
    %552 = arith.addf %549, %551 : vector<16x128xf32>
    %c0_337 = arith.constant 0 : index
    %c0_338 = arith.constant 0 : index
    %553 = vector.load %arg8[%c0_337, %c0_338] : memref<16x194xf32, #tpu.memory_space<vmem>>, vector<16x128xf32>
    tpu.vector_store %arg8[%c0_337, %c0_338], %552 {strides = array<i32>} : memref<16x194xf32, #tpu.memory_space<vmem>>, vector<16x128xf32>,
    %c7_339 = arith.constant 7 : index
    %c0_340 = arith.constant 0 : index
    %554 = vector.load %arg7[%c7_339, %c0_340] : memref<24x128xf32, #tpu.memory_space<vmem>>, vector<1x32xf32>
    %c7_341 = arith.constant 7 : index
    %c32 = arith.constant 32 : index
    %555 = vector.load %arg7[%c7_341, %c32] : memref<24x128xf32, #tpu.memory_space<vmem>>, vector<1x1xf32>
    %556 = vector.broadcast %554 : vector<1x32xf32> to vector<16x32xf32>
    %557 = arith.mulf %547, %556 : vector<16x32xf32>
    %cst_342 = arith.constant dense<0.000000e+00> : vector<16xf32>
    %558 = vector.multi_reduction <add>, %557, %cst_342 [1] : vector<16x32xf32> to vector<16xf32>
    %559 = vector.shape_cast %558 : vector<16xf32> to vector<16x1xf32>
    %560 = vector.broadcast %555 : vector<1x1xf32> to vector<16x1xf32>
    %561 = arith.addf %559, %560 : vector<16x1xf32>
    %c0_343 = arith.constant 0 : index
    %c192 = arith.constant 192 : index
    %562 = vector.load %arg8[%c0_343, %c192] : memref<16x194xf32, #tpu.memory_space<vmem>>, vector<16x1xf32>
    tpu.vector_store %arg8[%c0_343, %c192], %561 {strides = array<i32>} : memref<16x194xf32, #tpu.memory_space<vmem>>, vector<16x1xf32>,
    %c8_344 = arith.constant 8 : index
    %c0_345 = arith.constant 0 : index
    %563 = vector.load %arg7[%c8_344, %c0_345] : memref<24x128xf32, #tpu.memory_space<vmem>>, vector<1x32xf32>
    %c8_346 = arith.constant 8 : index
    %c32_347 = arith.constant 32 : index
    %564 = vector.load %arg7[%c8_346, %c32_347] : memref<24x128xf32, #tpu.memory_space<vmem>>, vector<1x1xf32>
    %565 = vector.broadcast %563 : vector<1x32xf32> to vector<16x32xf32>
    %566 = arith.mulf %547, %565 : vector<16x32xf32>
    %cst_348 = arith.constant dense<0.000000e+00> : vector<16xf32>
    %567 = vector.multi_reduction <add>, %566, %cst_348 [1] : vector<16x32xf32> to vector<16xf32>
    %568 = vector.shape_cast %567 : vector<16xf32> to vector<16x1xf32>
    %569 = vector.broadcast %564 : vector<1x1xf32> to vector<16x1xf32>
    %570 = arith.addf %568, %569 : vector<16x1xf32>
    %c0_349 = arith.constant 0 : index
    %c193 = arith.constant 193 : index
    %571 = vector.load %arg8[%c0_349, %c193] : memref<16x194xf32, #tpu.memory_space<vmem>>, vector<16x1xf32>
    tpu.vector_store %arg8[%c0_349, %c193], %570 {strides = array<i32>} : memref<16x194xf32, #tpu.memory_space<vmem>>, vector<16x1xf32>,
    return
  }
}

</mosaic_0001>

<llo_original>
// kernel: pinyin_model_forward.1
$region0: #{pinyin_model_forward.1}
  #allocation0 [shape = 'u32[]', space=smem, size = 0x4, offset = 0x4, fixed_abs, tag = 'smem constant byte address 0x4 - core index']
  #allocation1 [shape = 'u32[72,128]{1,0:T(1,128)}', space=vmem, size = 0x9000, scoped, tag = 'internal scratch']
  %s0 = inlined_call_operand.vmem [shape: s32[16,2], index: 0, kind: input, shape index: {}]
  %s1 = inlined_call_operand.vmem [shape: f32[16,16], index: 1, kind: input, shape index: {}]
  %s2 = inlined_call_operand.vmem [shape: f32[224,32], index: 2, kind: input, shape index: {}]
  %s3 = inlined_call_operand.vmem [shape: f32[32,256], index: 3, kind: input, shape index: {}]
  %s4 = inlined_call_operand.vmem [shape: f32[24,72,16], index: 4, kind: input, shape index: {}]
  %s5 = inlined_call_operand.vmem [shape: f32[8,16,64], index: 5, kind: input, shape index: {}]
  %s6 = inlined_call_operand.vmem [shape: f32[2,192,128], index: 6, kind: input, shape index: {}]
  %s7 = inlined_call_operand.vmem [shape: f32[24,128], index: 7, kind: input, shape index: {}]
  %s8 = inlined_call_operand.vmem [shape: f32[16,194], index: 8, kind: output, shape index: {}]
  %s9 = sld [smem:[#allocation0]]
  $region42: #{pinyin_model_forward.1} parent=0
    _
  %s11 = ssub.s32 1, %s9
  %s12 = scalar_select 0, %s11, %s9
  // Predicated region
  $region2: #{pinyin_model_forward.1} parent=0 // pred_check
    _
  $region3: #{pinyin_model_forward.1} parent=0 // pred_check_branch
    %14 = sbr.rel (0) target = $region5
  $region4: #{pinyin_model_forward.1} parent=0 // pred_region
    _
  $region5: #{pinyin_model_forward.1} parent=0 // pred_fallthru
    _
  // Predicated region
  $region6: #{pinyin_model_forward.1} parent=0 // pred_check
    _
  $region7: #{pinyin_model_forward.1} parent=0 // pred_check_branch
    %16 = sbr.rel (0) target = $region9
  $region8: #{pinyin_model_forward.1} parent=0 // pred_region
    _
  $region9: #{pinyin_model_forward.1} parent=0 // pred_fallthru
    _
  // Predicated region
  $region10: #{pinyin_model_forward.1} parent=0 // pred_check
    _
  $region11: #{pinyin_model_forward.1} parent=0 // pred_check_branch
    %18 = sbr.rel (0) target = $region13
  $region12: #{pinyin_model_forward.1} parent=0 // pred_region
    _
  $region13: #{pinyin_model_forward.1} parent=0 // pred_fallthru
    _
  // Predicated region
  $region14: #{pinyin_model_forward.1} parent=0 // pred_check
    _
  $region15: #{pinyin_model_forward.1} parent=0 // pred_check_branch
    %20 = sbr.rel (0) target = $region17
  $region16: #{pinyin_model_forward.1} parent=0 // pred_region
    _
  $region17: #{pinyin_model_forward.1} parent=0 // pred_fallthru
    _
  // Predicated region
  $region18: #{pinyin_model_forward.1} parent=0 // pred_check
    _
  $region19: #{pinyin_model_forward.1} parent=0 // pred_check_branch
    %22 = sbr.rel (0) target = $region21
  $region20: #{pinyin_model_forward.1} parent=0 // pred_region
    _
  $region21: #{pinyin_model_forward.1} parent=0 // pred_fallthru
    _
  // Predicated region
  $region22: #{pinyin_model_forward.1} parent=0 // pred_check
    _
  $region23: #{pinyin_model_forward.1} parent=0 // pred_check_branch
    %24 = sbr.rel (0) target = $region25
  $region24: #{pinyin_model_forward.1} parent=0 // pred_region
    _
  $region25: #{pinyin_model_forward.1} parent=0 // pred_fallthru
    _
  // Predicated region
  $region26: #{pinyin_model_forward.1} parent=0 // pred_check
    _
  $region27: #{pinyin_model_forward.1} parent=0 // pred_check_branch
    %26 = sbr.rel (0) target = $region29
  $region28: #{pinyin_model_forward.1} parent=0 // pred_region
    _
  $region29: #{pinyin_model_forward.1} parent=0 // pred_fallthru
    _
  // Predicated region
  $region30: #{pinyin_model_forward.1} parent=0 // pred_check
    _
  $region31: #{pinyin_model_forward.1} parent=0 // pred_check_branch
    %28 = sbr.rel (0) target = $region33
  $region32: #{pinyin_model_forward.1} parent=0 // pred_region
    _
  $region33: #{pinyin_model_forward.1} parent=0 // pred_fallthru
    _
  %v29 = vld [vmem:[%s0] sm:$0xff]
  %v30 = vld [vmem:[%s0 + $0x8] sm:$0xff]
  %v31 = vlaneseq
  %v32 = vand.u32 %v31, 127
  %33 = vset.pattern.permute.xlu0 0
  %34 = vperm.xlu0 %33, %v29
  %v35 = vpop.permute.xlu0 %34
  %36 = vset.pattern.permute.xlu0 0
  %37 = vperm.xlu0 %36, %v30
  %v38 = vpop.permute.xlu0 %37
  %vm39 = vcmp.eq.s32.totalorder %v35, %v32
  %vm40 = vcmp.eq.s32.totalorder %v38, %v32
  %v41 = vsel %vm39, 1, 0
  %v42 = vsel %vm40, 1, 0
  %v43 = vcvt.s32.f32 %v41
  %v44 = vcvt.s32.f32 %v42
  %45 = vset.pattern.permute.xlu0 1
  %46 = vperm.xlu0 %45, %v29
  %v47 = vpop.permute.xlu0 %46
  %48 = vset.pattern.permute.xlu0 1
  %49 = vperm.xlu0 %48, %v30
  %v50 = vpop.permute.xlu0 %49
  %vm51 = vcmp.eq.s32.totalorder %v47, %v32
  %vm52 = vcmp.eq.s32.totalorder %v50, %v32
  %v53 = vsel %vm51, 1, 0
  %v54 = vsel %vm52, 1, 0
  %v55 = vcvt.s32.f32 %v53
  %v56 = vcvt.s32.f32 %v54
  %v57 = vld [vmem:[%s2] sm:$0xff]
  %v58 = vld [vmem:[%s2 + $0x8] sm:$0xff]
  %v59 = vld [vmem:[%s2 + $0x10] sm:$0xff]
  %v60 = vld [vmem:[%s2 + $0x18] sm:$0xff]
  %v61 = vld [vmem:[%s2 + $0x20] sm:$0xff]
  %v62 = vld [vmem:[%s2 + $0x28] sm:$0xff]
  %v63 = vld [vmem:[%s2 + $0x30] sm:$0xff]
  %v64 = vld [vmem:[%s2 + $0x38] sm:$0xff]
  %v65 = vld [vmem:[%s2 + $0x40] sm:$0xff]
  %v66 = vld [vmem:[%s2 + $0x48] sm:$0xff]
  %v67 = vld [vmem:[%s2 + $0x50] sm:$0xff]
  %v68 = vld [vmem:[%s2 + $0x58] sm:$0xff]
  %v69 = vld [vmem:[%s2 + $0x60] sm:$0xff]
  %v70 = vld [vmem:[%s2 + $0x68] sm:$0xff]
  %v71 = vld [vmem:[%s2 + $0x70] sm:$0xff]
  %v72 = vld [vmem:[%s2 + $0x78] sm:$0xff]
  %v73 = vld [vmem:[%s2 + $0x80] sm:$0xff]
  %v74 = vld [vmem:[%s2 + $0x88] sm:$0xff]
  %v75 = vld [vmem:[%s2 + $0x90] sm:$0xff]
  %v76 = vld [vmem:[%s2 + $0x98] sm:$0xff]
  %vm77 = vcmask 261120
  %v79 = vsel %vm77, %v55, 0
  %v82 = vsel %vm77, %v56, 0
  %84 = vmatpush.msra.mxu0 0.0
  %85 = vmatpush.msra.mxu0 0.0
  %86 = vmatpush.msra.mxu0 0.0
  %87 = vmatpush.msra.mxu0 0.0
  %88 = vmatpush.msra.mxu0 0.0
  %89 = vmatpush.msra.mxu0 0.0
  %90 = vmatpush.msra.mxu0 0.0
  %91 = vmatpush.msra.mxu0 0.0
  %92 = vmatpush.msra.mxu0 0.0
  %93 = vmatpush.msra.mxu0 0.0
  %94 = vmatpush.msra.mxu0 0.0
  %95 = vmatpush.msra.mxu0 0.0
  %96 = vmatpush.msra.mxu0 %v76
  %97 = vmatpush.msra.mxu0 %v75
  %98 = vmatpush.msra.mxu0 %v74
  %99 = vmatpush.msra.mxu0 %v73
  %100 = vmatmul.f32.gmra.mxu0 %v79
  %v101 = vpop.f32.mrf.mxu0
  %v102 = vadd.f32 0.0, %v101
  %103 = vmatmul.f32.gmra.mxu0 %v82
  %v104 = vpop.f32.mrf.mxu0
  %v105 = vadd.f32 0.0, %v104
  %106 = vdwg.mxu0
  %107 = vmatpush.msra.mxu0 %v72
  %108 = vmatpush.msra.mxu0 %v71
  %109 = vmatpush.msra.mxu0 %v70
  %110 = vmatpush.msra.mxu0 %v69
  %111 = vmatpush.msra.mxu0 %v68
  %112 = vmatpush.msra.mxu0 %v67
  %113 = vmatpush.msra.mxu0 %v66
  %114 = vmatpush.msra.mxu0 %v65
  %115 = vmatpush.msra.mxu0 %v64
  %116 = vmatpush.msra.mxu0 %v63
  %117 = vmatpush.msra.mxu0 %v62
  %118 = vmatpush.msra.mxu0 %v61
  %119 = vmatpush.msra.mxu0 %v60
  %120 = vmatpush.msra.mxu0 %v59
  %121 = vmatpush.msra.mxu0 %v58
  %122 = vmatpush.msra.mxu0 %v57
  %123 = vmatmul.f32.gmra.mxu0 %v43
  %v124 = vpop.f32.mrf.mxu0
  %v125 = vadd.f32 %v102, %v124
  %126 = vmatmul.f32.gmra.mxu0 %v44
  %v127 = vpop.f32.mrf.mxu0
  %v128 = vadd.f32 %v105, %v127
  %129 = vdwg.mxu0
  %v130 = vld [vmem:[%s7] sm:$0x1]
  %v131 = vld [vmem:[%s7 + $0x1] sm:$0x1]
  %v132 = vsel %vm77, %v125, 0.0
  %133 = vadd.xlane.f32.xlu0 %v132
  %v134 = vpop.xlane.xlu0 %133
  %v135 = vsel %vm77, %v128, 0.0
  %136 = vadd.xlane.f32.xlu0 %v135
  %v137 = vpop.xlane.xlu0 %136
  %v138 = vrcp.pop 32.0
  %v139 = vmul.f32 32.0, %v138
  %v140 = vsub.f32 1.0, %v139
  %v141 = vmul.f32 %v138, %v140
  %v142 = vadd.f32 %v138, %v141
  %vm143 = vweird.f32 %v138
  %v144 = vsel %vm143, %v138, %v142
  %v145 = vmul.f32 %v134, %v144
  %v146 = vmul.f32 %v137, %v144
  %v147 = vsub.f32 %v125, %v145
  %v148 = vsub.f32 %v128, %v146
  %v149 = vmul.f32 %v147, %v147
  %v150 = vmul.f32 %v148, %v148
  %v151 = vsel %vm77, %v149, 0.0
  %152 = vadd.xlane.f32.xlu0 %v151
  %v153 = vpop.xlane.xlu0 %152
  %v154 = vsel %vm77, %v150, 0.0
  %155 = vadd.xlane.f32.xlu0 %v154
  %v156 = vpop.xlane.xlu0 %155
  %v157 = vmul.f32 %v153, %v144
  %v158 = vmul.f32 %v156, %v144
  %v159 = vadd.f32 %v157, 1e-12
  %v160 = vadd.f32 %v158, 1e-12
  %v161 = vrsqrt.pop %v159
  %v162 = vmul.f32 %v161, %v159
  %v163 = vmul.f32 %v162, %v161
  %v164 = vmul.f32 0.5, %v163
  %v165 = vsub.f32 1.5, %v164
  %v166 = vmul.f32 %v161, %v165
  %vm167 = vweird.f32 %v159
  %vm168 = vweird.f32 %v161
  %vm169 = vmor %vm167, %vm168
  %v170 = vsel %vm169, %v161, %v166
  %v171 = vrsqrt.pop %v160
  %v172 = vmul.f32 %v171, %v160
  %v173 = vmul.f32 %v172, %v171
  %v174 = vmul.f32 0.5, %v173
  %v175 = vsub.f32 1.5, %v174
  %v176 = vmul.f32 %v171, %v175
  %vm177 = vweird.f32 %v160
  %vm178 = vweird.f32 %v171
  %vm179 = vmor %vm177, %vm178
  %v180 = vsel %vm179, %v171, %v176
  %v181 = vmul.f32 %v147, %v170
  %v182 = vmul.f32 %v148, %v180
  %v183 = vperm.slane %v130, 0
  %v184 = vmul.f32 %v181, %v183
  %v185 = vmul.f32 %v182, %v183
  %v186 = vperm.slane %v131, 0
  %v187 = vadd.f32 %v184, %v186
  %v188 = vadd.f32 %v185, %v186
  %v189 = vld [vmem:[%s3] sm:$0xff]
  %v190 = vld [vmem:[%s3 + $0x10] sm:$0xff]
  %v191 = vld [vmem:[%s3 + $0x20] sm:$0xff]
  %v192 = vld [vmem:[%s3 + $0x30] sm:$0xff]
  %v193 = vld [vmem:[%s7 + $0x2] sm:$0x1]
  %v194 = vperm.slane %v193, 0
  %v196 = vsel %vm77, %v187, 0
  %v199 = vsel %vm77, %v188, 0
  %201 = vmatpush.msra.mxu0 0.0
  %202 = vmatpush.msra.mxu0 0.0
  %203 = vmatpush.msra.mxu0 0.0
  %204 = vmatpush.msra.mxu0 0.0
  %205 = vmatpush.msra.mxu0 0.0
  %206 = vmatpush.msra.mxu0 0.0
  %207 = vmatpush.msra.mxu0 0.0
  %208 = vmatpush.msra.mxu0 0.0
  %209 = vmatpush.msra.mxu0 0.0
  %210 = vmatpush.msra.mxu0 0.0
  %211 = vmatpush.msra.mxu0 0.0
  %212 = vmatpush.msra.mxu0 0.0
  %213 = vmatpush.msra.mxu0 %v192
  %214 = vmatpush.msra.mxu0 %v191
  %215 = vmatpush.msra.mxu0 %v190
  %216 = vmatpush.msra.mxu0 %v189
  %217 = vmatmul.f32.gmra.mxu0 %v196
  %v218 = vpop.f32.mrf.mxu0
  %v219 = vadd.f32 %v194, %v218
  %220 = vmatmul.f32.gmra.mxu0 %v199
  %v221 = vpop.f32.mrf.mxu0
  %v222 = vadd.f32 %v194, %v221
  %223 = vdwg.mxu0
  %v224 = vld [vmem:[%s1] sm:$0xff]
  %v225 = vld [vmem:[%s1 + $0x8] sm:$0xff]
  %v226 = vld [vmem:[%s4] sm:$0xff]
  %v227 = vld [vmem:[%s4 + $0x8] sm:$0xff]
  %v228 = vld [vmem:[%s4 + $0x10] sm:$0xff]
  %v229 = vld [vmem:[%s4 + $0x18] sm:$0xff]
  %v230 = vld [vmem:[%s4 + $0x20] sm:$0xff]
  %v231 = vld [vmem:[%s4 + $0x28] sm:$0xff]
  %v232 = vld [vmem:[%s4 + $0x30] sm:$0xff]
  %v233 = vld [vmem:[%s4 + $0x38] sm:$0xff]
  %v234 = vld [vmem:[%s4 + $0x40] sm:$0x1]
  %v235 = vperm.slane %v234, 0
  %vm236 = vcmask 523264
  %v238 = vsel %vm236, %v219, 0
  %v241 = vsel %vm236, %v222, 0
  %243 = vmatpush.msra.mxu0 0.0
  %244 = vmatpush.msra.mxu0 0.0
  %245 = vmatpush.msra.mxu0 0.0
  %246 = vmatpush.msra.mxu0 0.0
  %247 = vmatpush.msra.mxu0 0.0
  %248 = vmatpush.msra.mxu0 0.0
  %249 = vmatpush.msra.mxu0 0.0
  %250 = vmatpush.msra.mxu0 0.0
  %251 = vmatpush.msra.mxu0 %v233
  %252 = vmatpush.msra.mxu0 %v232
  %253 = vmatpush.msra.mxu0 %v231
  %254 = vmatpush.msra.mxu0 %v230
  %255 = vmatpush.msra.mxu0 %v229
  %256 = vmatpush.msra.mxu0 %v228
  %257 = vmatpush.msra.mxu0 %v227
  %258 = vmatpush.msra.mxu0 %v226
  %259 = vmatmul.f32.gmra.mxu0 %v238
  %v260 = vpop.f32.mrf.mxu0
  %v261 = vadd.f32 %v235, %v260
  %262 = vmatmul.f32.gmra.mxu0 %v241
  %v263 = vpop.f32.mrf.mxu0
  %v264 = vadd.f32 %v235, %v263
  %265 = vdwg.mxu0
  %s266 = scalar_lea.vmem %s4, 288
  %v267 = vld [vmem:[%s266] sm:$0xff]
  %v268 = vld [vmem:[%s266 + $0x8] sm:$0xff]
  %v269 = vld [vmem:[%s266 + $0x10] sm:$0xff]
  %v270 = vld [vmem:[%s266 + $0x18] sm:$0xff]
  %v271 = vld [vmem:[%s266 + $0x20] sm:$0xff]
  %v272 = vld [vmem:[%s266 + $0x28] sm:$0xff]
  %v273 = vld [vmem:[%s266 + $0x30] sm:$0xff]
  %v274 = vld [vmem:[%s266 + $0x38] sm:$0xff]
  %v275 = vld [vmem:[%s266 + $0x40] sm:$0x1]
  %v276 = vperm.slane %v275, 0
  %277 = vmatpush.msra.mxu0 0.0
  %278 = vmatpush.msra.mxu0 0.0
  %279 = vmatpush.msra.mxu0 0.0
  %280 = vmatpush.msra.mxu0 0.0
  %281 = vmatpush.msra.mxu0 0.0
  %282 = vmatpush.msra.mxu0 0.0
  %283 = vmatpush.msra.mxu0 0.0
  %284 = vmatpush.msra.mxu0 0.0
  %285 = vmatpush.msra.mxu0 %v274
  %286 = vmatpush.msra.mxu0 %v273
  %287 = vmatpush.msra.mxu0 %v272
  %288 = vmatpush.msra.mxu0 %v271
  %289 = vmatpush.msra.mxu0 %v270
  %290 = vmatpush.msra.mxu0 %v269
  %291 = vmatpush.msra.mxu0 %v268
  %292 = vmatpush.msra.mxu0 %v267
  %293 = vmatmul.f32.gmra.mxu0 %v238
  %v294 = vpop.f32.mrf.mxu0
  %v295 = vadd.f32 %v276, %v294
  %296 = vmatmul.f32.gmra.mxu0 %v241
  %v297 = vpop.f32.mrf.mxu0
  %v298 = vadd.f32 %v276, %v297
  %299 = vdwg.mxu0
  %s300 = scalar_lea.vmem %s4, 576
  %v301 = vld [vmem:[%s300] sm:$0xff]
  %v302 = vld [vmem:[%s300 + $0x8] sm:$0xff]
  %v303 = vld [vmem:[%s300 + $0x10] sm:$0xff]
  %v304 = vld [vmem:[%s300 + $0x18] sm:$0xff]
  %v305 = vld [vmem:[%s300 + $0x20] sm:$0xff]
  %v306 = vld [vmem:[%s300 + $0x28] sm:$0xff]
  %v307 = vld [vmem:[%s300 + $0x30] sm:$0xff]
  %v308 = vld [vmem:[%s300 + $0x38] sm:$0xff]
  %v309 = vld [vmem:[%s300 + $0x40] sm:$0x1]
  %v310 = vperm.slane %v309, 0
  %311 = vmatpush.msra.mxu0 0.0
  %312 = vmatpush.msra.mxu0 0.0
  %313 = vmatpush.msra.mxu0 0.0
  %314 = vmatpush.msra.mxu0 0.0
  %315 = vmatpush.msra.mxu0 0.0
  %316 = vmatpush.msra.mxu0 0.0
  %317 = vmatpush.msra.mxu0 0.0
  %318 = vmatpush.msra.mxu0 0.0
  %319 = vmatpush.msra.mxu0 %v308
  %320 = vmatpush.msra.mxu0 %v307
  %321 = vmatpush.msra.mxu0 %v306
  %322 = vmatpush.msra.mxu0 %v305
  %323 = vmatpush.msra.mxu0 %v304
  %324 = vmatpush.msra.mxu0 %v303
  %325 = vmatpush.msra.mxu0 %v302
  %326 = vmatpush.msra.mxu0 %v301
  %327 = vmatmul.f32.gmra.mxu0 %v238
  %v328 = vpop.f32.mrf.mxu0
  %v329 = vadd.f32 %v310, %v328
  %330 = vmatmul.f32.gmra.mxu0 %v241
  %v331 = vpop.f32.mrf.mxu0
  %v332 = vadd.f32 %v310, %v331
  %333 = vdwg.mxu0
  %vm334 = vcmask 130048
  %v336 = vsel %vm334, %v261, 0
  %v339 = vsel %vm334, %v264, 0
  %v342 = vsel %vm334, %v295, 0
  %v345 = vsel %vm334, %v298, 0
  %347 = vmatpush.xpose.msra.mxu0 0.0
  %348 = vmatpush.xpose.msra.mxu0 0.0
  %349 = vmatpush.xpose.msra.mxu0 0.0
  %350 = vmatpush.xpose.msra.mxu0 0.0
  %351 = vmatpush.xpose.msra.mxu0 0.0
  %352 = vmatpush.xpose.msra.mxu0 0.0
  %353 = vmatpush.xpose.msra.mxu0 0.0
  %354 = vmatpush.xpose.msra.mxu0 0.0
  %355 = vmatpush.xpose.msra.mxu0 0.0
  %356 = vmatpush.xpose.msra.mxu0 0.0
  %357 = vmatpush.xpose.msra.mxu0 0.0
  %358 = vmatpush.xpose.msra.mxu0 0.0
  %359 = vmatpush.xpose.msra.mxu0 0.0
  %360 = vmatpush.xpose.msra.mxu0 0.0
  %361 = vmatpush.xpose.msra.mxu0 %v345
  %362 = vmatpush.xpose.msra.mxu0 %v342
  %363 = vmatmul.f32.gmra.mxu0 %v336
  %v364 = vpop.f32.mrf.mxu0
  %v365 = vadd.f32 0.0, %v364
  %366 = vmatmul.f32.gmra.mxu0 %v339
  %v367 = vpop.f32.mrf.mxu0
  %v368 = vadd.f32 0.0, %v367
  %369 = vdwg.mxu0
  %v370 = vmul.f32 %v365, 0.25
  %v371 = vmul.f32 %v368, 0.25
  %v372 = vadd.f32 %v370, %v224
  %v373 = vadd.f32 %v371, %v225
  %v374 = vsel %vm334, %v372, -inf
  %375 = vmax.xlane.f32.xlu0 %v374
  %v376 = vpop.xlane.xlu0 %375
  %v377 = vsel %vm334, %v373, -inf
  %378 = vmax.xlane.f32.xlu0 %v377
  %v379 = vpop.xlane.xlu0 %378
  %v380 = vsub.f32 %v372, %v376
  %v381 = vsub.f32 %v373, %v379
  %v382 = vmul.f32 %v380, 1.442695
  %v383 = vpow.pop %v382
  %v384 = vmul.f32 %v381, 1.442695
  %v385 = vpow.pop %v384
  %v386 = vsel %vm334, %v383, 0.0
  %387 = vadd.xlane.f32.xlu0 %v386
  %v388 = vpop.xlane.xlu0 %387
  %v389 = vsel %vm334, %v385, 0.0
  %390 = vadd.xlane.f32.xlu0 %v389
  %v391 = vpop.xlane.xlu0 %390
  %v392 = vrcp.pop %v388
  %v393 = vmul.f32 %v388, %v392
  %v394 = vsub.f32 1.0, %v393
  %v395 = vmul.f32 %v392, %v394
  %v396 = vadd.f32 %v392, %v395
  %vm397 = vweird.f32 %v388
  %vm398 = vweird.f32 %v392
  %vm399 = vmor %vm397, %vm398
  %v400 = vsel %vm399, %v392, %v396
  %v401 = vand.u32 2147483647, %v388
  %vm402 = vcmp.eq.f32.partialorder %v401, 8.507059e+37
  %v403 = vand.u32 %v388, 2147483648
  %v404 = vor.u32 1.1754944e-38, %v403
  %v405 = vsel %vm402, %v404, %v400
  %v406 = vmul.f32 %v383, %v405
  %v407 = vrcp.pop %v391
  %v408 = vmul.f32 %v391, %v407
  %v409 = vsub.f32 1.0, %v408
  %v410 = vmul.f32 %v407, %v409
  %v411 = vadd.f32 %v407, %v410
  %vm412 = vweird.f32 %v391
  %vm413 = vweird.f32 %v407
  %vm414 = vmor %vm412, %vm413
  %v415 = vsel %vm414, %v407, %v411
  %v416 = vand.u32 2147483647, %v391
  %vm417 = vcmp.eq.f32.partialorder %v416, 8.507059e+37
  %v418 = vand.u32 %v391, 2147483648
  %v419 = vor.u32 1.1754944e-38, %v418
  %v420 = vsel %vm417, %v419, %v415
  %v421 = vmul.f32 %v385, %v420
  %v423 = vsel %vm334, %v406, 0
  %v426 = vsel %vm334, %v421, 0
  %428 = vmatpush.msra.mxu0 0.0
  %429 = vmatpush.msra.mxu0 0.0
  %430 = vmatpush.msra.mxu0 0.0
  %431 = vmatpush.msra.mxu0 0.0
  %432 = vmatpush.msra.mxu0 0.0
  %433 = vmatpush.msra.mxu0 0.0
  %434 = vmatpush.msra.mxu0 0.0
  %435 = vmatpush.msra.mxu0 0.0
  %436 = vmatpush.msra.mxu0 0.0
  %437 = vmatpush.msra.mxu0 0.0
  %438 = vmatpush.msra.mxu0 0.0
  %439 = vmatpush.msra.mxu0 0.0
  %440 = vmatpush.msra.mxu0 0.0
  %441 = vmatpush.msra.mxu0 0.0
  %442 = vmatpush.msra.mxu0 %v332
  %443 = vmatpush.msra.mxu0 %v329
  %444 = vmatmul.f32.gmra.mxu0 %v423
  %v445 = vpop.f32.mrf.mxu0
  %v446 = vadd.f32 0.0, %v445
  %447 = vmatmul.f32.gmra.mxu0 %v426
  %v448 = vpop.f32.mrf.mxu0
  %v449 = vadd.f32 0.0, %v448
  %450 = vdwg.mxu0
  %v451 = vld [vmem:[%s5] sm:$0xff]
  %v452 = vld [vmem:[%s5 + $0x8] sm:$0xff]
  %s453 = scalar_lea.vmem %s4, 72
  %v454 = vld [vmem:[%s453] sm:$0xff]
  %v455 = vld [vmem:[%s453 + $0x8] sm:$0xff]
  %v456 = vld [vmem:[%s453 + $0x10] sm:$0xff]
  %v457 = vld [vmem:[%s453 + $0x18] sm:$0xff]
  %v458 = vld [vmem:[%s453 + $0x20] sm:$0xff]
  %v459 = vld [vmem:[%s453 + $0x28] sm:$0xff]
  %v460 = vld [vmem:[%s453 + $0x30] sm:$0xff]
  %v461 = vld [vmem:[%s453 + $0x38] sm:$0xff]
  %v462 = vld [vmem:[%s453 + $0x40] sm:$0x1]
  %v463 = vperm.slane %v462, 0
  %464 = vmatpush.msra.mxu0 0.0
  %465 = vmatpush.msra.mxu0 0.0
  %466 = vmatpush.msra.mxu0 0.0
  %467 = vmatpush.msra.mxu0 0.0
  %468 = vmatpush.msra.mxu0 0.0
  %469 = vmatpush.msra.mxu0 0.0
  %470 = vmatpush.msra.mxu0 0.0
  %471 = vmatpush.msra.mxu0 0.0
  %472 = vmatpush.msra.mxu0 %v461
  %473 = vmatpush.msra.mxu0 %v460
  %474 = vmatpush.msra.mxu0 %v459
  %475 = vmatpush.msra.mxu0 %v458
  %476 = vmatpush.msra.mxu0 %v457
  %477 = vmatpush.msra.mxu0 %v456
  %478 = vmatpush.msra.mxu0 %v455
  %479 = vmatpush.msra.mxu0 %v454
  %480 = vmatmul.f32.gmra.mxu0 %v238
  %v481 = vpop.f32.mrf.mxu0
  %v482 = vadd.f32 %v463, %v481
  %483 = vmatmul.f32.gmra.mxu0 %v241
  %v484 = vpop.f32.mrf.mxu0
  %v485 = vadd.f32 %v463, %v484
  %486 = vdwg.mxu0
  %s487 = scalar_lea.vmem %s4, 360
  %v488 = vld [vmem:[%s487] sm:$0xff]
  %v489 = vld [vmem:[%s487 + $0x8] sm:$0xff]
  %v490 = vld [vmem:[%s487 + $0x10] sm:$0xff]
  %v491 = vld [vmem:[%s487 + $0x18] sm:$0xff]
  %v492 = vld [vmem:[%s487 + $0x20] sm:$0xff]
  %v493 = vld [vmem:[%s487 + $0x28] sm:$0xff]
  %v494 = vld [vmem:[%s487 + $0x30] sm:$0xff]
  %v495 = vld [vmem:[%s487 + $0x38] sm:$0xff]
  %v496 = vld [vmem:[%s487 + $0x40] sm:$0x1]
  %v497 = vperm.slane %v496, 0
  %498 = vmatpush.msra.mxu0 0.0
  %499 = vmatpush.msra.mxu0 0.0
  %500 = vmatpush.msra.mxu0 0.0
  %501 = vmatpush.msra.mxu0 0.0
  %502 = vmatpush.msra.mxu0 0.0
  %503 = vmatpush.msra.mxu0 0.0
  %504 = vmatpush.msra.mxu0 0.0
  %505 = vmatpush.msra.mxu0 0.0
  %506 = vmatpush.msra.mxu0 %v495
  %507 = vmatpush.msra.mxu0 %v494
  %508 = vmatpush.msra.mxu0 %v493
  %509 = vmatpush.msra.mxu0 %v492
  %510 = vmatpush.msra.mxu0 %v491
  %511 = vmatpush.msra.mxu0 %v490
  %512 = vmatpush.msra.mxu0 %v489
  %513 = vmatpush.msra.mxu0 %v488
  %514 = vmatmul.f32.gmra.mxu0 %v238
  %v515 = vpop.f32.mrf.mxu0
  %v516 = vadd.f32 %v497, %v515
  %517 = vmatmul.f32.gmra.mxu0 %v241
  %v518 = vpop.f32.mrf.mxu0
  %v519 = vadd.f32 %v497, %v518
  %520 = vdwg.mxu0
  %s521 = scalar_lea.vmem %s4, 648
  %v522 = vld [vmem:[%s521] sm:$0xff]
  %v523 = vld [vmem:[%s521 + $0x8] sm:$0xff]
  %v524 = vld [vmem:[%s521 + $0x10] sm:$0xff]
  %v525 = vld [vmem:[%s521 + $0x18] sm:$0xff]
  %v526 = vld [vmem:[%s521 + $0x20] sm:$0xff]
  %v527 = vld [vmem:[%s521 + $0x28] sm:$0xff]
  %v528 = vld [vmem:[%s521 + $0x30] sm:$0xff]
  %v529 = vld [vmem:[%s521 + $0x38] sm:$0xff]
  %v530 = vld [vmem:[%s521 + $0x40] sm:$0x1]
  %v531 = vperm.slane %v530, 0
  %532 = vmatpush.msra.mxu0 0.0
  %533 = vmatpush.msra.mxu0 0.0
  %534 = vmatpush.msra.mxu0 0.0
  %535 = vmatpush.msra.mxu0 0.0
  %536 = vmatpush.msra.mxu0 0.0
  %537 = vmatpush.msra.mxu0 0.0
  %538 = vmatpush.msra.mxu0 0.0
  %539 = vmatpush.msra.mxu0 0.0
  %540 = vmatpush.msra.mxu0 %v529
  %541 = vmatpush.msra.mxu0 %v528
  %542 = vmatpush.msra.mxu0 %v527
  %543 = vmatpush.msra.mxu0 %v526
  %544 = vmatpush.msra.mxu0 %v525
  %545 = vmatpush.msra.mxu0 %v524
  %546 = vmatpush.msra.mxu0 %v523
  %547 = vmatpush.msra.mxu0 %v522
  %548 = vmatmul.f32.gmra.mxu0 %v238
  %v549 = vpop.f32.mrf.mxu0
  %v550 = vadd.f32 %v531, %v549
  %551 = vmatmul.f32.gmra.mxu0 %v241
  %v552 = vpop.f32.mrf.mxu0
  %v553 = vadd.f32 %v531, %v552
  %554 = vdwg.mxu0
  %v556 = vsel %vm334, %v482, 0
  %v559 = vsel %vm334, %v485, 0
  %v562 = vsel %vm334, %v516, 0
  %v565 = vsel %vm334, %v519, 0
  %567 = vmatpush.xpose.msra.mxu0 0.0
  %568 = vmatpush.xpose.msra.mxu0 0.0
  %569 = vmatpush.xpose.msra.mxu0 0.0
  %570 = vmatpush.xpose.msra.mxu0 0.0
  %571 = vmatpush.xpose.msra.mxu0 0.0
  %572 = vmatpush.xpose.msra.mxu0 0.0
  %573 = vmatpush.xpose.msra.mxu0 0.0
  %574 = vmatpush.xpose.msra.mxu0 0.0
  %575 = vmatpush.xpose.msra.mxu0 0.0
  %576 = vmatpush.xpose.msra.mxu0 0.0
  %577 = vmatpush.xpose.msra.mxu0 0.0
  %578 = vmatpush.xpose.msra.mxu0 0.0
  %579 = vmatpush.xpose.msra.mxu0 0.0
  %580 = vmatpush.xpose.msra.mxu0 0.0
  %581 = vmatpush.xpose.msra.mxu0 %v565
  %582 = vmatpush.xpose.msra.mxu0 %v562
  %583 = vmatmul.f32.gmra.mxu0 %v556
  %v584 = vpop.f32.mrf.mxu0
  %v585 = vadd.f32 0.0, %v584
  %586 = vmatmul.f32.gmra.mxu0 %v559
  %v587 = vpop.f32.mrf.mxu0
  %v588 = vadd.f32 0.0, %v587
  %589 = vdwg.mxu0
  %v590 = vmul.f32 %v585, 0.25
  %v591 = vmul.f32 %v588, 0.25
  %v592 = vadd.f32 %v590, %v224
  %v593 = vadd.f32 %v591, %v225
  %v594 = vsel %vm334, %v592, -inf
  %595 = vmax.xlane.f32.xlu0 %v594
  %v596 = vpop.xlane.xlu0 %595
  %v597 = vsel %vm334, %v593, -inf
  %598 = vmax.xlane.f32.xlu0 %v597
  %v599 = vpop.xlane.xlu0 %598
  %v600 = vsub.f32 %v592, %v596
  %v601 = vsub.f32 %v593, %v599
  %v602 = vmul.f32 %v600, 1.442695
  %v603 = vpow.pop %v602
  %v604 = vmul.f32 %v601, 1.442695
  %v605 = vpow.pop %v604
  %v606 = vsel %vm334, %v603, 0.0
  %607 = vadd.xlane.f32.xlu0 %v606
  %v608 = vpop.xlane.xlu0 %607
  %v609 = vsel %vm334, %v605, 0.0
  %610 = vadd.xlane.f32.xlu0 %v609
  %v611 = vpop.xlane.xlu0 %610
  %v612 = vrcp.pop %v608
  %v613 = vmul.f32 %v608, %v612
  %v614 = vsub.f32 1.0, %v613
  %v615 = vmul.f32 %v612, %v614
  %v616 = vadd.f32 %v612, %v615
  %vm617 = vweird.f32 %v608
  %vm618 = vweird.f32 %v612
  %vm619 = vmor %vm617, %vm618
  %v620 = vsel %vm619, %v612, %v616
  %v621 = vand.u32 2147483647, %v608
  %vm622 = vcmp.eq.f32.partialorder %v621, 8.507059e+37
  %v623 = vand.u32 %v608, 2147483648
  %v624 = vor.u32 1.1754944e-38, %v623
  %v625 = vsel %vm622, %v624, %v620
  %v626 = vmul.f32 %v603, %v625
  %v627 = vrcp.pop %v611
  %v628 = vmul.f32 %v611, %v627
  %v629 = vsub.f32 1.0, %v628
  %v630 = vmul.f32 %v627, %v629
  %v631 = vadd.f32 %v627, %v630
  %vm632 = vweird.f32 %v611
  %vm633 = vweird.f32 %v627
  %vm634 = vmor %vm632, %vm633
  %v635 = vsel %vm634, %v627, %v631
  %v636 = vand.u32 2147483647, %v611
  %vm637 = vcmp.eq.f32.partialorder %v636, 8.507059e+37
  %v638 = vand.u32 %v611, 2147483648
  %v639 = vor.u32 1.1754944e-38, %v638
  %v640 = vsel %vm637, %v639, %v635
  %v641 = vmul.f32 %v605, %v640
  %v643 = vsel %vm334, %v626, 0
  %v646 = vsel %vm334, %v641, 0
  %648 = vmatpush.msra.mxu0 0.0
  %649 = vmatpush.msra.mxu0 0.0
  %650 = vmatpush.msra.mxu0 0.0
  %651 = vmatpush.msra.mxu0 0.0
  %652 = vmatpush.msra.mxu0 0.0
  %653 = vmatpush.msra.mxu0 0.0
  %654 = vmatpush.msra.mxu0 0.0
  %655 = vmatpush.msra.mxu0 0.0
  %656 = vmatpush.msra.mxu0 0.0
  %657 = vmatpush.msra.mxu0 0.0
  %658 = vmatpush.msra.mxu0 0.0
  %659 = vmatpush.msra.mxu0 0.0
  %660 = vmatpush.msra.mxu0 0.0
  %661 = vmatpush.msra.mxu0 0.0
  %662 = vmatpush.msra.mxu0 %v553
  %663 = vmatpush.msra.mxu0 %v550
  %664 = vmatmul.f32.gmra.mxu0 %v643
  %v665 = vpop.f32.mrf.mxu0
  %v666 = vadd.f32 0.0, %v665
  %667 = vmatmul.f32.gmra.mxu0 %v646
  %v668 = vpop.f32.mrf.mxu0
  %v669 = vadd.f32 0.0, %v668
  %670 = vdwg.mxu0
  %s671 = scalar_lea.vmem %s5, 16
  %v672 = vld [vmem:[%s671] sm:$0xff]
  %v673 = vld [vmem:[%s671 + $0x8] sm:$0xff]
  %v675 = vsel %vm334, %v666, 0
  %v678 = vsel %vm334, %v669, 0
  %680 = vmatpush.msra.mxu0 0.0
  %681 = vmatpush.msra.mxu0 0.0
  %682 = vmatpush.msra.mxu0 0.0
  %683 = vmatpush.msra.mxu0 0.0
  %684 = vmatpush.msra.mxu0 0.0
  %685 = vmatpush.msra.mxu0 0.0
  %686 = vmatpush.msra.mxu0 0.0
  %687 = vmatpush.msra.mxu0 0.0
  %688 = vmatpush.msra.mxu0 0.0
  %689 = vmatpush.msra.mxu0 0.0
  %690 = vmatpush.msra.mxu0 0.0
  %691 = vmatpush.msra.mxu0 0.0
  %692 = vmatpush.msra.mxu0 0.0
  %693 = vmatpush.msra.mxu0 0.0
  %694 = vmatpush.msra.mxu0 %v673
  %695 = vmatpush.msra.mxu0 %v672
  %696 = vmatmul.f32.gmra.mxu0 %v675
  %v697 = vpop.f32.mrf.mxu0
  %v698 = vadd.f32 0.0, %v697
  %699 = vmatmul.f32.gmra.mxu0 %v678
  %v700 = vpop.f32.mrf.mxu0
  %v701 = vadd.f32 0.0, %v700
  %702 = vdwg.mxu0
  %v704 = vsel %vm334, %v446, 0
  %v707 = vsel %vm334, %v449, 0
  %709 = vmatpush.msra.mxu0 0.0
  %710 = vmatpush.msra.mxu0 0.0
  %711 = vmatpush.msra.mxu0 0.0
  %712 = vmatpush.msra.mxu0 0.0
  %713 = vmatpush.msra.mxu0 0.0
  %714 = vmatpush.msra.mxu0 0.0
  %715 = vmatpush.msra.mxu0 0.0
  %716 = vmatpush.msra.mxu0 0.0
  %717 = vmatpush.msra.mxu0 0.0
  %718 = vmatpush.msra.mxu0 0.0
  %719 = vmatpush.msra.mxu0 0.0
  %720 = vmatpush.msra.mxu0 0.0
  %721 = vmatpush.msra.mxu0 0.0
  %722 = vmatpush.msra.mxu0 0.0
  %723 = vmatpush.msra.mxu0 %v452
  %724 = vmatpush.msra.mxu0 %v451
  %725 = vmatmul.f32.gmra.mxu0 %v704
  %v726 = vpop.f32.mrf.mxu0
  %v727 = vadd.f32 %v698, %v726
  %728 = vmatmul.f32.gmra.mxu0 %v707
  %v729 = vpop.f32.mrf.mxu0
  %v730 = vadd.f32 %v701, %v729
  %731 = vdwg.mxu0
  %s732 = scalar_lea.vmem %s4, 144
  %v733 = vld [vmem:[%s732] sm:$0xff]
  %v734 = vld [vmem:[%s732 + $0x8] sm:$0xff]
  %v735 = vld [vmem:[%s732 + $0x10] sm:$0xff]
  %v736 = vld [vmem:[%s732 + $0x18] sm:$0xff]
  %v737 = vld [vmem:[%s732 + $0x20] sm:$0xff]
  %v738 = vld [vmem:[%s732 + $0x28] sm:$0xff]
  %v739 = vld [vmem:[%s732 + $0x30] sm:$0xff]
  %v740 = vld [vmem:[%s732 + $0x38] sm:$0xff]
  %v741 = vld [vmem:[%s732 + $0x40] sm:$0x1]
  %v742 = vperm.slane %v741, 0
  %743 = vmatpush.msra.mxu0 0.0
  %744 = vmatpush.msra.mxu0 0.0
  %745 = vmatpush.msra.mxu0 0.0
  %746 = vmatpush.msra.mxu0 0.0
  %747 = vmatpush.msra.mxu0 0.0
  %748 = vmatpush.msra.mxu0 0.0
  %749 = vmatpush.msra.mxu0 0.0
  %750 = vmatpush.msra.mxu0 0.0
  %751 = vmatpush.msra.mxu0 %v740
  %752 = vmatpush.msra.mxu0 %v739
  %753 = vmatpush.msra.mxu0 %v738
  %754 = vmatpush.msra.mxu0 %v737
  %755 = vmatpush.msra.mxu0 %v736
  %756 = vmatpush.msra.mxu0 %v735
  %757 = vmatpush.msra.mxu0 %v734
  %758 = vmatpush.msra.mxu0 %v733
  %759 = vmatmul.f32.gmra.mxu0 %v238
  %v760 = vpop.f32.mrf.mxu0
  %v761 = vadd.f32 %v742, %v760
  %762 = vmatmul.f32.gmra.mxu0 %v241
  %v763 = vpop.f32.mrf.mxu0
  %v764 = vadd.f32 %v742, %v763
  %765 = vdwg.mxu0
  %s766 = scalar_lea.vmem %s4, 432
  %v767 = vld [vmem:[%s766] sm:$0xff]
  %v768 = vld [vmem:[%s766 + $0x8] sm:$0xff]
  %v769 = vld [vmem:[%s766 + $0x10] sm:$0xff]
  %v770 = vld [vmem:[%s766 + $0x18] sm:$0xff]
  %v771 = vld [vmem:[%s766 + $0x20] sm:$0xff]
  %v772 = vld [vmem:[%s766 + $0x28] sm:$0xff]
  %v773 = vld [vmem:[%s766 + $0x30] sm:$0xff]
  %v774 = vld [vmem:[%s766 + $0x38] sm:$0xff]
  %v775 = vld [vmem:[%s766 + $0x40] sm:$0x1]
  %v776 = vperm.slane %v775, 0
  %777 = vmatpush.msra.mxu0 0.0
  %778 = vmatpush.msra.mxu0 0.0
  %779 = vmatpush.msra.mxu0 0.0
  %780 = vmatpush.msra.mxu0 0.0
  %781 = vmatpush.msra.mxu0 0.0
  %782 = vmatpush.msra.mxu0 0.0
  %783 = vmatpush.msra.mxu0 0.0
  %784 = vmatpush.msra.mxu0 0.0
  %785 = vmatpush.msra.mxu0 %v774
  %786 = vmatpush.msra.mxu0 %v773
  %787 = vmatpush.msra.mxu0 %v772
  %788 = vmatpush.msra.mxu0 %v771
  %789 = vmatpush.msra.mxu0 %v770
  %790 = vmatpush.msra.mxu0 %v769
  %791 = vmatpush.msra.mxu0 %v768
  %792 = vmatpush.msra.mxu0 %v767
  %793 = vmatmul.f32.gmra.mxu0 %v238
  %v794 = vpop.f32.mrf.mxu0
  %v795 = vadd.f32 %v776, %v794
  %796 = vmatmul.f32.gmra.mxu0 %v241
  %v797 = vpop.f32.mrf.mxu0
  %v798 = vadd.f32 %v776, %v797
  %799 = vdwg.mxu0
  %s800 = scalar_lea.vmem %s4, 720
  %v801 = vld [vmem:[%s800] sm:$0xff]
  %v802 = vld [vmem:[%s800 + $0x8] sm:$0xff]
  %v803 = vld [vmem:[%s800 + $0x10] sm:$0xff]
  %v804 = vld [vmem:[%s800 + $0x18] sm:$0xff]
  %v805 = vld [vmem:[%s800 + $0x20] sm:$0xff]
  %v806 = vld [vmem:[%s800 + $0x28] sm:$0xff]
  %v807 = vld [vmem:[%s800 + $0x30] sm:$0xff]
  %v808 = vld [vmem:[%s800 + $0x38] sm:$0xff]
  %v809 = vld [vmem:[%s800 + $0x40] sm:$0x1]
  %v810 = vperm.slane %v809, 0
  %811 = vmatpush.msra.mxu0 0.0
  %812 = vmatpush.msra.mxu0 0.0
  %813 = vmatpush.msra.mxu0 0.0
  %814 = vmatpush.msra.mxu0 0.0
  %815 = vmatpush.msra.mxu0 0.0
  %816 = vmatpush.msra.mxu0 0.0
  %817 = vmatpush.msra.mxu0 0.0
  %818 = vmatpush.msra.mxu0 0.0
  %819 = vmatpush.msra.mxu0 %v808
  %820 = vmatpush.msra.mxu0 %v807
  %821 = vmatpush.msra.mxu0 %v806
  %822 = vmatpush.msra.mxu0 %v805
  %823 = vmatpush.msra.mxu0 %v804
  %824 = vmatpush.msra.mxu0 %v803
  %825 = vmatpush.msra.mxu0 %v802
  %826 = vmatpush.msra.mxu0 %v801
  %827 = vmatmul.f32.gmra.mxu0 %v238
  %v828 = vpop.f32.mrf.mxu0
  %v829 = vadd.f32 %v810, %v828
  %830 = vmatmul.f32.gmra.mxu0 %v241
  %v831 = vpop.f32.mrf.mxu0
  %v832 = vadd.f32 %v810, %v831
  %833 = vdwg.mxu0
  %v835 = vsel %vm334, %v761, 0
  %v838 = vsel %vm334, %v764, 0
  %v841 = vsel %vm334, %v795, 0
  %v844 = vsel %vm334, %v798, 0
  %846 = vmatpush.xpose.msra.mxu0 0.0
  %847 = vmatpush.xpose.msra.mxu0 0.0
  %848 = vmatpush.xpose.msra.mxu0 0.0
  %849 = vmatpush.xpose.msra.mxu0 0.0
  %850 = vmatpush.xpose.msra.mxu0 0.0
  %851 = vmatpush.xpose.msra.mxu0 0.0
  %852 = vmatpush.xpose.msra.mxu0 0.0
  %853 = vmatpush.xpose.msra.mxu0 0.0
  %854 = vmatpush.xpose.msra.mxu0 0.0
  %855 = vmatpush.xpose.msra.mxu0 0.0
  %856 = vmatpush.xpose.msra.mxu0 0.0
  %857 = vmatpush.xpose.msra.mxu0 0.0
  %858 = vmatpush.xpose.msra.mxu0 0.0
  %859 = vmatpush.xpose.msra.mxu0 0.0
  %860 = vmatpush.xpose.msra.mxu0 %v844
  %861 = vmatpush.xpose.msra.mxu0 %v841
  %862 = vmatmul.f32.gmra.mxu0 %v835
  %v863 = vpop.f32.mrf.mxu0
  %v864 = vadd.f32 0.0, %v863
  %865 = vmatmul.f32.gmra.mxu0 %v838
  %v866 = vpop.f32.mrf.mxu0
  %v867 = vadd.f32 0.0, %v866
  %868 = vdwg.mxu0
  %v869 = vmul.f32 %v864, 0.25
  %v870 = vmul.f32 %v867, 0.25
  %v871 = vadd.f32 %v869, %v224
  %v872 = vadd.f32 %v870, %v225
  %v873 = vsel %vm334, %v871, -inf
  %874 = vmax.xlane.f32.xlu0 %v873
  %v875 = vpop.xlane.xlu0 %874
  %v876 = vsel %vm334, %v872, -inf
  %877 = vmax.xlane.f32.xlu0 %v876
  %v878 = vpop.xlane.xlu0 %877
  %v879 = vsub.f32 %v871, %v875
  %v880 = vsub.f32 %v872, %v878
  %v881 = vmul.f32 %v879, 1.442695
  %v882 = vpow.pop %v881
  %v883 = vmul.f32 %v880, 1.442695
  %v884 = vpow.pop %v883
  %v885 = vsel %vm334, %v882, 0.0
  %886 = vadd.xlane.f32.xlu0 %v885
  %v887 = vpop.xlane.xlu0 %886
  %v888 = vsel %vm334, %v884, 0.0
  %889 = vadd.xlane.f32.xlu0 %v888
  %v890 = vpop.xlane.xlu0 %889
  %v891 = vrcp.pop %v887
  %v892 = vmul.f32 %v887, %v891
  %v893 = vsub.f32 1.0, %v892
  %v894 = vmul.f32 %v891, %v893
  %v895 = vadd.f32 %v891, %v894
  %vm896 = vweird.f32 %v887
  %vm897 = vweird.f32 %v891
  %vm898 = vmor %vm896, %vm897
  %v899 = vsel %vm898, %v891, %v895
  %v900 = vand.u32 2147483647, %v887
  %vm901 = vcmp.eq.f32.partialorder %v900, 8.507059e+37
  %v902 = vand.u32 %v887, 2147483648
  %v903 = vor.u32 1.1754944e-38, %v902
  %v904 = vsel %vm901, %v903, %v899
  %v905 = vmul.f32 %v882, %v904
  %v906 = vrcp.pop %v890
  %v907 = vmul.f32 %v890, %v906
  %v908 = vsub.f32 1.0, %v907
  %v909 = vmul.f32 %v906, %v908
  %v910 = vadd.f32 %v906, %v909
  %vm911 = vweird.f32 %v890
  %vm912 = vweird.f32 %v906
  %vm913 = vmor %vm911, %vm912
  %v914 = vsel %vm913, %v906, %v910
  %v915 = vand.u32 2147483647, %v890
  %vm916 = vcmp.eq.f32.partialorder %v915, 8.507059e+37
  %v917 = vand.u32 %v890, 2147483648
  %v918 = vor.u32 1.1754944e-38, %v917
  %v919 = vsel %vm916, %v918, %v914
  %v920 = vmul.f32 %v884, %v919
  %v922 = vsel %vm334, %v905, 0
  %v925 = vsel %vm334, %v920, 0
  %927 = vmatpush.msra.mxu0 0.0
  %928 = vmatpush.msra.mxu0 0.0
  %929 = vmatpush.msra.mxu0 0.0
  %930 = vmatpush.msra.mxu0 0.0
  %931 = vmatpush.msra.mxu0 0.0
  %932 = vmatpush.msra.mxu0 0.0
  %933 = vmatpush.msra.mxu0 0.0
  %934 = vmatpush.msra.mxu0 0.0
  %935 = vmatpush.msra.mxu0 0.0
  %936 = vmatpush.msra.mxu0 0.0
  %937 = vmatpush.msra.mxu0 0.0
  %938 = vmatpush.msra.mxu0 0.0
  %939 = vmatpush.msra.mxu0 0.0
  %940 = vmatpush.msra.mxu0 0.0
  %941 = vmatpush.msra.mxu0 %v832
  %942 = vmatpush.msra.mxu0 %v829
  %943 = vmatmul.f32.gmra.mxu0 %v922
  %v944 = vpop.f32.mrf.mxu0
  %v945 = vadd.f32 0.0, %v944
  %946 = vmatmul.f32.gmra.mxu0 %v925
  %v947 = vpop.f32.mrf.mxu0
  %v948 = vadd.f32 0.0, %v947
  %949 = vdwg.mxu0
  %s950 = scalar_lea.vmem %s5, 32
  %v951 = vld [vmem:[%s950] sm:$0xff]
  %v952 = vld [vmem:[%s950 + $0x8] sm:$0xff]
  %v954 = vsel %vm334, %v945, 0
  %v957 = vsel %vm334, %v948, 0
  %959 = vmatpush.msra.mxu0 0.0
  %960 = vmatpush.msra.mxu0 0.0
  %961 = vmatpush.msra.mxu0 0.0
  %962 = vmatpush.msra.mxu0 0.0
  %963 = vmatpush.msra.mxu0 0.0
  %964 = vmatpush.msra.mxu0 0.0
  %965 = vmatpush.msra.mxu0 0.0
  %966 = vmatpush.msra.mxu0 0.0
  %967 = vmatpush.msra.mxu0 0.0
  %968 = vmatpush.msra.mxu0 0.0
  %969 = vmatpush.msra.mxu0 0.0
  %970 = vmatpush.msra.mxu0 0.0
  %971 = vmatpush.msra.mxu0 0.0
  %972 = vmatpush.msra.mxu0 0.0
  %973 = vmatpush.msra.mxu0 %v952
  %974 = vmatpush.msra.mxu0 %v951
  %975 = vmatmul.f32.gmra.mxu0 %v954
  %v976 = vpop.f32.mrf.mxu0
  %v977 = vadd.f32 0.0, %v976
  %978 = vmatmul.f32.gmra.mxu0 %v957
  %v979 = vpop.f32.mrf.mxu0
  %v980 = vadd.f32 0.0, %v979
  %981 = vdwg.mxu0
  %v982 = vadd.f32 %v727, %v977
  %v983 = vadd.f32 %v730, %v980
  %s984 = scalar_lea.vmem %s4, 216
  %v985 = vld [vmem:[%s984] sm:$0xff]
  %v986 = vld [vmem:[%s984 + $0x8] sm:$0xff]
  %v987 = vld [vmem:[%s984 + $0x10] sm:$0xff]
  %v988 = vld [vmem:[%s984 + $0x18] sm:$0xff]
  %v989 = vld [vmem:[%s984 + $0x20] sm:$0xff]
  %v990 = vld [vmem:[%s984 + $0x28] sm:$0xff]
  %v991 = vld [vmem:[%s984 + $0x30] sm:$0xff]
  %v992 = vld [vmem:[%s984 + $0x38] sm:$0xff]
  %v993 = vld [vmem:[%s984 + $0x40] sm:$0x1]
  %v994 = vperm.slane %v993, 0
  %995 = vmatpush.msra.mxu0 0.0
  %996 = vmatpush.msra.mxu0 0.0
  %997 = vmatpush.msra.mxu0 0.0
  %998 = vmatpush.msra.mxu0 0.0
  %999 = vmatpush.msra.mxu0 0.0
  %1000 = vmatpush.msra.mxu0 0.0
  %1001 = vmatpush.msra.mxu0 0.0
  %1002 = vmatpush.msra.mxu0 0.0
  %1003 = vmatpush.msra.mxu0 %v992
  %1004 = vmatpush.msra.mxu0 %v991
  %1005 = vmatpush.msra.mxu0 %v990
  %1006 = vmatpush.msra.mxu0 %v989
  %1007 = vmatpush.msra.mxu0 %v988
  %1008 = vmatpush.msra.mxu0 %v987
  %1009 = vmatpush.msra.mxu0 %v986
  %1010 = vmatpush.msra.mxu0 %v985
  %1011 = vmatmul.f32.gmra.mxu0 %v238
  %v1012 = vpop.f32.mrf.mxu0
  %v1013 = vadd.f32 %v994, %v1012
  %1014 = vmatmul.f32.gmra.mxu0 %v241
  %v1015 = vpop.f32.mrf.mxu0
  %v1016 = vadd.f32 %v994, %v1015
  %1017 = vdwg.mxu0
  %s1018 = scalar_lea.vmem %s4, 504
  %v1019 = vld [vmem:[%s1018] sm:$0xff]
  %v1020 = vld [vmem:[%s1018 + $0x8] sm:$0xff]
  %v1021 = vld [vmem:[%s1018 + $0x10] sm:$0xff]
  %v1022 = vld [vmem:[%s1018 + $0x18] sm:$0xff]
  %v1023 = vld [vmem:[%s1018 + $0x20] sm:$0xff]
  %v1024 = vld [vmem:[%s1018 + $0x28] sm:$0xff]
  %v1025 = vld [vmem:[%s1018 + $0x30] sm:$0xff]
  %v1026 = vld [vmem:[%s1018 + $0x38] sm:$0xff]
  %v1027 = vld [vmem:[%s1018 + $0x40] sm:$0x1]
  %v1028 = vperm.slane %v1027, 0
  %1029 = vmatpush.msra.mxu0 0.0
  %1030 = vmatpush.msra.mxu0 0.0
  %1031 = vmatpush.msra.mxu0 0.0
  %1032 = vmatpush.msra.mxu0 0.0
  %1033 = vmatpush.msra.mxu0 0.0
  %1034 = vmatpush.msra.mxu0 0.0
  %1035 = vmatpush.msra.mxu0 0.0
  %1036 = vmatpush.msra.mxu0 0.0
  %1037 = vmatpush.msra.mxu0 %v1026
  %1038 = vmatpush.msra.mxu0 %v1025
  %1039 = vmatpush.msra.mxu0 %v1024
  %1040 = vmatpush.msra.mxu0 %v1023
  %1041 = vmatpush.msra.mxu0 %v1022
  %1042 = vmatpush.msra.mxu0 %v1021
  %1043 = vmatpush.msra.mxu0 %v1020
  %1044 = vmatpush.msra.mxu0 %v1019
  %1045 = vmatmul.f32.gmra.mxu0 %v238
  %v1046 = vpop.f32.mrf.mxu0
  %v1047 = vadd.f32 %v1028, %v1046
  %1048 = vmatmul.f32.gmra.mxu0 %v241
  %v1049 = vpop.f32.mrf.mxu0
  %v1050 = vadd.f32 %v1028, %v1049
  %1051 = vdwg.mxu0
  %s1052 = scalar_lea.vmem %s4, 792
  %v1053 = vld [vmem:[%s1052] sm:$0xff]
  %v1054 = vld [vmem:[%s1052 + $0x8] sm:$0xff]
  %v1055 = vld [vmem:[%s1052 + $0x10] sm:$0xff]
  %v1056 = vld [vmem:[%s1052 + $0x18] sm:$0xff]
  %v1057 = vld [vmem:[%s1052 + $0x20] sm:$0xff]
  %v1058 = vld [vmem:[%s1052 + $0x28] sm:$0xff]
  %v1059 = vld [vmem:[%s1052 + $0x30] sm:$0xff]
  %v1060 = vld [vmem:[%s1052 + $0x38] sm:$0xff]
  %v1061 = vld [vmem:[%s1052 + $0x40] sm:$0x1]
  %v1062 = vperm.slane %v1061, 0
  %1063 = vmatpush.msra.mxu0 0.0
  %1064 = vmatpush.msra.mxu0 0.0
  %1065 = vmatpush.msra.mxu0 0.0
  %1066 = vmatpush.msra.mxu0 0.0
  %1067 = vmatpush.msra.mxu0 0.0
  %1068 = vmatpush.msra.mxu0 0.0
  %1069 = vmatpush.msra.mxu0 0.0
  %1070 = vmatpush.msra.mxu0 0.0
  %1071 = vmatpush.msra.mxu0 %v1060
  %1072 = vmatpush.msra.mxu0 %v1059
  %1073 = vmatpush.msra.mxu0 %v1058
  %1074 = vmatpush.msra.mxu0 %v1057
  %1075 = vmatpush.msra.mxu0 %v1056
  %1076 = vmatpush.msra.mxu0 %v1055
  %1077 = vmatpush.msra.mxu0 %v1054
  %1078 = vmatpush.msra.mxu0 %v1053
  %1079 = vmatmul.f32.gmra.mxu0 %v238
  %v1080 = vpop.f32.mrf.mxu0
  %v1081 = vadd.f32 %v1062, %v1080
  %1082 = vmatmul.f32.gmra.mxu0 %v241
  %v1083 = vpop.f32.mrf.mxu0
  %v1084 = vadd.f32 %v1062, %v1083
  %1085 = vdwg.mxu0
  %v1087 = vsel %vm334, %v1013, 0
  %v1090 = vsel %vm334, %v1016, 0
  %v1093 = vsel %vm334, %v1047, 0
  %v1096 = vsel %vm334, %v1050, 0
  %1098 = vmatpush.xpose.msra.mxu0 0.0
  %1099 = vmatpush.xpose.msra.mxu0 0.0
  %1100 = vmatpush.xpose.msra.mxu0 0.0
  %1101 = vmatpush.xpose.msra.mxu0 0.0
  %1102 = vmatpush.xpose.msra.mxu0 0.0
  %1103 = vmatpush.xpose.msra.mxu0 0.0
  %1104 = vmatpush.xpose.msra.mxu0 0.0
  %1105 = vmatpush.xpose.msra.mxu0 0.0
  %1106 = vmatpush.xpose.msra.mxu0 0.0
  %1107 = vmatpush.xpose.msra.mxu0 0.0
  %1108 = vmatpush.xpose.msra.mxu0 0.0
  %1109 = vmatpush.xpose.msra.mxu0 0.0
  %1110 = vmatpush.xpose.msra.mxu0 0.0
  %1111 = vmatpush.xpose.msra.mxu0 0.0
  %1112 = vmatpush.xpose.msra.mxu0 %v1096
  %1113 = vmatpush.xpose.msra.mxu0 %v1093
  %1114 = vmatmul.f32.gmra.mxu0 %v1087
  %v1115 = vpop.f32.mrf.mxu0
  %v1116 = vadd.f32 0.0, %v1115
  %1117 = vmatmul.f32.gmra.mxu0 %v1090
  %v1118 = vpop.f32.mrf.mxu0
  %v1119 = vadd.f32 0.0, %v1118
  %1120 = vdwg.mxu0
  %v1121 = vmul.f32 %v1116, 0.25
  %v1122 = vmul.f32 %v1119, 0.25
  %v1123 = vadd.f32 %v1121, %v224
  %v1124 = vadd.f32 %v1122, %v225
  %v1125 = vsel %vm334, %v1123, -inf
  %1126 = vmax.xlane.f32.xlu0 %v1125
  %v1127 = vpop.xlane.xlu0 %1126
  %v1128 = vsel %vm334, %v1124, -inf
  %1129 = vmax.xlane.f32.xlu0 %v1128
  %v1130 = vpop.xlane.xlu0 %1129
  %v1131 = vsub.f32 %v1123, %v1127
  %v1132 = vsub.f32 %v1124, %v1130
  %v1133 = vmul.f32 %v1131, 1.442695
  %v1134 = vpow.pop %v1133
  %v1135 = vmul.f32 %v1132, 1.442695
  %v1136 = vpow.pop %v1135
  %v1137 = vsel %vm334, %v1134, 0.0
  %1138 = vadd.xlane.f32.xlu0 %v1137
  %v1139 = vpop.xlane.xlu0 %1138
  %v1140 = vsel %vm334, %v1136, 0.0
  %1141 = vadd.xlane.f32.xlu0 %v1140
  %v1142 = vpop.xlane.xlu0 %1141
  %v1143 = vrcp.pop %v1139
  %v1144 = vmul.f32 %v1139, %v1143
  %v1145 = vsub.f32 1.0, %v1144
  %v1146 = vmul.f32 %v1143, %v1145
  %v1147 = vadd.f32 %v1143, %v1146
  %vm1148 = vweird.f32 %v1139
  %vm1149 = vweird.f32 %v1143
  %vm1150 = vmor %vm1148, %vm1149
  %v1151 = vsel %vm1150, %v1143, %v1147
  %v1152 = vand.u32 2147483647, %v1139
  %vm1153 = vcmp.eq.f32.partialorder %v1152, 8.507059e+37
  %v1154 = vand.u32 %v1139, 2147483648
  %v1155 = vor.u32 1.1754944e-38, %v1154
  %v1156 = vsel %vm1153, %v1155, %v1151
  %v1157 = vmul.f32 %v1134, %v1156
  %v1158 = vrcp.pop %v1142
  %v1159 = vmul.f32 %v1142, %v1158
  %v1160 = vsub.f32 1.0, %v1159
  %v1161 = vmul.f32 %v1158, %v1160
  %v1162 = vadd.f32 %v1158, %v1161
  %vm1163 = vweird.f32 %v1142
  %vm1164 = vweird.f32 %v1158
  %vm1165 = vmor %vm1163, %vm1164
  %v1166 = vsel %vm1165, %v1158, %v1162
  %v1167 = vand.u32 2147483647, %v1142
  %vm1168 = vcmp.eq.f32.partialorder %v1167, 8.507059e+37
  %v1169 = vand.u32 %v1142, 2147483648
  %v1170 = vor.u32 1.1754944e-38, %v1169
  %v1171 = vsel %vm1168, %v1170, %v1166
  %v1172 = vmul.f32 %v1136, %v1171
  %v1174 = vsel %vm334, %v1157, 0
  %v1177 = vsel %vm334, %v1172, 0
  %1179 = vmatpush.msra.mxu0 0.0
  %1180 = vmatpush.msra.mxu0 0.0
  %1181 = vmatpush.msra.mxu0 0.0
  %1182 = vmatpush.msra.mxu0 0.0
  %1183 = vmatpush.msra.mxu0 0.0
  %1184 = vmatpush.msra.mxu0 0.0
  %1185 = vmatpush.msra.mxu0 0.0
  %1186 = vmatpush.msra.mxu0 0.0
  %1187 = vmatpush.msra.mxu0 0.0
  %1188 = vmatpush.msra.mxu0 0.0
  %1189 = vmatpush.msra.mxu0 0.0
  %1190 = vmatpush.msra.mxu0 0.0
  %1191 = vmatpush.msra.mxu0 0.0
  %1192 = vmatpush.msra.mxu0 0.0
  %1193 = vmatpush.msra.mxu0 %v1084
  %1194 = vmatpush.msra.mxu0 %v1081
  %1195 = vmatmul.f32.gmra.mxu0 %v1174
  %v1196 = vpop.f32.mrf.mxu0
  %v1197 = vadd.f32 0.0, %v1196
  %1198 = vmatmul.f32.gmra.mxu0 %v1177
  %v1199 = vpop.f32.mrf.mxu0
  %v1200 = vadd.f32 0.0, %v1199
  %1201 = vdwg.mxu0
  %s1202 = scalar_lea.vmem %s5, 48
  %v1203 = vld [vmem:[%s1202] sm:$0xff]
  %v1204 = vld [vmem:[%s1202 + $0x8] sm:$0xff]
  %v1206 = vsel %vm334, %v1197, 0
  %v1209 = vsel %vm334, %v1200, 0
  %1211 = vmatpush.msra.mxu0 0.0
  %1212 = vmatpush.msra.mxu0 0.0
  %1213 = vmatpush.msra.mxu0 0.0
  %1214 = vmatpush.msra.mxu0 0.0
  %1215 = vmatpush.msra.mxu0 0.0
  %1216 = vmatpush.msra.mxu0 0.0
  %1217 = vmatpush.msra.mxu0 0.0
  %1218 = vmatpush.msra.mxu0 0.0
  %1219 = vmatpush.msra.mxu0 0.0
  %1220 = vmatpush.msra.mxu0 0.0
  %1221 = vmatpush.msra.mxu0 0.0
  %1222 = vmatpush.msra.mxu0 0.0
  %1223 = vmatpush.msra.mxu0 0.0
  %1224 = vmatpush.msra.mxu0 0.0
  %1225 = vmatpush.msra.mxu0 %v1204
  %1226 = vmatpush.msra.mxu0 %v1203
  %1227 = vmatmul.f32.gmra.mxu0 %v1206
  %v1228 = vpop.f32.mrf.mxu0
  %v1229 = vadd.f32 0.0, %v1228
  %1230 = vmatmul.f32.gmra.mxu0 %v1209
  %v1231 = vpop.f32.mrf.mxu0
  %v1232 = vadd.f32 0.0, %v1231
  %1233 = vdwg.mxu0
  %v1234 = vadd.f32 %v982, %v1229
  %v1235 = vadd.f32 %v983, %v1232
  %v1236 = vld [vmem:[%s7 + $0x9] sm:$0x1]
  %v1237 = vperm.slane %v1236, 0
  %v1238 = vadd.f32 %v1234, %v1237
  %v1239 = vadd.f32 %v1235, %v1237
  %v1240 = vadd.f32 %v1238, %v219
  %v1241 = vadd.f32 %v1239, %v222
  %v1242 = vld [vmem:[%s7 + $0xa] sm:$0x1]
  %v1243 = vld [vmem:[%s7 + $0xb] sm:$0x1]
  %v1244 = vsel %vm236, %v1240, 0.0
  %1245 = vadd.xlane.f32.xlu0 %v1244
  %v1246 = vpop.xlane.xlu0 %1245
  %v1247 = vsel %vm236, %v1241, 0.0
  %1248 = vadd.xlane.f32.xlu0 %v1247
  %v1249 = vpop.xlane.xlu0 %1248
  %v1250 = vrcp.pop 64.0
  %v1251 = vmul.f32 64.0, %v1250
  %v1252 = vsub.f32 1.0, %v1251
  %v1253 = vmul.f32 %v1250, %v1252
  %v1254 = vadd.f32 %v1250, %v1253
  %vm1255 = vweird.f32 %v1250
  %v1256 = vsel %vm1255, %v1250, %v1254
  %v1257 = vmul.f32 %v1246, %v1256
  %v1258 = vmul.f32 %v1249, %v1256
  %v1259 = vsub.f32 %v1240, %v1257
  %v1260 = vsub.f32 %v1241, %v1258
  %v1261 = vmul.f32 %v1259, %v1259
  %v1262 = vmul.f32 %v1260, %v1260
  %v1263 = vsel %vm236, %v1261, 0.0
  %1264 = vadd.xlane.f32.xlu0 %v1263
  %v1265 = vpop.xlane.xlu0 %1264
  %v1266 = vsel %vm236, %v1262, 0.0
  %1267 = vadd.xlane.f32.xlu0 %v1266
  %v1268 = vpop.xlane.xlu0 %1267
  %v1269 = vmul.f32 %v1265, %v1256
  %v1270 = vmul.f32 %v1268, %v1256
  %v1271 = vadd.f32 %v1269, 1e-12
  %v1272 = vadd.f32 %v1270, 1e-12
  %v1273 = vrsqrt.pop %v1271
  %v1274 = vmul.f32 %v1273, %v1271
  %v1275 = vmul.f32 %v1274, %v1273
  %v1276 = vmul.f32 0.5, %v1275
  %v1277 = vsub.f32 1.5, %v1276
  %v1278 = vmul.f32 %v1273, %v1277
  %vm1279 = vweird.f32 %v1271
  %vm1280 = vweird.f32 %v1273
  %vm1281 = vmor %vm1279, %vm1280
  %v1282 = vsel %vm1281, %v1273, %v1278
  %v1283 = vrsqrt.pop %v1272
  %v1284 = vmul.f32 %v1283, %v1272
  %v1285 = vmul.f32 %v1284, %v1283
  %v1286 = vmul.f32 0.5, %v1285
  %v1287 = vsub.f32 1.5, %v1286
  %v1288 = vmul.f32 %v1283, %v1287
  %vm1289 = vweird.f32 %v1272
  %vm1290 = vweird.f32 %v1283
  %vm1291 = vmor %vm1289, %vm1290
  %v1292 = vsel %vm1291, %v1283, %v1288
  %v1293 = vmul.f32 %v1259, %v1282
  %v1294 = vmul.f32 %v1260, %v1292
  %v1295 = vperm.slane %v1242, 0
  %v1296 = vmul.f32 %v1293, %v1295
  %v1297 = vmul.f32 %v1294, %v1295
  %v1298 = vperm.slane %v1243, 0
  %v1299 = vadd.f32 %v1296, %v1298
  %v1300 = vadd.f32 %v1297, %v1298
  %v1301 = vld [vmem:[%s6] sm:$0xff]
  %v1302 = vld [vmem:[%s6 + $0x8] sm:$0xff]
  %v1303 = vld [vmem:[%s6 + $0x10] sm:$0xff]
  %v1304 = vld [vmem:[%s6 + $0x18] sm:$0xff]
  %v1305 = vld [vmem:[%s6 + $0x20] sm:$0xff]
  %v1306 = vld [vmem:[%s6 + $0x28] sm:$0xff]
  %v1307 = vld [vmem:[%s6 + $0x30] sm:$0xff]
  %v1308 = vld [vmem:[%s6 + $0x38] sm:$0xff]
  %v1309 = vld [vmem:[%s7 + $0xc] sm:$0x1]
  %v1310 = vperm.slane %v1309, 0
  %v1312 = vsel %vm236, %v1299, 0
  %v1315 = vsel %vm236, %v1300, 0
  %1317 = vmatpush.msra.mxu0 0.0
  %1318 = vmatpush.msra.mxu0 0.0
  %1319 = vmatpush.msra.mxu0 0.0
  %1320 = vmatpush.msra.mxu0 0.0
  %1321 = vmatpush.msra.mxu0 0.0
  %1322 = vmatpush.msra.mxu0 0.0
  %1323 = vmatpush.msra.mxu0 0.0
  %1324 = vmatpush.msra.mxu0 0.0
  %1325 = vmatpush.msra.mxu0 %v1308
  %1326 = vmatpush.msra.mxu0 %v1307
  %1327 = vmatpush.msra.mxu0 %v1306
  %1328 = vmatpush.msra.mxu0 %v1305
  %1329 = vmatpush.msra.mxu0 %v1304
  %1330 = vmatpush.msra.mxu0 %v1303
  %1331 = vmatpush.msra.mxu0 %v1302
  %1332 = vmatpush.msra.mxu0 %v1301
  %1333 = vmatmul.f32.gmra.mxu0 %v1312
  %v1334 = vpop.f32.mrf.mxu0
  %v1335 = vadd.f32 %v1310, %v1334
  %1336 = vmatmul.f32.gmra.mxu0 %v1315
  %v1337 = vpop.f32.mrf.mxu0
  %v1338 = vadd.f32 %v1310, %v1337
  %1339 = vdwg.mxu0
  %v1340 = vmul.f32 %v1335, %v1335
  %v1341 = vmul.f32 %v1338, %v1338
  %v1342 = vmul.f32 %v1335, %v1340
  %v1343 = vmul.f32 %v1338, %v1341
  %v1344 = vmul.f32 %v1342, 0.044715
  %v1345 = vmul.f32 %v1343, 0.044715
  %v1346 = vadd.f32 %v1335, %v1344
  %v1347 = vadd.f32 %v1338, %v1345
  %v1348 = vmul.f32 %v1346, 0.7978846
  %v1349 = vmul.f32 %v1347, 0.7978846
  %v1350 = vtanh.pop %v1348
  %v1351 = vtanh.pop %v1349
  %v1352 = vadd.f32 %v1350, 1.0
  %v1353 = vadd.f32 %v1351, 1.0
  %v1354 = vmul.f32 %v1352, 0.5
  %v1355 = vmul.f32 %v1353, 0.5
  %v1356 = vmul.f32 %v1335, %v1354
  %v1357 = vmul.f32 %v1338, %v1355
  %v1358 = vld [vmem:[%s6 + $0x40] sm:$0xff]
  %v1359 = vld [vmem:[%s6 + $0x48] sm:$0xff]
  %v1360 = vld [vmem:[%s6 + $0x50] sm:$0xff]
  %v1361 = vld [vmem:[%s6 + $0x58] sm:$0xff]
  %v1362 = vld [vmem:[%s6 + $0x60] sm:$0xff]
  %v1363 = vld [vmem:[%s6 + $0x68] sm:$0xff]
  %v1364 = vld [vmem:[%s6 + $0x70] sm:$0xff]
  %v1365 = vld [vmem:[%s6 + $0x78] sm:$0xff]
  %v1366 = vld [vmem:[%s6 + $0x80] sm:$0xff]
  %v1367 = vld [vmem:[%s6 + $0x88] sm:$0xff]
  %v1368 = vld [vmem:[%s6 + $0x90] sm:$0xff]
  %v1369 = vld [vmem:[%s6 + $0x98] sm:$0xff]
  %v1370 = vld [vmem:[%s6 + $0xa0] sm:$0xff]
  %v1371 = vld [vmem:[%s6 + $0xa8] sm:$0xff]
  %v1372 = vld [vmem:[%s6 + $0xb0] sm:$0xff]
  %v1373 = vld [vmem:[%s6 + $0xb8] sm:$0xff]
  %v1374 = vld [vmem:[%s7 + $0xd] sm:$0x1]
  %v1375 = vperm.slane %v1374, 0
  %1376 = vmatpush.msra.mxu0 %v1373
  %1377 = vmatpush.msra.mxu0 %v1372
  %1378 = vmatpush.msra.mxu0 %v1371
  %1379 = vmatpush.msra.mxu0 %v1370
  %1380 = vmatpush.msra.mxu0 %v1369
  %1381 = vmatpush.msra.mxu0 %v1368
  %1382 = vmatpush.msra.mxu0 %v1367
  %1383 = vmatpush.msra.mxu0 %v1366
  %1384 = vmatpush.msra.mxu0 %v1365
  %1385 = vmatpush.msra.mxu0 %v1364
  %1386 = vmatpush.msra.mxu0 %v1363
  %1387 = vmatpush.msra.mxu0 %v1362
  %1388 = vmatpush.msra.mxu0 %v1361
  %1389 = vmatpush.msra.mxu0 %v1360
  %1390 = vmatpush.msra.mxu0 %v1359
  %1391 = vmatpush.msra.mxu0 %v1358
  %1392 = vmatmul.f32.gmra.mxu0 %v1356
  %v1393 = vpop.f32.mrf.mxu0
  %v1394 = vadd.f32 %v1375, %v1393
  %1395 = vmatmul.f32.gmra.mxu0 %v1357
  %v1396 = vpop.f32.mrf.mxu0
  %v1397 = vadd.f32 %v1375, %v1396
  %1398 = vdwg.mxu0
  %v1399 = vadd.f32 %v1394, %v1299
  %v1400 = vadd.f32 %v1397, %v1300
  %v1401 = vld [vmem:[%s7 + $0xe] sm:$0x1]
  %v1402 = vld [vmem:[%s7 + $0xf] sm:$0x1]
  %v1403 = vsel %vm236, %v1399, 0.0
  %1404 = vadd.xlane.f32.xlu0 %v1403
  %v1405 = vpop.xlane.xlu0 %1404
  %v1406 = vsel %vm236, %v1400, 0.0
  %1407 = vadd.xlane.f32.xlu0 %v1406
  %v1408 = vpop.xlane.xlu0 %1407
  %v1409 = vmul.f32 %v1405, %v1256
  %v1410 = vmul.f32 %v1408, %v1256
  %v1411 = vsub.f32 %v1399, %v1409
  %v1412 = vsub.f32 %v1400, %v1410
  %v1413 = vmul.f32 %v1411, %v1411
  %v1414 = vmul.f32 %v1412, %v1412
  %v1415 = vsel %vm236, %v1413, 0.0
  %1416 = vadd.xlane.f32.xlu0 %v1415
  %v1417 = vpop.xlane.xlu0 %1416
  %v1418 = vsel %vm236, %v1414, 0.0
  %1419 = vadd.xlane.f32.xlu0 %v1418
  %v1420 = vpop.xlane.xlu0 %1419
  %v1421 = vmul.f32 %v1417, %v1256
  %v1422 = vmul.f32 %v1420, %v1256
  %v1423 = vadd.f32 %v1421, 1e-12
  %v1424 = vadd.f32 %v1422, 1e-12
  %v1425 = vrsqrt.pop %v1423
  %v1426 = vmul.f32 %v1425, %v1423
  %v1427 = vmul.f32 %v1426, %v1425
  %v1428 = vmul.f32 0.5, %v1427
  %v1429 = vsub.f32 1.5, %v1428
  %v1430 = vmul.f32 %v1425, %v1429
  %vm1431 = vweird.f32 %v1423
  %vm1432 = vweird.f32 %v1425
  %vm1433 = vmor %vm1431, %vm1432
  %v1434 = vsel %vm1433, %v1425, %v1430
  %v1435 = vrsqrt.pop %v1424
  %v1436 = vmul.f32 %v1435, %v1424
  %v1437 = vmul.f32 %v1436, %v1435
  %v1438 = vmul.f32 0.5, %v1437
  %v1439 = vsub.f32 1.5, %v1438
  %v1440 = vmul.f32 %v1435, %v1439
  %vm1441 = vweird.f32 %v1424
  %vm1442 = vweird.f32 %v1435
  %vm1443 = vmor %vm1441, %vm1442
  %v1444 = vsel %vm1443, %v1435, %v1440
  %v1445 = vmul.f32 %v1411, %v1434
  %v1446 = vmul.f32 %v1412, %v1444
  %v1447 = vperm.slane %v1401, 0
  %v1448 = vmul.f32 %v1445, %v1447
  %v1449 = vmul.f32 %v1446, %v1447
  %v1450 = vperm.slane %v1402, 0
  %v1451 = vadd.f32 %v1448, %v1450
  %v1452 = vadd.f32 %v1449, %v1450
  %s1453 = scalar_lea.vmem %s4, 864
  %v1454 = vld [vmem:[%s1453] sm:$0xff]
  %v1455 = vld [vmem:[%s1453 + $0x8] sm:$0xff]
  %v1456 = vld [vmem:[%s1453 + $0x10] sm:$0xff]
  %v1457 = vld [vmem:[%s1453 + $0x18] sm:$0xff]
  %v1458 = vld [vmem:[%s1453 + $0x20] sm:$0xff]
  %v1459 = vld [vmem:[%s1453 + $0x28] sm:$0xff]
  %v1460 = vld [vmem:[%s1453 + $0x30] sm:$0xff]
  %v1461 = vld [vmem:[%s1453 + $0x38] sm:$0xff]
  %v1462 = vld [vmem:[%s1453 + $0x40] sm:$0x1]
  %v1463 = vperm.slane %v1462, 0
  %v1465 = vsel %vm236, %v1451, 0
  %v1468 = vsel %vm236, %v1452, 0
  %1470 = vmatpush.msra.mxu0 0.0
  %1471 = vmatpush.msra.mxu0 0.0
  %1472 = vmatpush.msra.mxu0 0.0
  %1473 = vmatpush.msra.mxu0 0.0
  %1474 = vmatpush.msra.mxu0 0.0
  %1475 = vmatpush.msra.mxu0 0.0
  %1476 = vmatpush.msra.mxu0 0.0
  %1477 = vmatpush.msra.mxu0 0.0
  %1478 = vmatpush.msra.mxu0 %v1461
  %1479 = vmatpush.msra.mxu0 %v1460
  %1480 = vmatpush.msra.mxu0 %v1459
  %1481 = vmatpush.msra.mxu0 %v1458
  %1482 = vmatpush.msra.mxu0 %v1457
  %1483 = vmatpush.msra.mxu0 %v1456
  %1484 = vmatpush.msra.mxu0 %v1455
  %1485 = vmatpush.msra.mxu0 %v1454
  %1486 = vmatmul.f32.gmra.mxu0 %v1465
  %v1487 = vpop.f32.mrf.mxu0
  %v1488 = vadd.f32 %v1463, %v1487
  %1489 = vmatmul.f32.gmra.mxu0 %v1468
  %v1490 = vpop.f32.mrf.mxu0
  %v1491 = vadd.f32 %v1463, %v1490
  %1492 = vdwg.mxu0
  %s1493 = scalar_lea.vmem %s4, 1152
  %v1494 = vld [vmem:[%s1493] sm:$0xff]
  %v1495 = vld [vmem:[%s1493 + $0x8] sm:$0xff]
  %v1496 = vld [vmem:[%s1493 + $0x10] sm:$0xff]
  %v1497 = vld [vmem:[%s1493 + $0x18] sm:$0xff]
  %v1498 = vld [vmem:[%s1493 + $0x20] sm:$0xff]
  %v1499 = vld [vmem:[%s1493 + $0x28] sm:$0xff]
  %v1500 = vld [vmem:[%s1493 + $0x30] sm:$0xff]
  %v1501 = vld [vmem:[%s1493 + $0x38] sm:$0xff]
  %v1502 = vld [vmem:[%s1493 + $0x40] sm:$0x1]
  %v1503 = vperm.slane %v1502, 0
  %1504 = vmatpush.msra.mxu0 0.0
  %1505 = vmatpush.msra.mxu0 0.0
  %1506 = vmatpush.msra.mxu0 0.0
  %1507 = vmatpush.msra.mxu0 0.0
  %1508 = vmatpush.msra.mxu0 0.0
  %1509 = vmatpush.msra.mxu0 0.0
  %1510 = vmatpush.msra.mxu0 0.0
  %1511 = vmatpush.msra.mxu0 0.0
  %1512 = vmatpush.msra.mxu0 %v1501
  %1513 = vmatpush.msra.mxu0 %v1500
  %1514 = vmatpush.msra.mxu0 %v1499
  %1515 = vmatpush.msra.mxu0 %v1498
  %1516 = vmatpush.msra.mxu0 %v1497
  %1517 = vmatpush.msra.mxu0 %v1496
  %1518 = vmatpush.msra.mxu0 %v1495
  %1519 = vmatpush.msra.mxu0 %v1494
  %1520 = vmatmul.f32.gmra.mxu0 %v1465
  %v1521 = vpop.f32.mrf.mxu0
  %v1522 = vadd.f32 %v1503, %v1521
  %1523 = vmatmul.f32.gmra.mxu0 %v1468
  %v1524 = vpop.f32.mrf.mxu0
  %v1525 = vadd.f32 %v1503, %v1524
  %1526 = vdwg.mxu0
  %s1527 = scalar_lea.vmem %s4, 1440
  %v1528 = vld [vmem:[%s1527] sm:$0xff]
  %v1529 = vld [vmem:[%s1527 + $0x8] sm:$0xff]
  %v1530 = vld [vmem:[%s1527 + $0x10] sm:$0xff]
  %v1531 = vld [vmem:[%s1527 + $0x18] sm:$0xff]
  %v1532 = vld [vmem:[%s1527 + $0x20] sm:$0xff]
  %v1533 = vld [vmem:[%s1527 + $0x28] sm:$0xff]
  %v1534 = vld [vmem:[%s1527 + $0x30] sm:$0xff]
  %v1535 = vld [vmem:[%s1527 + $0x38] sm:$0xff]
  %v1536 = vld [vmem:[%s1527 + $0x40] sm:$0x1]
  %v1537 = vperm.slane %v1536, 0
  %1538 = vmatpush.msra.mxu0 0.0
  %1539 = vmatpush.msra.mxu0 0.0
  %1540 = vmatpush.msra.mxu0 0.0
  %1541 = vmatpush.msra.mxu0 0.0
  %1542 = vmatpush.msra.mxu0 0.0
  %1543 = vmatpush.msra.mxu0 0.0
  %1544 = vmatpush.msra.mxu0 0.0
  %1545 = vmatpush.msra.mxu0 0.0
  %1546 = vmatpush.msra.mxu0 %v1535
  %1547 = vmatpush.msra.mxu0 %v1534
  %1548 = vmatpush.msra.mxu0 %v1533
  %1549 = vmatpush.msra.mxu0 %v1532
  %1550 = vmatpush.msra.mxu0 %v1531
  %1551 = vmatpush.msra.mxu0 %v1530
  %1552 = vmatpush.msra.mxu0 %v1529
  %1553 = vmatpush.msra.mxu0 %v1528
  %1554 = vmatmul.f32.gmra.mxu0 %v1465
  %v1555 = vpop.f32.mrf.mxu0
  %v1556 = vadd.f32 %v1537, %v1555
  %1557 = vmatmul.f32.gmra.mxu0 %v1468
  %v1558 = vpop.f32.mrf.mxu0
  %v1559 = vadd.f32 %v1537, %v1558
  %1560 = vdwg.mxu0
  %v1562 = vsel %vm334, %v1488, 0
  %v1565 = vsel %vm334, %v1491, 0
  %v1568 = vsel %vm334, %v1522, 0
  %v1571 = vsel %vm334, %v1525, 0
  %1573 = vmatpush.xpose.msra.mxu0 0.0
  %1574 = vmatpush.xpose.msra.mxu0 0.0
  %1575 = vmatpush.xpose.msra.mxu0 0.0
  %1576 = vmatpush.xpose.msra.mxu0 0.0
  %1577 = vmatpush.xpose.msra.mxu0 0.0
  %1578 = vmatpush.xpose.msra.mxu0 0.0
  %1579 = vmatpush.xpose.msra.mxu0 0.0
  %1580 = vmatpush.xpose.msra.mxu0 0.0
  %1581 = vmatpush.xpose.msra.mxu0 0.0
  %1582 = vmatpush.xpose.msra.mxu0 0.0
  %1583 = vmatpush.xpose.msra.mxu0 0.0
  %1584 = vmatpush.xpose.msra.mxu0 0.0
  %1585 = vmatpush.xpose.msra.mxu0 0.0
  %1586 = vmatpush.xpose.msra.mxu0 0.0
  %1587 = vmatpush.xpose.msra.mxu0 %v1571
  %1588 = vmatpush.xpose.msra.mxu0 %v1568
  %1589 = vmatmul.f32.gmra.mxu0 %v1562
  %v1590 = vpop.f32.mrf.mxu0
  %v1591 = vadd.f32 0.0, %v1590
  %1592 = vmatmul.f32.gmra.mxu0 %v1565
  %v1593 = vpop.f32.mrf.mxu0
  %v1594 = vadd.f32 0.0, %v1593
  %1595 = vdwg.mxu0
  %v1596 = vmul.f32 %v1591, 0.25
  %v1597 = vmul.f32 %v1594, 0.25
  %v1598 = vadd.f32 %v1596, %v224
  %v1599 = vadd.f32 %v1597, %v225
  %v1600 = vsel %vm334, %v1598, -inf
  %1601 = vmax.xlane.f32.xlu0 %v1600
  %v1602 = vpop.xlane.xlu0 %1601
  %v1603 = vsel %vm334, %v1599, -inf
  %1604 = vmax.xlane.f32.xlu0 %v1603
  %v1605 = vpop.xlane.xlu0 %1604
  %v1606 = vsub.f32 %v1598, %v1602
  %v1607 = vsub.f32 %v1599, %v1605
  %v1608 = vmul.f32 %v1606, 1.442695
  %v1609 = vpow.pop %v1608
  %v1610 = vmul.f32 %v1607, 1.442695
  %v1611 = vpow.pop %v1610
  %v1612 = vsel %vm334, %v1609, 0.0
  %1613 = vadd.xlane.f32.xlu0 %v1612
  %v1614 = vpop.xlane.xlu0 %1613
  %v1615 = vsel %vm334, %v1611, 0.0
  %1616 = vadd.xlane.f32.xlu0 %v1615
  %v1617 = vpop.xlane.xlu0 %1616
  %v1618 = vrcp.pop %v1614
  %v1619 = vmul.f32 %v1614, %v1618
  %v1620 = vsub.f32 1.0, %v1619
  %v1621 = vmul.f32 %v1618, %v1620
  %v1622 = vadd.f32 %v1618, %v1621
  %vm1623 = vweird.f32 %v1614
  %vm1624 = vweird.f32 %v1618
  %vm1625 = vmor %vm1623, %vm1624
  %v1626 = vsel %vm1625, %v1618, %v1622
  %v1627 = vand.u32 2147483647, %v1614
  %vm1628 = vcmp.eq.f32.partialorder %v1627, 8.507059e+37
  %v1629 = vand.u32 %v1614, 2147483648
  %v1630 = vor.u32 1.1754944e-38, %v1629
  %v1631 = vsel %vm1628, %v1630, %v1626
  %v1632 = vmul.f32 %v1609, %v1631
  %v1633 = vrcp.pop %v1617
  %v1634 = vmul.f32 %v1617, %v1633
  %v1635 = vsub.f32 1.0, %v1634
  %v1636 = vmul.f32 %v1633, %v1635
  %v1637 = vadd.f32 %v1633, %v1636
  %vm1638 = vweird.f32 %v1617
  %vm1639 = vweird.f32 %v1633
  %vm1640 = vmor %vm1638, %vm1639
  %v1641 = vsel %vm1640, %v1633, %v1637
  %v1642 = vand.u32 2147483647, %v1617
  %vm1643 = vcmp.eq.f32.partialorder %v1642, 8.507059e+37
  %v1644 = vand.u32 %v1617, 2147483648
  %v1645 = vor.u32 1.1754944e-38, %v1644
  %v1646 = vsel %vm1643, %v1645, %v1641
  %v1647 = vmul.f32 %v1611, %v1646
  %v1649 = vsel %vm334, %v1632, 0
  %v1652 = vsel %vm334, %v1647, 0
  %1654 = vmatpush.msra.mxu0 0.0
  %1655 = vmatpush.msra.mxu0 0.0
  %1656 = vmatpush.msra.mxu0 0.0
  %1657 = vmatpush.msra.mxu0 0.0
  %1658 = vmatpush.msra.mxu0 0.0
  %1659 = vmatpush.msra.mxu0 0.0
  %1660 = vmatpush.msra.mxu0 0.0
  %1661 = vmatpush.msra.mxu0 0.0
  %1662 = vmatpush.msra.mxu0 0.0
  %1663 = vmatpush.msra.mxu0 0.0
  %1664 = vmatpush.msra.mxu0 0.0
  %1665 = vmatpush.msra.mxu0 0.0
  %1666 = vmatpush.msra.mxu0 0.0
  %1667 = vmatpush.msra.mxu0 0.0
  %1668 = vmatpush.msra.mxu0 %v1559
  %1669 = vmatpush.msra.mxu0 %v1556
  %1670 = vmatmul.f32.gmra.mxu0 %v1649
  %v1671 = vpop.f32.mrf.mxu0
  %v1672 = vadd.f32 0.0, %v1671
  %1673 = vmatmul.f32.gmra.mxu0 %v1652
  %v1674 = vpop.f32.mrf.mxu0
  %v1675 = vadd.f32 0.0, %v1674
  %1676 = vdwg.mxu0
  %s1677 = scalar_lea.vmem %s5, 64
  %v1678 = vld [vmem:[%s1677] sm:$0xff]
  %v1679 = vld [vmem:[%s1677 + $0x8] sm:$0xff]
  %s1680 = scalar_lea.vmem %s4, 936
  %v1681 = vld [vmem:[%s1680] sm:$0xff]
  %v1682 = vld [vmem:[%s1680 + $0x8] sm:$0xff]
  %v1683 = vld [vmem:[%s1680 + $0x10] sm:$0xff]
  %v1684 = vld [vmem:[%s1680 + $0x18] sm:$0xff]
  %v1685 = vld [vmem:[%s1680 + $0x20] sm:$0xff]
  %v1686 = vld [vmem:[%s1680 + $0x28] sm:$0xff]
  %v1687 = vld [vmem:[%s1680 + $0x30] sm:$0xff]
  %v1688 = vld [vmem:[%s1680 + $0x38] sm:$0xff]
  %v1689 = vld [vmem:[%s1680 + $0x40] sm:$0x1]
  %v1690 = vperm.slane %v1689, 0
  %1691 = vmatpush.msra.mxu0 0.0
  %1692 = vmatpush.msra.mxu0 0.0
  %1693 = vmatpush.msra.mxu0 0.0
  %1694 = vmatpush.msra.mxu0 0.0
  %1695 = vmatpush.msra.mxu0 0.0
  %1696 = vmatpush.msra.mxu0 0.0
  %1697 = vmatpush.msra.mxu0 0.0
  %1698 = vmatpush.msra.mxu0 0.0
  %1699 = vmatpush.msra.mxu0 %v1688
  %1700 = vmatpush.msra.mxu0 %v1687
  %1701 = vmatpush.msra.mxu0 %v1686
  %1702 = vmatpush.msra.mxu0 %v1685
  %1703 = vmatpush.msra.mxu0 %v1684
  %1704 = vmatpush.msra.mxu0 %v1683
  %1705 = vmatpush.msra.mxu0 %v1682
  %1706 = vmatpush.msra.mxu0 %v1681
  %1707 = vmatmul.f32.gmra.mxu0 %v1465
  %v1708 = vpop.f32.mrf.mxu0
  %v1709 = vadd.f32 %v1690, %v1708
  %1710 = vmatmul.f32.gmra.mxu0 %v1468
  %v1711 = vpop.f32.mrf.mxu0
  %v1712 = vadd.f32 %v1690, %v1711
  %1713 = vdwg.mxu0
  %s1714 = scalar_lea.vmem %s4, 1224
  %v1715 = vld [vmem:[%s1714] sm:$0xff]
  %v1716 = vld [vmem:[%s1714 + $0x8] sm:$0xff]
  %v1717 = vld [vmem:[%s1714 + $0x10] sm:$0xff]
  %v1718 = vld [vmem:[%s1714 + $0x18] sm:$0xff]
  %v1719 = vld [vmem:[%s1714 + $0x20] sm:$0xff]
  %v1720 = vld [vmem:[%s1714 + $0x28] sm:$0xff]
  %v1721 = vld [vmem:[%s1714 + $0x30] sm:$0xff]
  %v1722 = vld [vmem:[%s1714 + $0x38] sm:$0xff]
  %v1723 = vld [vmem:[%s1714 + $0x40] sm:$0x1]
  %v1724 = vperm.slane %v1723, 0
  %1725 = vmatpush.msra.mxu0 0.0
  %1726 = vmatpush.msra.mxu0 0.0
  %1727 = vmatpush.msra.mxu0 0.0
  %1728 = vmatpush.msra.mxu0 0.0
  %1729 = vmatpush.msra.mxu0 0.0
  %1730 = vmatpush.msra.mxu0 0.0
  %1731 = vmatpush.msra.mxu0 0.0
  %1732 = vmatpush.msra.mxu0 0.0
  %1733 = vmatpush.msra.mxu0 %v1722
  %1734 = vmatpush.msra.mxu0 %v1721
  %1735 = vmatpush.msra.mxu0 %v1720
  %1736 = vmatpush.msra.mxu0 %v1719
  %1737 = vmatpush.msra.mxu0 %v1718
  %1738 = vmatpush.msra.mxu0 %v1717
  %1739 = vmatpush.msra.mxu0 %v1716
  %1740 = vmatpush.msra.mxu0 %v1715
  %1741 = vmatmul.f32.gmra.mxu0 %v1465
  %v1742 = vpop.f32.mrf.mxu0
  %v1743 = vadd.f32 %v1724, %v1742
  %1744 = vmatmul.f32.gmra.mxu0 %v1468
  %v1745 = vpop.f32.mrf.mxu0
  %v1746 = vadd.f32 %v1724, %v1745
  %1747 = vdwg.mxu0
  %s1748 = scalar_lea.vmem %s4, 1512
  %v1749 = vld [vmem:[%s1748] sm:$0xff]
  %v1750 = vld [vmem:[%s1748 + $0x8] sm:$0xff]
  %v1751 = vld [vmem:[%s1748 + $0x10] sm:$0xff]
  %v1752 = vld [vmem:[%s1748 + $0x18] sm:$0xff]
  %v1753 = vld [vmem:[%s1748 + $0x20] sm:$0xff]
  %v1754 = vld [vmem:[%s1748 + $0x28] sm:$0xff]
  %v1755 = vld [vmem:[%s1748 + $0x30] sm:$0xff]
  %v1756 = vld [vmem:[%s1748 + $0x38] sm:$0xff]
  %v1757 = vld [vmem:[%s1748 + $0x40] sm:$0x1]
  %v1758 = vperm.slane %v1757, 0
  %1759 = vmatpush.msra.mxu0 0.0
  %1760 = vmatpush.msra.mxu0 0.0
  %1761 = vmatpush.msra.mxu0 0.0
  %1762 = vmatpush.msra.mxu0 0.0
  %1763 = vmatpush.msra.mxu0 0.0
  %1764 = vmatpush.msra.mxu0 0.0
  %1765 = vmatpush.msra.mxu0 0.0
  %1766 = vmatpush.msra.mxu0 0.0
  %1767 = vmatpush.msra.mxu0 %v1756
  %1768 = vmatpush.msra.mxu0 %v1755
  %1769 = vmatpush.msra.mxu0 %v1754
  %1770 = vmatpush.msra.mxu0 %v1753
  %1771 = vmatpush.msra.mxu0 %v1752
  %1772 = vmatpush.msra.mxu0 %v1751
  %1773 = vmatpush.msra.mxu0 %v1750
  %1774 = vmatpush.msra.mxu0 %v1749
  %1775 = vmatmul.f32.gmra.mxu0 %v1465
  %v1776 = vpop.f32.mrf.mxu0
  %v1777 = vadd.f32 %v1758, %v1776
  %1778 = vmatmul.f32.gmra.mxu0 %v1468
  %v1779 = vpop.f32.mrf.mxu0
  %v1780 = vadd.f32 %v1758, %v1779
  %1781 = vdwg.mxu0
  %v1783 = vsel %vm334, %v1709, 0
  %v1786 = vsel %vm334, %v1712, 0
  %v1789 = vsel %vm334, %v1743, 0
  %v1792 = vsel %vm334, %v1746, 0
  %1794 = vmatpush.xpose.msra.mxu0 0.0
  %1795 = vmatpush.xpose.msra.mxu0 0.0
  %1796 = vmatpush.xpose.msra.mxu0 0.0
  %1797 = vmatpush.xpose.msra.mxu0 0.0
  %1798 = vmatpush.xpose.msra.mxu0 0.0
  %1799 = vmatpush.xpose.msra.mxu0 0.0
  %1800 = vmatpush.xpose.msra.mxu0 0.0
  %1801 = vmatpush.xpose.msra.mxu0 0.0
  %1802 = vmatpush.xpose.msra.mxu0 0.0
  %1803 = vmatpush.xpose.msra.mxu0 0.0
  %1804 = vmatpush.xpose.msra.mxu0 0.0
  %1805 = vmatpush.xpose.msra.mxu0 0.0
  %1806 = vmatpush.xpose.msra.mxu0 0.0
  %1807 = vmatpush.xpose.msra.mxu0 0.0
  %1808 = vmatpush.xpose.msra.mxu0 %v1792
  %1809 = vmatpush.xpose.msra.mxu0 %v1789
  %1810 = vmatmul.f32.gmra.mxu0 %v1783
  %v1811 = vpop.f32.mrf.mxu0
  %v1812 = vadd.f32 0.0, %v1811
  %1813 = vmatmul.f32.gmra.mxu0 %v1786
  %v1814 = vpop.f32.mrf.mxu0
  %v1815 = vadd.f32 0.0, %v1814
  %1816 = vdwg.mxu0
  %v1817 = vmul.f32 %v1812, 0.25
  %v1818 = vmul.f32 %v1815, 0.25
  %v1819 = vadd.f32 %v1817, %v224
  %v1820 = vadd.f32 %v1818, %v225
  %v1821 = vsel %vm334, %v1819, -inf
  %1822 = vmax.xlane.f32.xlu0 %v1821
  %v1823 = vpop.xlane.xlu0 %1822
  %v1824 = vsel %vm334, %v1820, -inf
  %1825 = vmax.xlane.f32.xlu0 %v1824
  %v1826 = vpop.xlane.xlu0 %1825
  %v1827 = vsub.f32 %v1819, %v1823
  %v1828 = vsub.f32 %v1820, %v1826
  %v1829 = vmul.f32 %v1827, 1.442695
  %v1830 = vpow.pop %v1829
  %v1831 = vmul.f32 %v1828, 1.442695
  %v1832 = vpow.pop %v1831
  %v1833 = vsel %vm334, %v1830, 0.0
  %1834 = vadd.xlane.f32.xlu0 %v1833
  %v1835 = vpop.xlane.xlu0 %1834
  %v1836 = vsel %vm334, %v1832, 0.0
  %1837 = vadd.xlane.f32.xlu0 %v1836
  %v1838 = vpop.xlane.xlu0 %1837
  %v1839 = vrcp.pop %v1835
  %v1840 = vmul.f32 %v1835, %v1839
  %v1841 = vsub.f32 1.0, %v1840
  %v1842 = vmul.f32 %v1839, %v1841
  %v1843 = vadd.f32 %v1839, %v1842
  %vm1844 = vweird.f32 %v1835
  %vm1845 = vweird.f32 %v1839
  %vm1846 = vmor %vm1844, %vm1845
  %v1847 = vsel %vm1846, %v1839, %v1843
  %v1848 = vand.u32 2147483647, %v1835
  %vm1849 = vcmp.eq.f32.partialorder %v1848, 8.507059e+37
  %v1850 = vand.u32 %v1835, 2147483648
  %v1851 = vor.u32 1.1754944e-38, %v1850
  %v1852 = vsel %vm1849, %v1851, %v1847
  %v1853 = vmul.f32 %v1830, %v1852
  %v1854 = vrcp.pop %v1838
  %v1855 = vmul.f32 %v1838, %v1854
  %v1856 = vsub.f32 1.0, %v1855
  %v1857 = vmul.f32 %v1854, %v1856
  %v1858 = vadd.f32 %v1854, %v1857
  %vm1859 = vweird.f32 %v1838
  %vm1860 = vweird.f32 %v1854
  %vm1861 = vmor %vm1859, %vm1860
  %v1862 = vsel %vm1861, %v1854, %v1858
  %v1863 = vand.u32 2147483647, %v1838
  %vm1864 = vcmp.eq.f32.partialorder %v1863, 8.507059e+37
  %v1865 = vand.u32 %v1838, 2147483648
  %v1866 = vor.u32 1.1754944e-38, %v1865
  %v1867 = vsel %vm1864, %v1866, %v1862
  %v1868 = vmul.f32 %v1832, %v1867
  %v1870 = vsel %vm334, %v1853, 0
  %v1873 = vsel %vm334, %v1868, 0
  %1875 = vmatpush.msra.mxu0 0.0
  %1876 = vmatpush.msra.mxu0 0.0
  %1877 = vmatpush.msra.mxu0 0.0
  %1878 = vmatpush.msra.mxu0 0.0
  %1879 = vmatpush.msra.mxu0 0.0
  %1880 = vmatpush.msra.mxu0 0.0
  %1881 = vmatpush.msra.mxu0 0.0
  %1882 = vmatpush.msra.mxu0 0.0
  %1883 = vmatpush.msra.mxu0 0.0
  %1884 = vmatpush.msra.mxu0 0.0
  %1885 = vmatpush.msra.mxu0 0.0
  %1886 = vmatpush.msra.mxu0 0.0
  %1887 = vmatpush.msra.mxu0 0.0
  %1888 = vmatpush.msra.mxu0 0.0
  %1889 = vmatpush.msra.mxu0 %v1780
  %1890 = vmatpush.msra.mxu0 %v1777
  %1891 = vmatmul.f32.gmra.mxu0 %v1870
  %v1892 = vpop.f32.mrf.mxu0
  %v1893 = vadd.f32 0.0, %v1892
  %1894 = vmatmul.f32.gmra.mxu0 %v1873
  %v1895 = vpop.f32.mrf.mxu0
  %v1896 = vadd.f32 0.0, %v1895
  %1897 = vdwg.mxu0
  %s1898 = scalar_lea.vmem %s5, 80
  %v1899 = vld [vmem:[%s1898] sm:$0xff]
  %v1900 = vld [vmem:[%s1898 + $0x8] sm:$0xff]
  %v1902 = vsel %vm334, %v1893, 0
  %v1905 = vsel %vm334, %v1896, 0
  %1907 = vmatpush.msra.mxu0 0.0
  %1908 = vmatpush.msra.mxu0 0.0
  %1909 = vmatpush.msra.mxu0 0.0
  %1910 = vmatpush.msra.mxu0 0.0
  %1911 = vmatpush.msra.mxu0 0.0
  %1912 = vmatpush.msra.mxu0 0.0
  %1913 = vmatpush.msra.mxu0 0.0
  %1914 = vmatpush.msra.mxu0 0.0
  %1915 = vmatpush.msra.mxu0 0.0
  %1916 = vmatpush.msra.mxu0 0.0
  %1917 = vmatpush.msra.mxu0 0.0
  %1918 = vmatpush.msra.mxu0 0.0
  %1919 = vmatpush.msra.mxu0 0.0
  %1920 = vmatpush.msra.mxu0 0.0
  %1921 = vmatpush.msra.mxu0 %v1900
  %1922 = vmatpush.msra.mxu0 %v1899
  %1923 = vmatmul.f32.gmra.mxu0 %v1902
  %v1924 = vpop.f32.mrf.mxu0
  %v1925 = vadd.f32 0.0, %v1924
  %1926 = vmatmul.f32.gmra.mxu0 %v1905
  %v1927 = vpop.f32.mrf.mxu0
  %v1928 = vadd.f32 0.0, %v1927
  %1929 = vdwg.mxu0
  %v1931 = vsel %vm334, %v1672, 0
  %v1934 = vsel %vm334, %v1675, 0
  %1936 = vmatpush.msra.mxu0 0.0
  %1937 = vmatpush.msra.mxu0 0.0
  %1938 = vmatpush.msra.mxu0 0.0
  %1939 = vmatpush.msra.mxu0 0.0
  %1940 = vmatpush.msra.mxu0 0.0
  %1941 = vmatpush.msra.mxu0 0.0
  %1942 = vmatpush.msra.mxu0 0.0
  %1943 = vmatpush.msra.mxu0 0.0
  %1944 = vmatpush.msra.mxu0 0.0
  %1945 = vmatpush.msra.mxu0 0.0
  %1946 = vmatpush.msra.mxu0 0.0
  %1947 = vmatpush.msra.mxu0 0.0
  %1948 = vmatpush.msra.mxu0 0.0
  %1949 = vmatpush.msra.mxu0 0.0
  %1950 = vmatpush.msra.mxu0 %v1679
  %1951 = vmatpush.msra.mxu0 %v1678
  %1952 = vmatmul.f32.gmra.mxu0 %v1931
  %v1953 = vpop.f32.mrf.mxu0
  %v1954 = vadd.f32 %v1925, %v1953
  %1955 = vmatmul.f32.gmra.mxu0 %v1934
  %v1956 = vpop.f32.mrf.mxu0
  %v1957 = vadd.f32 %v1928, %v1956
  %1958 = vdwg.mxu0
  %s1959 = scalar_lea.vmem %s4, 1008
  %v1960 = vld [vmem:[%s1959] sm:$0xff]
  %v1961 = vld [vmem:[%s1959 + $0x8] sm:$0xff]
  %v1962 = vld [vmem:[%s1959 + $0x10] sm:$0xff]
  %v1963 = vld [vmem:[%s1959 + $0x18] sm:$0xff]
  %v1964 = vld [vmem:[%s1959 + $0x20] sm:$0xff]
  %v1965 = vld [vmem:[%s1959 + $0x28] sm:$0xff]
  %v1966 = vld [vmem:[%s1959 + $0x30] sm:$0xff]
  %v1967 = vld [vmem:[%s1959 + $0x38] sm:$0xff]
  %v1968 = vld [vmem:[%s1959 + $0x40] sm:$0x1]
  %v1969 = vperm.slane %v1968, 0
  %1970 = vmatpush.msra.mxu0 0.0
  %1971 = vmatpush.msra.mxu0 0.0
  %1972 = vmatpush.msra.mxu0 0.0
  %1973 = vmatpush.msra.mxu0 0.0
  %1974 = vmatpush.msra.mxu0 0.0
  %1975 = vmatpush.msra.mxu0 0.0
  %1976 = vmatpush.msra.mxu0 0.0
  %1977 = vmatpush.msra.mxu0 0.0
  %1978 = vmatpush.msra.mxu0 %v1967
  %1979 = vmatpush.msra.mxu0 %v1966
  %1980 = vmatpush.msra.mxu0 %v1965
  %1981 = vmatpush.msra.mxu0 %v1964
  %1982 = vmatpush.msra.mxu0 %v1963
  %1983 = vmatpush.msra.mxu0 %v1962
  %1984 = vmatpush.msra.mxu0 %v1961
  %1985 = vmatpush.msra.mxu0 %v1960
  %1986 = vmatmul.f32.gmra.mxu0 %v1465
  %v1987 = vpop.f32.mrf.mxu0
  %v1988 = vadd.f32 %v1969, %v1987
  %1989 = vmatmul.f32.gmra.mxu0 %v1468
  %v1990 = vpop.f32.mrf.mxu0
  %v1991 = vadd.f32 %v1969, %v1990
  %1992 = vdwg.mxu0
  %s1993 = scalar_lea.vmem %s4, 1296
  %v1994 = vld [vmem:[%s1993] sm:$0xff]
  %v1995 = vld [vmem:[%s1993 + $0x8] sm:$0xff]
  %v1996 = vld [vmem:[%s1993 + $0x10] sm:$0xff]
  %v1997 = vld [vmem:[%s1993 + $0x18] sm:$0xff]
  %v1998 = vld [vmem:[%s1993 + $0x20] sm:$0xff]
  %v1999 = vld [vmem:[%s1993 + $0x28] sm:$0xff]
  %v2000 = vld [vmem:[%s1993 + $0x30] sm:$0xff]
  %v2001 = vld [vmem:[%s1993 + $0x38] sm:$0xff]
  %v2002 = vld [vmem:[%s1993 + $0x40] sm:$0x1]
  %v2003 = vperm.slane %v2002, 0
  %2004 = vmatpush.msra.mxu0 0.0
  %2005 = vmatpush.msra.mxu0 0.0
  %2006 = vmatpush.msra.mxu0 0.0
  %2007 = vmatpush.msra.mxu0 0.0
  %2008 = vmatpush.msra.mxu0 0.0
  %2009 = vmatpush.msra.mxu0 0.0
  %2010 = vmatpush.msra.mxu0 0.0
  %2011 = vmatpush.msra.mxu0 0.0
  %2012 = vmatpush.msra.mxu0 %v2001
  %2013 = vmatpush.msra.mxu0 %v2000
  %2014 = vmatpush.msra.mxu0 %v1999
  %2015 = vmatpush.msra.mxu0 %v1998
  %2016 = vmatpush.msra.mxu0 %v1997
  %2017 = vmatpush.msra.mxu0 %v1996
  %2018 = vmatpush.msra.mxu0 %v1995
  %2019 = vmatpush.msra.mxu0 %v1994
  %2020 = vmatmul.f32.gmra.mxu0 %v1465
  %v2021 = vpop.f32.mrf.mxu0
  %v2022 = vadd.f32 %v2003, %v2021
  %2023 = vmatmul.f32.gmra.mxu0 %v1468
  %v2024 = vpop.f32.mrf.mxu0
  %v2025 = vadd.f32 %v2003, %v2024
  %2026 = vdwg.mxu0
  %s2027 = scalar_lea.vmem %s4, 1584
  %v2028 = vld [vmem:[%s2027] sm:$0xff]
  %v2029 = vld [vmem:[%s2027 + $0x8] sm:$0xff]
  %v2030 = vld [vmem:[%s2027 + $0x10] sm:$0xff]
  %v2031 = vld [vmem:[%s2027 + $0x18] sm:$0xff]
  %v2032 = vld [vmem:[%s2027 + $0x20] sm:$0xff]
  %v2033 = vld [vmem:[%s2027 + $0x28] sm:$0xff]
  %v2034 = vld [vmem:[%s2027 + $0x30] sm:$0xff]
  %v2035 = vld [vmem:[%s2027 + $0x38] sm:$0xff]
  %v2036 = vld [vmem:[%s2027 + $0x40] sm:$0x1]
  %v2037 = vperm.slane %v2036, 0
  %2038 = vmatpush.msra.mxu0 0.0
  %2039 = vmatpush.msra.mxu0 0.0
  %2040 = vmatpush.msra.mxu0 0.0
  %2041 = vmatpush.msra.mxu0 0.0
  %2042 = vmatpush.msra.mxu0 0.0
  %2043 = vmatpush.msra.mxu0 0.0
  %2044 = vmatpush.msra.mxu0 0.0
  %2045 = vmatpush.msra.mxu0 0.0
  %2046 = vmatpush.msra.mxu0 %v2035
  %2047 = vmatpush.msra.mxu0 %v2034
  %2048 = vmatpush.msra.mxu0 %v2033
  %2049 = vmatpush.msra.mxu0 %v2032
  %2050 = vmatpush.msra.mxu0 %v2031
  %2051 = vmatpush.msra.mxu0 %v2030
  %2052 = vmatpush.msra.mxu0 %v2029
  %2053 = vmatpush.msra.mxu0 %v2028
  %2054 = vmatmul.f32.gmra.mxu0 %v1465
  %v2055 = vpop.f32.mrf.mxu0
  %v2056 = vadd.f32 %v2037, %v2055
  %2057 = vmatmul.f32.gmra.mxu0 %v1468
  %v2058 = vpop.f32.mrf.mxu0
  %v2059 = vadd.f32 %v2037, %v2058
  %2060 = vdwg.mxu0
  %v2062 = vsel %vm334, %v1988, 0
  %v2065 = vsel %vm334, %v1991, 0
  %v2068 = vsel %vm334, %v2022, 0
  %v2071 = vsel %vm334, %v2025, 0
  %2073 = vmatpush.xpose.msra.mxu0 0.0
  %2074 = vmatpush.xpose.msra.mxu0 0.0
  %2075 = vmatpush.xpose.msra.mxu0 0.0
  %2076 = vmatpush.xpose.msra.mxu0 0.0
  %2077 = vmatpush.xpose.msra.mxu0 0.0
  %2078 = vmatpush.xpose.msra.mxu0 0.0
  %2079 = vmatpush.xpose.msra.mxu0 0.0
  %2080 = vmatpush.xpose.msra.mxu0 0.0
  %2081 = vmatpush.xpose.msra.mxu0 0.0
  %2082 = vmatpush.xpose.msra.mxu0 0.0
  %2083 = vmatpush.xpose.msra.mxu0 0.0
  %2084 = vmatpush.xpose.msra.mxu0 0.0
  %2085 = vmatpush.xpose.msra.mxu0 0.0
  %2086 = vmatpush.xpose.msra.mxu0 0.0
  %2087 = vmatpush.xpose.msra.mxu0 %v2071
  %2088 = vmatpush.xpose.msra.mxu0 %v2068
  %2089 = vmatmul.f32.gmra.mxu0 %v2062
  %v2090 = vpop.f32.mrf.mxu0
  %v2091 = vadd.f32 0.0, %v2090
  %2092 = vmatmul.f32.gmra.mxu0 %v2065
  %v2093 = vpop.f32.mrf.mxu0
  %v2094 = vadd.f32 0.0, %v2093
  %2095 = vdwg.mxu0
  %v2096 = vmul.f32 %v2091, 0.25
  %v2097 = vmul.f32 %v2094, 0.25
  %v2098 = vadd.f32 %v2096, %v224
  %v2099 = vadd.f32 %v2097, %v225
  %v2100 = vsel %vm334, %v2098, -inf
  %2101 = vmax.xlane.f32.xlu0 %v2100
  %v2102 = vpop.xlane.xlu0 %2101
  %v2103 = vsel %vm334, %v2099, -inf
  %2104 = vmax.xlane.f32.xlu0 %v2103
  %v2105 = vpop.xlane.xlu0 %2104
  %v2106 = vsub.f32 %v2098, %v2102
  %v2107 = vsub.f32 %v2099, %v2105
  %v2108 = vmul.f32 %v2106, 1.442695
  %v2109 = vpow.pop %v2108
  %v2110 = vmul.f32 %v2107, 1.442695
  %v2111 = vpow.pop %v2110
  %v2112 = vsel %vm334, %v2109, 0.0
  %2113 = vadd.xlane.f32.xlu0 %v2112
  %v2114 = vpop.xlane.xlu0 %2113
  %v2115 = vsel %vm334, %v2111, 0.0
  %2116 = vadd.xlane.f32.xlu0 %v2115
  %v2117 = vpop.xlane.xlu0 %2116
  %v2118 = vrcp.pop %v2114
  %v2119 = vmul.f32 %v2114, %v2118
  %v2120 = vsub.f32 1.0, %v2119
  %v2121 = vmul.f32 %v2118, %v2120
  %v2122 = vadd.f32 %v2118, %v2121
  %vm2123 = vweird.f32 %v2114
  %vm2124 = vweird.f32 %v2118
  %vm2125 = vmor %vm2123, %vm2124
  %v2126 = vsel %vm2125, %v2118, %v2122
  %v2127 = vand.u32 2147483647, %v2114
  %vm2128 = vcmp.eq.f32.partialorder %v2127, 8.507059e+37
  %v2129 = vand.u32 %v2114, 2147483648
  %v2130 = vor.u32 1.1754944e-38, %v2129
  %v2131 = vsel %vm2128, %v2130, %v2126
  %v2132 = vmul.f32 %v2109, %v2131
  %v2133 = vrcp.pop %v2117
  %v2134 = vmul.f32 %v2117, %v2133
  %v2135 = vsub.f32 1.0, %v2134
  %v2136 = vmul.f32 %v2133, %v2135
  %v2137 = vadd.f32 %v2133, %v2136
  %vm2138 = vweird.f32 %v2117
  %vm2139 = vweird.f32 %v2133
  %vm2140 = vmor %vm2138, %vm2139
  %v2141 = vsel %vm2140, %v2133, %v2137
  %v2142 = vand.u32 2147483647, %v2117
  %vm2143 = vcmp.eq.f32.partialorder %v2142, 8.507059e+37
  %v2144 = vand.u32 %v2117, 2147483648
  %v2145 = vor.u32 1.1754944e-38, %v2144
  %v2146 = vsel %vm2143, %v2145, %v2141
  %v2147 = vmul.f32 %v2111, %v2146
  %v2149 = vsel %vm334, %v2132, 0
  %v2152 = vsel %vm334, %v2147, 0
  %2154 = vmatpush.msra.mxu0 0.0
  %2155 = vmatpush.msra.mxu0 0.0
  %2156 = vmatpush.msra.mxu0 0.0
  %2157 = vmatpush.msra.mxu0 0.0
  %2158 = vmatpush.msra.mxu0 0.0
  %2159 = vmatpush.msra.mxu0 0.0
  %2160 = vmatpush.msra.mxu0 0.0
  %2161 = vmatpush.msra.mxu0 0.0
  %2162 = vmatpush.msra.mxu0 0.0
  %2163 = vmatpush.msra.mxu0 0.0
  %2164 = vmatpush.msra.mxu0 0.0
  %2165 = vmatpush.msra.mxu0 0.0
  %2166 = vmatpush.msra.mxu0 0.0
  %2167 = vmatpush.msra.mxu0 0.0
  %2168 = vmatpush.msra.mxu0 %v2059
  %2169 = vmatpush.msra.mxu0 %v2056
  %2170 = vmatmul.f32.gmra.mxu0 %v2149
  %v2171 = vpop.f32.mrf.mxu0
  %v2172 = vadd.f32 0.0, %v2171
  %2173 = vmatmul.f32.gmra.mxu0 %v2152
  %v2174 = vpop.f32.mrf.mxu0
  %v2175 = vadd.f32 0.0, %v2174
  %2176 = vdwg.mxu0
  %s2177 = scalar_lea.vmem %s5, 96
  %v2178 = vld [vmem:[%s2177] sm:$0xff]
  %v2179 = vld [vmem:[%s2177 + $0x8] sm:$0xff]
  %v2181 = vsel %vm334, %v2172, 0
  %v2184 = vsel %vm334, %v2175, 0
  %2186 = vmatpush.msra.mxu0 0.0
  %2187 = vmatpush.msra.mxu0 0.0
  %2188 = vmatpush.msra.mxu0 0.0
  %2189 = vmatpush.msra.mxu0 0.0
  %2190 = vmatpush.msra.mxu0 0.0
  %2191 = vmatpush.msra.mxu0 0.0
  %2192 = vmatpush.msra.mxu0 0.0
  %2193 = vmatpush.msra.mxu0 0.0
  %2194 = vmatpush.msra.mxu0 0.0
  %2195 = vmatpush.msra.mxu0 0.0
  %2196 = vmatpush.msra.mxu0 0.0
  %2197 = vmatpush.msra.mxu0 0.0
  %2198 = vmatpush.msra.mxu0 0.0
  %2199 = vmatpush.msra.mxu0 0.0
  %2200 = vmatpush.msra.mxu0 %v2179
  %2201 = vmatpush.msra.mxu0 %v2178
  %2202 = vmatmul.f32.gmra.mxu0 %v2181
  %v2203 = vpop.f32.mrf.mxu0
  %v2204 = vadd.f32 0.0, %v2203
  %2205 = vmatmul.f32.gmra.mxu0 %v2184
  %v2206 = vpop.f32.mrf.mxu0
  %v2207 = vadd.f32 0.0, %v2206
  %2208 = vdwg.mxu0
  %v2209 = vadd.f32 %v1954, %v2204
  %v2210 = vadd.f32 %v1957, %v2207
  %s2211 = scalar_lea.vmem %s4, 1080
  %v2212 = vld [vmem:[%s2211] sm:$0xff]
  %v2213 = vld [vmem:[%s2211 + $0x8] sm:$0xff]
  %v2214 = vld [vmem:[%s2211 + $0x10] sm:$0xff]
  %v2215 = vld [vmem:[%s2211 + $0x18] sm:$0xff]
  %v2216 = vld [vmem:[%s2211 + $0x20] sm:$0xff]
  %v2217 = vld [vmem:[%s2211 + $0x28] sm:$0xff]
  %v2218 = vld [vmem:[%s2211 + $0x30] sm:$0xff]
  %v2219 = vld [vmem:[%s2211 + $0x38] sm:$0xff]
  %v2220 = vld [vmem:[%s2211 + $0x40] sm:$0x1]
  %v2221 = vperm.slane %v2220, 0
  %2222 = vmatpush.msra.mxu0 0.0
  %2223 = vmatpush.msra.mxu0 0.0
  %2224 = vmatpush.msra.mxu0 0.0
  %2225 = vmatpush.msra.mxu0 0.0
  %2226 = vmatpush.msra.mxu0 0.0
  %2227 = vmatpush.msra.mxu0 0.0
  %2228 = vmatpush.msra.mxu0 0.0
  %2229 = vmatpush.msra.mxu0 0.0
  %2230 = vmatpush.msra.mxu0 %v2219
  %2231 = vmatpush.msra.mxu0 %v2218
  %2232 = vmatpush.msra.mxu0 %v2217
  %2233 = vmatpush.msra.mxu0 %v2216
  %2234 = vmatpush.msra.mxu0 %v2215
  %2235 = vmatpush.msra.mxu0 %v2214
  %2236 = vmatpush.msra.mxu0 %v2213
  %2237 = vmatpush.msra.mxu0 %v2212
  %2238 = vmatmul.f32.gmra.mxu0 %v1465
  %v2239 = vpop.f32.mrf.mxu0
  %v2240 = vadd.f32 %v2221, %v2239
  %2241 = vmatmul.f32.gmra.mxu0 %v1468
  %v2242 = vpop.f32.mrf.mxu0
  %v2243 = vadd.f32 %v2221, %v2242
  %2244 = vdwg.mxu0
  %s2245 = scalar_lea.vmem %s4, 1368
  %v2246 = vld [vmem:[%s2245] sm:$0xff]
  %v2247 = vld [vmem:[%s2245 + $0x8] sm:$0xff]
  %v2248 = vld [vmem:[%s2245 + $0x10] sm:$0xff]
  %v2249 = vld [vmem:[%s2245 + $0x18] sm:$0xff]
  %v2250 = vld [vmem:[%s2245 + $0x20] sm:$0xff]
  %v2251 = vld [vmem:[%s2245 + $0x28] sm:$0xff]
  %v2252 = vld [vmem:[%s2245 + $0x30] sm:$0xff]
  %v2253 = vld [vmem:[%s2245 + $0x38] sm:$0xff]
  %v2254 = vld [vmem:[%s2245 + $0x40] sm:$0x1]
  %v2255 = vperm.slane %v2254, 0
  %2256 = vmatpush.msra.mxu0 0.0
  %2257 = vmatpush.msra.mxu0 0.0
  %2258 = vmatpush.msra.mxu0 0.0
  %2259 = vmatpush.msra.mxu0 0.0
  %2260 = vmatpush.msra.mxu0 0.0
  %2261 = vmatpush.msra.mxu0 0.0
  %2262 = vmatpush.msra.mxu0 0.0
  %2263 = vmatpush.msra.mxu0 0.0
  %2264 = vmatpush.msra.mxu0 %v2253
  %2265 = vmatpush.msra.mxu0 %v2252
  %2266 = vmatpush.msra.mxu0 %v2251
  %2267 = vmatpush.msra.mxu0 %v2250
  %2268 = vmatpush.msra.mxu0 %v2249
  %2269 = vmatpush.msra.mxu0 %v2248
  %2270 = vmatpush.msra.mxu0 %v2247
  %2271 = vmatpush.msra.mxu0 %v2246
  %2272 = vmatmul.f32.gmra.mxu0 %v1465
  %v2273 = vpop.f32.mrf.mxu0
  %v2274 = vadd.f32 %v2255, %v2273
  %2275 = vmatmul.f32.gmra.mxu0 %v1468
  %v2276 = vpop.f32.mrf.mxu0
  %v2277 = vadd.f32 %v2255, %v2276
  %2278 = vdwg.mxu0
  %s2279 = scalar_lea.vmem %s4, 1656
  %v2280 = vld [vmem:[%s2279] sm:$0xff]
  %v2281 = vld [vmem:[%s2279 + $0x8] sm:$0xff]
  %v2282 = vld [vmem:[%s2279 + $0x10] sm:$0xff]
  %v2283 = vld [vmem:[%s2279 + $0x18] sm:$0xff]
  %v2284 = vld [vmem:[%s2279 + $0x20] sm:$0xff]
  %v2285 = vld [vmem:[%s2279 + $0x28] sm:$0xff]
  %v2286 = vld [vmem:[%s2279 + $0x30] sm:$0xff]
  %v2287 = vld [vmem:[%s2279 + $0x38] sm:$0xff]
  %v2288 = vld [vmem:[%s2279 + $0x40] sm:$0x1]
  %v2289 = vperm.slane %v2288, 0
  %2290 = vmatpush.msra.mxu0 0.0
  %2291 = vmatpush.msra.mxu0 0.0
  %2292 = vmatpush.msra.mxu0 0.0
  %2293 = vmatpush.msra.mxu0 0.0
  %2294 = vmatpush.msra.mxu0 0.0
  %2295 = vmatpush.msra.mxu0 0.0
  %2296 = vmatpush.msra.mxu0 0.0
  %2297 = vmatpush.msra.mxu0 0.0
  %2298 = vmatpush.msra.mxu0 %v2287
  %2299 = vmatpush.msra.mxu0 %v2286
  %2300 = vmatpush.msra.mxu0 %v2285
  %2301 = vmatpush.msra.mxu0 %v2284
  %2302 = vmatpush.msra.mxu0 %v2283
  %2303 = vmatpush.msra.mxu0 %v2282
  %2304 = vmatpush.msra.mxu0 %v2281
  %2305 = vmatpush.msra.mxu0 %v2280
  %2306 = vmatmul.f32.gmra.mxu0 %v1465
  %v2307 = vpop.f32.mrf.mxu0
  %v2308 = vadd.f32 %v2289, %v2307
  %2309 = vmatmul.f32.gmra.mxu0 %v1468
  %v2310 = vpop.f32.mrf.mxu0
  %v2311 = vadd.f32 %v2289, %v2310
  %2312 = vdwg.mxu0
  %v2314 = vsel %vm334, %v2240, 0
  %v2317 = vsel %vm334, %v2243, 0
  %v2320 = vsel %vm334, %v2274, 0
  %v2323 = vsel %vm334, %v2277, 0
  %2325 = vmatpush.xpose.msra.mxu0 0.0
  %2326 = vmatpush.xpose.msra.mxu0 0.0
  %2327 = vmatpush.xpose.msra.mxu0 0.0
  %2328 = vmatpush.xpose.msra.mxu0 0.0
  %2329 = vmatpush.xpose.msra.mxu0 0.0
  %2330 = vmatpush.xpose.msra.mxu0 0.0
  %2331 = vmatpush.xpose.msra.mxu0 0.0
  %2332 = vmatpush.xpose.msra.mxu0 0.0
  %2333 = vmatpush.xpose.msra.mxu0 0.0
  %2334 = vmatpush.xpose.msra.mxu0 0.0
  %2335 = vmatpush.xpose.msra.mxu0 0.0
  %2336 = vmatpush.xpose.msra.mxu0 0.0
  %2337 = vmatpush.xpose.msra.mxu0 0.0
  %2338 = vmatpush.xpose.msra.mxu0 0.0
  %2339 = vmatpush.xpose.msra.mxu0 %v2323
  %2340 = vmatpush.xpose.msra.mxu0 %v2320
  %2341 = vmatmul.f32.gmra.mxu0 %v2314
  %v2342 = vpop.f32.mrf.mxu0
  %v2343 = vadd.f32 0.0, %v2342
  %2344 = vmatmul.f32.gmra.mxu0 %v2317
  %v2345 = vpop.f32.mrf.mxu0
  %v2346 = vadd.f32 0.0, %v2345
  %2347 = vdwg.mxu0
  %v2348 = vmul.f32 %v2343, 0.25
  %v2349 = vmul.f32 %v2346, 0.25
  %v2350 = vadd.f32 %v2348, %v224
  %v2351 = vadd.f32 %v2349, %v225
  %v2352 = vsel %vm334, %v2350, -inf
  %2353 = vmax.xlane.f32.xlu0 %v2352
  %v2354 = vpop.xlane.xlu0 %2353
  %v2355 = vsel %vm334, %v2351, -inf
  %2356 = vmax.xlane.f32.xlu0 %v2355
  %v2357 = vpop.xlane.xlu0 %2356
  %v2358 = vsub.f32 %v2350, %v2354
  %v2359 = vsub.f32 %v2351, %v2357
  %v2360 = vmul.f32 %v2358, 1.442695
  %v2361 = vpow.pop %v2360
  %v2362 = vmul.f32 %v2359, 1.442695
  %v2363 = vpow.pop %v2362
  %v2364 = vsel %vm334, %v2361, 0.0
  %2365 = vadd.xlane.f32.xlu0 %v2364
  %v2366 = vpop.xlane.xlu0 %2365
  %v2367 = vsel %vm334, %v2363, 0.0
  %2368 = vadd.xlane.f32.xlu0 %v2367
  %v2369 = vpop.xlane.xlu0 %2368
  %v2370 = vrcp.pop %v2366
  %v2371 = vmul.f32 %v2366, %v2370
  %v2372 = vsub.f32 1.0, %v2371
  %v2373 = vmul.f32 %v2370, %v2372
  %v2374 = vadd.f32 %v2370, %v2373
  %vm2375 = vweird.f32 %v2366
  %vm2376 = vweird.f32 %v2370
  %vm2377 = vmor %vm2375, %vm2376
  %v2378 = vsel %vm2377, %v2370, %v2374
  %v2379 = vand.u32 2147483647, %v2366
  %vm2380 = vcmp.eq.f32.partialorder %v2379, 8.507059e+37
  %v2381 = vand.u32 %v2366, 2147483648
  %v2382 = vor.u32 1.1754944e-38, %v2381
  %v2383 = vsel %vm2380, %v2382, %v2378
  %v2384 = vmul.f32 %v2361, %v2383
  %v2385 = vrcp.pop %v2369
  %v2386 = vmul.f32 %v2369, %v2385
  %v2387 = vsub.f32 1.0, %v2386
  %v2388 = vmul.f32 %v2385, %v2387
  %v2389 = vadd.f32 %v2385, %v2388
  %vm2390 = vweird.f32 %v2369
  %vm2391 = vweird.f32 %v2385
  %vm2392 = vmor %vm2390, %vm2391
  %v2393 = vsel %vm2392, %v2385, %v2389
  %v2394 = vand.u32 2147483647, %v2369
  %vm2395 = vcmp.eq.f32.partialorder %v2394, 8.507059e+37
  %v2396 = vand.u32 %v2369, 2147483648
  %v2397 = vor.u32 1.1754944e-38, %v2396
  %v2398 = vsel %vm2395, %v2397, %v2393
  %v2399 = vmul.f32 %v2363, %v2398
  %v2401 = vsel %vm334, %v2384, 0
  %v2404 = vsel %vm334, %v2399, 0
  %2406 = vmatpush.msra.mxu0 0.0
  %2407 = vmatpush.msra.mxu0 0.0
  %2408 = vmatpush.msra.mxu0 0.0
  %2409 = vmatpush.msra.mxu0 0.0
  %2410 = vmatpush.msra.mxu0 0.0
  %2411 = vmatpush.msra.mxu0 0.0
  %2412 = vmatpush.msra.mxu0 0.0
  %2413 = vmatpush.msra.mxu0 0.0
  %2414 = vmatpush.msra.mxu0 0.0
  %2415 = vmatpush.msra.mxu0 0.0
  %2416 = vmatpush.msra.mxu0 0.0
  %2417 = vmatpush.msra.mxu0 0.0
  %2418 = vmatpush.msra.mxu0 0.0
  %2419 = vmatpush.msra.mxu0 0.0
  %2420 = vmatpush.msra.mxu0 %v2311
  %2421 = vmatpush.msra.mxu0 %v2308
  %2422 = vmatmul.f32.gmra.mxu0 %v2401
  %v2423 = vpop.f32.mrf.mxu0
  %v2424 = vadd.f32 0.0, %v2423
  %2425 = vmatmul.f32.gmra.mxu0 %v2404
  %v2426 = vpop.f32.mrf.mxu0
  %v2427 = vadd.f32 0.0, %v2426
  %2428 = vdwg.mxu0
  %s2429 = scalar_lea.vmem %s5, 112
  %v2430 = vld [vmem:[%s2429] sm:$0xff]
  %v2431 = vld [vmem:[%s2429 + $0x8] sm:$0xff]
  %v2433 = vsel %vm334, %v2424, 0
  %v2436 = vsel %vm334, %v2427, 0
  %2438 = vmatpush.msra.mxu0 0.0
  %2439 = vmatpush.msra.mxu0 0.0
  %2440 = vmatpush.msra.mxu0 0.0
  %2441 = vmatpush.msra.mxu0 0.0
  %2442 = vmatpush.msra.mxu0 0.0
  %2443 = vmatpush.msra.mxu0 0.0
  %2444 = vmatpush.msra.mxu0 0.0
  %2445 = vmatpush.msra.mxu0 0.0
  %2446 = vmatpush.msra.mxu0 0.0
  %2447 = vmatpush.msra.mxu0 0.0
  %2448 = vmatpush.msra.mxu0 0.0
  %2449 = vmatpush.msra.mxu0 0.0
  %2450 = vmatpush.msra.mxu0 0.0
  %2451 = vmatpush.msra.mxu0 0.0
  %2452 = vmatpush.msra.mxu0 %v2431
  %2453 = vmatpush.msra.mxu0 %v2430
  %2454 = vmatmul.f32.gmra.mxu0 %v2433
  %v2455 = vpop.f32.mrf.mxu0
  %v2456 = vadd.f32 0.0, %v2455
  %2457 = vmatmul.f32.gmra.mxu0 %v2436
  %v2458 = vpop.f32.mrf.mxu0
  %v2459 = vadd.f32 0.0, %v2458
  %2460 = vdwg.mxu0
  %v2461 = vadd.f32 %v2209, %v2456
  %v2462 = vadd.f32 %v2210, %v2459
  %v2463 = vld [vmem:[%s7 + $0x10] sm:$0x1]
  %v2464 = vperm.slane %v2463, 0
  %v2465 = vadd.f32 %v2461, %v2464
  %v2466 = vadd.f32 %v2462, %v2464
  %v2467 = vadd.f32 %v2465, %v1451
  %v2468 = vadd.f32 %v2466, %v1452
  %v2469 = vld [vmem:[%s7 + $0x11] sm:$0x1]
  %v2470 = vld [vmem:[%s7 + $0x12] sm:$0x1]
  %v2471 = vsel %vm236, %v2467, 0.0
  %2472 = vadd.xlane.f32.xlu0 %v2471
  %v2473 = vpop.xlane.xlu0 %2472
  %v2474 = vsel %vm236, %v2468, 0.0
  %2475 = vadd.xlane.f32.xlu0 %v2474
  %v2476 = vpop.xlane.xlu0 %2475
  %v2477 = vmul.f32 %v2473, %v1256
  %v2478 = vmul.f32 %v2476, %v1256
  %v2479 = vsub.f32 %v2467, %v2477
  %v2480 = vsub.f32 %v2468, %v2478
  %v2481 = vmul.f32 %v2479, %v2479
  %v2482 = vmul.f32 %v2480, %v2480
  %v2483 = vsel %vm236, %v2481, 0.0
  %2484 = vadd.xlane.f32.xlu0 %v2483
  %v2485 = vpop.xlane.xlu0 %2484
  %v2486 = vsel %vm236, %v2482, 0.0
  %2487 = vadd.xlane.f32.xlu0 %v2486
  %v2488 = vpop.xlane.xlu0 %2487
  %v2489 = vmul.f32 %v2485, %v1256
  %v2490 = vmul.f32 %v2488, %v1256
  %v2491 = vadd.f32 %v2489, 1e-12
  %v2492 = vadd.f32 %v2490, 1e-12
  %v2493 = vrsqrt.pop %v2491
  %v2494 = vmul.f32 %v2493, %v2491
  %v2495 = vmul.f32 %v2494, %v2493
  %v2496 = vmul.f32 0.5, %v2495
  %v2497 = vsub.f32 1.5, %v2496
  %v2498 = vmul.f32 %v2493, %v2497
  %vm2499 = vweird.f32 %v2491
  %vm2500 = vweird.f32 %v2493
  %vm2501 = vmor %vm2499, %vm2500
  %v2502 = vsel %vm2501, %v2493, %v2498
  %v2503 = vrsqrt.pop %v2492
  %v2504 = vmul.f32 %v2503, %v2492
  %v2505 = vmul.f32 %v2504, %v2503
  %v2506 = vmul.f32 0.5, %v2505
  %v2507 = vsub.f32 1.5, %v2506
  %v2508 = vmul.f32 %v2503, %v2507
  %vm2509 = vweird.f32 %v2492
  %vm2510 = vweird.f32 %v2503
  %vm2511 = vmor %vm2509, %vm2510
  %v2512 = vsel %vm2511, %v2503, %v2508
  %v2513 = vmul.f32 %v2479, %v2502
  %v2514 = vmul.f32 %v2480, %v2512
  %v2515 = vperm.slane %v2469, 0
  %v2516 = vmul.f32 %v2513, %v2515
  %v2517 = vmul.f32 %v2514, %v2515
  %v2518 = vperm.slane %v2470, 0
  %v2519 = vadd.f32 %v2516, %v2518
  %v2520 = vadd.f32 %v2517, %v2518
  %s2521 = scalar_lea.vmem %s6, 192
  %v2522 = vld [vmem:[%s2521] sm:$0xff]
  %v2523 = vld [vmem:[%s2521 + $0x8] sm:$0xff]
  %v2524 = vld [vmem:[%s2521 + $0x10] sm:$0xff]
  %v2525 = vld [vmem:[%s2521 + $0x18] sm:$0xff]
  %v2526 = vld [vmem:[%s2521 + $0x20] sm:$0xff]
  %v2527 = vld [vmem:[%s2521 + $0x28] sm:$0xff]
  %v2528 = vld [vmem:[%s2521 + $0x30] sm:$0xff]
  %v2529 = vld [vmem:[%s2521 + $0x38] sm:$0xff]
  %v2530 = vld [vmem:[%s7 + $0x13] sm:$0x1]
  %v2531 = vperm.slane %v2530, 0
  %v2533 = vsel %vm236, %v2519, 0
  %v2536 = vsel %vm236, %v2520, 0
  %2538 = vmatpush.msra.mxu0 0.0
  %2539 = vmatpush.msra.mxu0 0.0
  %2540 = vmatpush.msra.mxu0 0.0
  %2541 = vmatpush.msra.mxu0 0.0
  %2542 = vmatpush.msra.mxu0 0.0
  %2543 = vmatpush.msra.mxu0 0.0
  %2544 = vmatpush.msra.mxu0 0.0
  %2545 = vmatpush.msra.mxu0 0.0
  %2546 = vmatpush.msra.mxu0 %v2529
  %2547 = vmatpush.msra.mxu0 %v2528
  %2548 = vmatpush.msra.mxu0 %v2527
  %2549 = vmatpush.msra.mxu0 %v2526
  %2550 = vmatpush.msra.mxu0 %v2525
  %2551 = vmatpush.msra.mxu0 %v2524
  %2552 = vmatpush.msra.mxu0 %v2523
  %2553 = vmatpush.msra.mxu0 %v2522
  %2554 = vmatmul.f32.gmra.mxu0 %v2533
  %v2555 = vpop.f32.mrf.mxu0
  %v2556 = vadd.f32 %v2531, %v2555
  %2557 = vmatmul.f32.gmra.mxu0 %v2536
  %v2558 = vpop.f32.mrf.mxu0
  %v2559 = vadd.f32 %v2531, %v2558
  %2560 = vdwg.mxu0
  %v2561 = vmul.f32 %v2556, %v2556
  %v2562 = vmul.f32 %v2559, %v2559
  %v2563 = vmul.f32 %v2556, %v2561
  %v2564 = vmul.f32 %v2559, %v2562
  %v2565 = vmul.f32 %v2563, 0.044715
  %v2566 = vmul.f32 %v2564, 0.044715
  %v2567 = vadd.f32 %v2556, %v2565
  %v2568 = vadd.f32 %v2559, %v2566
  %v2569 = vmul.f32 %v2567, 0.7978846
  %v2570 = vmul.f32 %v2568, 0.7978846
  %v2571 = vtanh.pop %v2569
  %v2572 = vtanh.pop %v2570
  %v2573 = vadd.f32 %v2571, 1.0
  %v2574 = vadd.f32 %v2572, 1.0
  %v2575 = vmul.f32 %v2573, 0.5
  %v2576 = vmul.f32 %v2574, 0.5
  %v2577 = vmul.f32 %v2556, %v2575
  %v2578 = vmul.f32 %v2559, %v2576
  %v2579 = vld [vmem:[%s2521 + $0x40] sm:$0xff]
  %v2580 = vld [vmem:[%s2521 + $0x48] sm:$0xff]
  %v2581 = vld [vmem:[%s2521 + $0x50] sm:$0xff]
  %v2582 = vld [vmem:[%s2521 + $0x58] sm:$0xff]
  %v2583 = vld [vmem:[%s2521 + $0x60] sm:$0xff]
  %v2584 = vld [vmem:[%s2521 + $0x68] sm:$0xff]
  %v2585 = vld [vmem:[%s2521 + $0x70] sm:$0xff]
  %v2586 = vld [vmem:[%s2521 + $0x78] sm:$0xff]
  %v2587 = vld [vmem:[%s2521 + $0x80] sm:$0xff]
  %v2588 = vld [vmem:[%s2521 + $0x88] sm:$0xff]
  %v2589 = vld [vmem:[%s2521 + $0x90] sm:$0xff]
  %v2590 = vld [vmem:[%s2521 + $0x98] sm:$0xff]
  %v2591 = vld [vmem:[%s2521 + $0xa0] sm:$0xff]
  %v2592 = vld [vmem:[%s2521 + $0xa8] sm:$0xff]
  %v2593 = vld [vmem:[%s2521 + $0xb0] sm:$0xff]
  %v2594 = vld [vmem:[%s2521 + $0xb8] sm:$0xff]
  %v2595 = vld [vmem:[%s7 + $0x14] sm:$0x1]
  %v2596 = vperm.slane %v2595, 0
  %2597 = vmatpush.msra.mxu0 %v2594
  %2598 = vmatpush.msra.mxu0 %v2593
  %2599 = vmatpush.msra.mxu0 %v2592
  %2600 = vmatpush.msra.mxu0 %v2591
  %2601 = vmatpush.msra.mxu0 %v2590
  %2602 = vmatpush.msra.mxu0 %v2589
  %2603 = vmatpush.msra.mxu0 %v2588
  %2604 = vmatpush.msra.mxu0 %v2587
  %2605 = vmatpush.msra.mxu0 %v2586
  %2606 = vmatpush.msra.mxu0 %v2585
  %2607 = vmatpush.msra.mxu0 %v2584
  %2608 = vmatpush.msra.mxu0 %v2583
  %2609 = vmatpush.msra.mxu0 %v2582
  %2610 = vmatpush.msra.mxu0 %v2581
  %2611 = vmatpush.msra.mxu0 %v2580
  %2612 = vmatpush.msra.mxu0 %v2579
  %2613 = vmatmul.f32.gmra.mxu0 %v2577
  %v2614 = vpop.f32.mrf.mxu0
  %v2615 = vadd.f32 %v2596, %v2614
  %2616 = vmatmul.f32.gmra.mxu0 %v2578
  %v2617 = vpop.f32.mrf.mxu0
  %v2618 = vadd.f32 %v2596, %v2617
  %2619 = vdwg.mxu0
  %v2620 = vadd.f32 %v2615, %v2519
  %v2621 = vadd.f32 %v2618, %v2520
  %v2622 = vld [vmem:[%s7 + $0x15] sm:$0x1]
  %v2623 = vld [vmem:[%s7 + $0x16] sm:$0x1]
  %v2624 = vsel %vm236, %v2620, 0.0
  %2625 = vadd.xlane.f32.xlu0 %v2624
  %v2626 = vpop.xlane.xlu0 %2625
  %v2627 = vsel %vm236, %v2621, 0.0
  %2628 = vadd.xlane.f32.xlu0 %v2627
  %v2629 = vpop.xlane.xlu0 %2628
  %v2630 = vmul.f32 %v2626, %v1256
  %v2631 = vmul.f32 %v2629, %v1256
  %v2632 = vsub.f32 %v2620, %v2630
  %v2633 = vsub.f32 %v2621, %v2631
  %v2634 = vmul.f32 %v2632, %v2632
  %v2635 = vmul.f32 %v2633, %v2633
  %v2636 = vsel %vm236, %v2634, 0.0
  %2637 = vadd.xlane.f32.xlu0 %v2636
  %v2638 = vpop.xlane.xlu0 %2637
  %v2639 = vsel %vm236, %v2635, 0.0
  %2640 = vadd.xlane.f32.xlu0 %v2639
  %v2641 = vpop.xlane.xlu0 %2640
  %v2642 = vmul.f32 %v2638, %v1256
  %v2643 = vmul.f32 %v2641, %v1256
  %v2644 = vadd.f32 %v2642, 1e-12
  %v2645 = vadd.f32 %v2643, 1e-12
  %v2646 = vrsqrt.pop %v2644
  %v2647 = vmul.f32 %v2646, %v2644
  %v2648 = vmul.f32 %v2647, %v2646
  %v2649 = vmul.f32 0.5, %v2648
  %v2650 = vsub.f32 1.5, %v2649
  %v2651 = vmul.f32 %v2646, %v2650
  %vm2652 = vweird.f32 %v2644
  %vm2653 = vweird.f32 %v2646
  %vm2654 = vmor %vm2652, %vm2653
  %v2655 = vsel %vm2654, %v2646, %v2651
  %v2656 = vrsqrt.pop %v2645
  %v2657 = vmul.f32 %v2656, %v2645
  %v2658 = vmul.f32 %v2657, %v2656
  %v2659 = vmul.f32 0.5, %v2658
  %v2660 = vsub.f32 1.5, %v2659
  %v2661 = vmul.f32 %v2656, %v2660
  %vm2662 = vweird.f32 %v2645
  %vm2663 = vweird.f32 %v2656
  %vm2664 = vmor %vm2662, %vm2663
  %v2665 = vsel %vm2664, %v2656, %v2661
  %v2666 = vmul.f32 %v2632, %v2655
  %v2667 = vmul.f32 %v2633, %v2665
  %v2668 = vperm.slane %v2622, 0
  %v2669 = vmul.f32 %v2666, %v2668
  %v2670 = vmul.f32 %v2667, %v2668
  %v2671 = vperm.slane %v2623, 0
  %v2672 = vadd.f32 %v2669, %v2671
  %v2673 = vadd.f32 %v2670, %v2671
  %2674 = vst.msk [vmem:[%s8 + $0x8] sm:$0xff] %vm236, %v2672
  %2675 = vst.msk [vmem:[%s8 + $0x18] sm:$0xff] %vm236, %v2673
  %v2676 = vld [vmem:[%s2 + $0xa0] sm:$0xff]
  %v2677 = vld [vmem:[%s2 + $0xa8] sm:$0xff]
  %v2678 = vld [vmem:[%s2 + $0xb0] sm:$0xff]
  %v2679 = vld [vmem:[%s2 + $0xb8] sm:$0xff]
  %v2680 = vld [vmem:[%s2 + $0xc0] sm:$0xff]
  %v2681 = vld [vmem:[%s2 + $0xc8] sm:$0xff]
  %v2682 = vld [vmem:[%s2 + $0xd0] sm:$0xff]
  %v2683 = vld [vmem:[%s2 + $0xd8] sm:$0xff]
  %v2684 = vld [vmem:[%s7 + $0x3] sm:$0x1]
  %v2685 = vperm.slane %v2684, 0
  %v2687 = vsel %vm236, %v2672, 0
  %v2690 = vsel %vm236, %v2673, 0
  %2692 = vmatpush.msra.mxu0 0.0
  %2693 = vmatpush.msra.mxu0 0.0
  %2694 = vmatpush.msra.mxu0 0.0
  %2695 = vmatpush.msra.mxu0 0.0
  %2696 = vmatpush.msra.mxu0 0.0
  %2697 = vmatpush.msra.mxu0 0.0
  %2698 = vmatpush.msra.mxu0 0.0
  %2699 = vmatpush.msra.mxu0 0.0
  %2700 = vmatpush.msra.mxu0 %v2683
  %2701 = vmatpush.msra.mxu0 %v2682
  %2702 = vmatpush.msra.mxu0 %v2681
  %2703 = vmatpush.msra.mxu0 %v2680
  %2704 = vmatpush.msra.mxu0 %v2679
  %2705 = vmatpush.msra.mxu0 %v2678
  %2706 = vmatpush.msra.mxu0 %v2677
  %2707 = vmatpush.msra.mxu0 %v2676
  %2708 = vmatmul.f32.gmra.mxu0 %v2687
  %v2709 = vpop.f32.mrf.mxu0
  %v2710 = vadd.f32 %v2685, %v2709
  %2711 = vmatmul.f32.gmra.mxu0 %v2690
  %v2712 = vpop.f32.mrf.mxu0
  %v2713 = vadd.f32 %v2685, %v2712
  %2714 = vdwg.mxu0
  %v2715 = vmul.f32 %v2710, %v2710
  %v2716 = vmul.f32 %v2713, %v2713
  %v2717 = vmul.f32 %v2710, %v2715
  %v2718 = vmul.f32 %v2713, %v2716
  %v2719 = vmul.f32 %v2717, 0.044715
  %v2720 = vmul.f32 %v2718, 0.044715
  %v2721 = vadd.f32 %v2710, %v2719
  %v2722 = vadd.f32 %v2713, %v2720
  %v2723 = vmul.f32 %v2721, 0.7978846
  %v2724 = vmul.f32 %v2722, 0.7978846
  %v2725 = vtanh.pop %v2723
  %v2726 = vtanh.pop %v2724
  %v2727 = vadd.f32 %v2725, 1.0
  %v2728 = vadd.f32 %v2726, 1.0
  %v2729 = vmul.f32 %v2727, 0.5
  %v2730 = vmul.f32 %v2728, 0.5
  %v2731 = vmul.f32 %v2710, %v2729
  %v2732 = vmul.f32 %v2713, %v2730
  %v2733 = vld [vmem:[%s7 + $0x4] sm:$0x1]
  %v2734 = vld [vmem:[%s7 + $0x5] sm:$0x1]
  %v2735 = vsel %vm77, %v2731, 0.0
  %2736 = vadd.xlane.f32.xlu0 %v2735
  %v2737 = vpop.xlane.xlu0 %2736
  %v2738 = vsel %vm77, %v2732, 0.0
  %2739 = vadd.xlane.f32.xlu0 %v2738
  %v2740 = vpop.xlane.xlu0 %2739
  %v2741 = vmul.f32 %v2737, %v144
  %v2742 = vmul.f32 %v2740, %v144
  %v2743 = vsub.f32 %v2731, %v2741
  %v2744 = vsub.f32 %v2732, %v2742
  %v2745 = vmul.f32 %v2743, %v2743
  %v2746 = vmul.f32 %v2744, %v2744
  %v2747 = vsel %vm77, %v2745, 0.0
  %2748 = vadd.xlane.f32.xlu0 %v2747
  %v2749 = vpop.xlane.xlu0 %2748
  %v2750 = vsel %vm77, %v2746, 0.0
  %2751 = vadd.xlane.f32.xlu0 %v2750
  %v2752 = vpop.xlane.xlu0 %2751
  %v2753 = vmul.f32 %v2749, %v144
  %v2754 = vmul.f32 %v2752, %v144
  %v2755 = vadd.f32 %v2753, 1e-12
  %v2756 = vadd.f32 %v2754, 1e-12
  %v2757 = vrsqrt.pop %v2755
  %v2758 = vmul.f32 %v2757, %v2755
  %v2759 = vmul.f32 %v2758, %v2757
  %v2760 = vmul.f32 0.5, %v2759
  %v2761 = vsub.f32 1.5, %v2760
  %v2762 = vmul.f32 %v2757, %v2761
  %vm2763 = vweird.f32 %v2755
  %vm2764 = vweird.f32 %v2757
  %vm2765 = vmor %vm2763, %vm2764
  %v2766 = vsel %vm2765, %v2757, %v2762
  %v2767 = vrsqrt.pop %v2756
  %v2768 = vmul.f32 %v2767, %v2756
  %v2769 = vmul.f32 %v2768, %v2767
  %v2770 = vmul.f32 0.5, %v2769
  %v2771 = vsub.f32 1.5, %v2770
  %v2772 = vmul.f32 %v2767, %v2771
  %vm2773 = vweird.f32 %v2756
  %vm2774 = vweird.f32 %v2767
  %vm2775 = vmor %vm2773, %vm2774
  %v2776 = vsel %vm2775, %v2767, %v2772
  %v2777 = vmul.f32 %v2743, %v2766
  %v2778 = vmul.f32 %v2744, %v2776
  %v2779 = vperm.slane %v2733, 0
  %v2780 = vmul.f32 %v2777, %v2779
  %v2781 = vmul.f32 %v2778, %v2779
  %v2782 = vperm.slane %v2734, 0
  %v2783 = vadd.f32 %v2780, %v2782
  %v2784 = vadd.f32 %v2781, %v2782
  %v2785 = vld [vmem:[%s3 + $0x8] sm:$0xff]
  %v2786 = vld [vmem:[%s3 + $0x18] sm:$0xff]
  %v2787 = vld [vmem:[%s3 + $0x28] sm:$0xff]
  %v2788 = vld [vmem:[%s3 + $0x38] sm:$0xff]
  %v2789 = vld [vmem:[%s7 + $0x6] sm:$0x1]
  %v2790 = vperm.slane %v2789, 0
  %v2792 = vsel %vm77, %v2783, 0
  %v2795 = vsel %vm77, %v2784, 0
  %2797 = vmatpush.msra.mxu0 0.0
  %2798 = vmatpush.msra.mxu0 0.0
  %2799 = vmatpush.msra.mxu0 0.0
  %2800 = vmatpush.msra.mxu0 0.0
  %2801 = vmatpush.msra.mxu0 0.0
  %2802 = vmatpush.msra.mxu0 0.0
  %2803 = vmatpush.msra.mxu0 0.0
  %2804 = vmatpush.msra.mxu0 0.0
  %2805 = vmatpush.msra.mxu0 0.0
  %2806 = vmatpush.msra.mxu0 0.0
  %2807 = vmatpush.msra.mxu0 0.0
  %2808 = vmatpush.msra.mxu0 0.0
  %2809 = vmatpush.msra.mxu0 %v2788
  %2810 = vmatpush.msra.mxu0 %v2787
  %2811 = vmatpush.msra.mxu0 %v2786
  %2812 = vmatpush.msra.mxu0 %v2785
  %2813 = vmatmul.f32.gmra.mxu0 %v2792
  %v2814 = vpop.f32.mrf.mxu0
  %v2815 = vadd.f32 %v2790, %v2814
  %2816 = vmatmul.f32.gmra.mxu0 %v2795
  %v2817 = vpop.f32.mrf.mxu0
  %v2818 = vadd.f32 %v2790, %v2817
  %2819 = vdwg.mxu0
  %2820 = vst [vmem:[%s8] sm:$0xff] %v2815
  %2821 = vst [vmem:[%s8 + $0x10] sm:$0xff] %v2818
  %v2822 = vld [vmem:[%s7 + $0x7] sm:$0x1]
  %v2823 = vperm.slane %v2822, 0
  %v2824 = vmul.f32 %v2783, %v2823
  %v2825 = vmul.f32 %v2784, %v2823
  %v2826 = vsel %vm77, %v2824, 0.0
  %2827 = vadd.xlane.f32.xlu0 %v2826
  %v2828 = vpop.xlane.xlu0 %2827
  %v2829 = vsel %vm77, %v2825, 0.0
  %2830 = vadd.xlane.f32.xlu0 %v2829
  %v2831 = vpop.xlane.xlu0 %2830
  %v2832 = vadd.f32 %v2828, %v2823
  %v2833 = vadd.f32 %v2831, %v2823
  %2836 = vrot.lane.b32.xlu0 %v2832, 32
  %v2837 = vpop.permute.xlu0 %2836
  %2838 = vrot.lane.b32.xlu0 %v2833, 32
  %v2839 = vpop.permute.xlu0 %2838
  %vm2842 = vcmask 531968
  %2843 = vst.msk [vmem:[%s8 + $0x8] sm:$0xff] %vm2842, %v2837
  %2844 = vst.msk [vmem:[%s8 + $0x18] sm:$0xff] %vm2842, %v2839
  %v2845 = vld [vmem:[%s7 + $0x8] sm:$0x1]
  %v2846 = vperm.slane %v2845, 0
  %v2847 = vmul.f32 %v2783, %v2846
  %v2848 = vmul.f32 %v2784, %v2846
  %v2849 = vsel %vm77, %v2847, 0.0
  %2850 = vadd.xlane.f32.xlu0 %v2849
  %v2851 = vpop.xlane.xlu0 %2850
  %v2852 = vsel %vm77, %v2848, 0.0
  %2853 = vadd.xlane.f32.xlu0 %v2852
  %v2854 = vpop.xlane.xlu0 %2853
  %v2855 = vadd.f32 %v2851, %v2846
  %v2856 = vadd.f32 %v2854, %v2846
  %2859 = vrot.lane.b32.xlu0 %v2855, 33
  %v2860 = vpop.permute.xlu0 %2859
  %2861 = vrot.lane.b32.xlu0 %v2856, 33
  %v2862 = vpop.permute.xlu0 %2861
  %vm2865 = vcmask 540168
  %2866 = vst.msk [vmem:[%s8 + $0x8] sm:$0xff] %vm2865, %v2860
  %2867 = vst.msk [vmem:[%s8 + $0x18] sm:$0xff] %vm2865, %v2862
  // Predicated region
  $region34: #{pinyin_model_forward.1} parent=0 // pred_check
    _
  $region35: #{pinyin_model_forward.1} parent=0 // pred_check_branch
    %2869 = sbr.rel (0) target = $region37
  $region36: #{pinyin_model_forward.1} parent=0 // pred_region
    _
  $region37: #{pinyin_model_forward.1} parent=0 // pred_fallthru
    _
  // Predicated region
  $region38: #{pinyin_model_forward.1} parent=0 // pred_check
    _
  $region39: #{pinyin_model_forward.1} parent=0 // pred_check_branch
    %2871 = sbr.rel (0) target = $region41
  $region40: #{pinyin_model_forward.1} parent=0 // pred_region
    _
  $region41: #{pinyin_model_forward.1} parent=0 // pred_fallthru
    _

</llo_original>
